<compile_context>
chip_gen: v5e
topology: v5e:2x2
jax: 0.10.0
libtpu: 0.0.40
codegen_flags: <defaults>
</compile_context>

<pallas_src>
import jax
import jax.numpy as jnp
from jax.experimental import pallas as pl
from jax.experimental.pallas import tpu as pltpu

LEAK = 0.2      # nn.LeakyReLU(0.2)
BN_EPS = 0.8    # nn.BatchNorm1d(out_feat, 0.8) -> eps = 0.8


def _lrelu(x):
    return jnp.maximum(x, LEAK * x)


def _round_up(n, m):
    return ((n + m - 1) // m) * m


# ---------------------------------------------------------------------------
# Fused kernel (one batch tile of TB rows per grid step):
#   1) nearest-center lookup:
#        idx = argmin_k ||centers[k] - pt||   (first occurrence, like torch)
#        nearest = one_hot(idx) @ centers     (MXU gather, no dynamic indexing)
#   2) Generator:
#        emb = label_emb(cat(nearest, pt))
#        h   = LReLU(Linear(cat(emb, z), 128))
#        h   = LReLU(BN-folded Linear(h, 256/512/1024))
#        gen = Linear(h, data_dim)
#   3) Discriminator:
#        demb = label_embedding(cat(nearest, pt))
#        d    = LReLU(Linear(cat(gen, demb), 512))
#        d    = LReLU(Linear(d, 512)) x2         (Dropout = identity in eval)
#        out  = Linear(d, 1)
# gen and validity are packed into one lane-dense (TB, 128) output slab.
# ---------------------------------------------------------------------------
def cgan_fused_kernel(pts_ref, z_ref, centers_ref,
                      # generator params (BN already folded into w2..w4)
                      we, be, w1, b1, w2, b2, w3, b3, w4, b4, w5, b5,
                      # discriminator params
                      wde, bde, wd1, bd1, wd2, bd2, wd3, bd3, wd4, bd4,
                      # packed output: [gen_imgs | validity | zero pad]
                      out_ref):
    pts = pts_ref[...]                       # (TB, c)  float32
    ctr = centers_ref[...]                   # (K, c)   float32
    K = ctr.shape[0]
    data_dim = w5.shape[1]

    # --- nearest-neighborhood-center lookup (f32 distance math) ------------
    pt2 = jnp.sum(pts * pts, axis=-1, keepdims=True)                  # (TB, 1)
    c2 = jnp.sum(ctr * ctr, axis=-1)[None, :]                         # (1, K)
    cross = jax.lax.dot_general(pts, ctr, (((1,), (1,)), ((), ())),
                                preferred_element_type=jnp.float32)   # (TB, K)
    d2 = pt2 + c2 - 2.0 * cross      # argmin of squared dist == argmin of dist

    col = jax.lax.broadcasted_iota(jnp.int32, d2.shape, 1)            # (TB, K)
    dmin = jnp.min(d2, axis=-1, keepdims=True)                        # (TB, 1)
    idx = jnp.min(jnp.where(d2 <= dmin, col, jnp.int32(K)),
                  axis=-1, keepdims=True)                             # first min
    onehot = (col == idx).astype(jnp.bfloat16)                        # (TB, K)
    nearest = jnp.dot(onehot, ctr.astype(jnp.bfloat16),
                      preferred_element_type=jnp.float32)             # (TB, c)

    def dot(x, w_ref):
        w = w_ref[...]
        return jnp.dot(x.astype(w.dtype), w, preferred_element_type=jnp.float32)

    cond = jnp.concatenate([nearest, pts], axis=-1)                   # (TB, 2c)

    # --- Generator ----------------------------------------------------------
    emb = dot(cond, we) + be[...]
    gin = jnp.concatenate([emb, z_ref[...]], axis=-1)                 # (TB, 2c+L)
    h = _lrelu(dot(gin, w1) + b1[...])
    h = _lrelu(dot(h, w2) + b2[...])        # Linear + BN(folded) + LReLU
    h = _lrelu(dot(h, w3) + b3[...])
    h = _lrelu(dot(h, w4) + b4[...])
    gen = dot(h, w5) + b5[...]                                        # (TB, D)

    # --- Discriminator (on gen_imgs, same condition) ------------------------
    demb = dot(cond, wde) + bde[...]
    d_in = jnp.concatenate([gen, demb], axis=-1)                      # (TB, D+2c)
    d = _lrelu(dot(d_in, wd1) + bd1[...])
    d = _lrelu(dot(d, wd2) + bd2[...])
    d = _lrelu(dot(d, wd3) + bd3[...])
    val = dot(d, wd4) + bd4[...]                                      # (TB, 1)

    # --- lane-dense packed writeback ----------------------------------------
    out_w = out_ref.shape[-1]
    pad = jnp.zeros((pts.shape[0], out_w - data_dim - 1), jnp.float32)
    out_ref[...] = jnp.concatenate([gen, val, pad], axis=-1)


# ---------------------------------------------------------------------------
# Wrapper: batch-gridded pallas_call producing (gen_imgs, validity)
# ---------------------------------------------------------------------------
def cgan_nbhd_forward(z, base_pts, centers, gen_params, disc_params, *,
                      tile_b=256):
    B, cond_dim = base_pts.shape
    latent_dim = z.shape[1]
    data_dim = gen_params[-2].shape[1]        # w5: (1024, data_dim)

    # Batch tile: >=128 rows fills the MXU once callers batch enough points;
    # tiny batches only pad to a multiple of 8 (sublane granularity).
    TB = min(tile_b, _round_up(B, 8))
    B_pad = _round_up(B, TB)
    if B_pad != B:
        base_pts = jnp.pad(base_pts, ((0, B_pad - B), (0, 0)))
        z = jnp.pad(z, ((0, B_pad - B), (0, 0)))

    out_w = max(128, _round_up(data_dim + 1, 128))    # lane-dense output slab
    grid = (pl.cdiv(B_pad, TB),)

    params = (*gen_params, *disc_params)

    def row_spec(d):
        return pl.BlockSpec((TB, d), lambda i: (i, 0))

    def resident_spec(a):                      # fetched once, stays in VMEM
        return pl.BlockSpec(a.shape, lambda i: (0, 0))

    in_specs = ([row_spec(cond_dim), row_spec(latent_dim), resident_spec(centers)]
                + [resident_spec(p) for p in params])

    # VMEM budget: resident weights (possibly double-buffered) + a handful of
    # (TB, 1024)-ish f32 activations + double-buffered I/O tiles; cap at 48 MiB
    # so it always fits v7x's 64 MiB physical VMEM (v5e/v6e have 128 MiB).
    param_bytes = (sum(int(p.size) * p.dtype.itemsize for p in params)
                   + int(centers.size) * 4)
    act_bytes = TB * 1024 * 4 * 6
    io_bytes = 2 * 2 * TB * (cond_dim + latent_dim + out_w) * 4
    vmem_limit = min(48 * 1024 * 1024,
                     2 * param_bytes + act_bytes + io_bytes + (4 << 20))

    out = pl.pallas_call(
        cgan_fused_kernel,
        grid=grid,
        out_shape=jax.ShapeDtypeStruct((B_pad, out_w), jnp.float32),
        in_specs=in_specs,
        out_specs=pl.BlockSpec((TB, out_w), lambda i: (i, 0)),
        compiler_params=pltpu.CompilerParams(
            dimension_semantics=("parallel",),   # megacore batch sharding (v7x)
            vmem_limit_bytes=vmem_limit),
    )(base_pts, z, centers, *params)

    gen_imgs = out[:B, :data_dim]
    validity = out[:B, data_dim:data_dim + 1]
    return gen_imgs, validity


# ---------------------------------------------------------------------------
# Deterministic parameter construction (synthetic; PyTorch-like uniform init),
# with eval-mode BatchNorm folded into the preceding Linear and all matmul
# weights cast to bfloat16 (biases stay float32).
# ---------------------------------------------------------------------------
def _linear_init(key, fan_in, fan_out):
    kw, kb = jax.random.split(key)
    bound = 1.0 / float(fan_in) ** 0.5
    w = jax.random.uniform(kw, (fan_in, fan_out), jnp.float32, -bound, bound)
    b = jax.random.uniform(kb, (1, fan_out), jnp.float32, -bound, bound)
    return w, b


def _bn_init(d):
    # gamma, beta, running_mean, running_var (fresh BatchNorm1d state)
    return (jnp.ones((1, d), jnp.float32), jnp.zeros((1, d), jnp.float32),
            jnp.zeros((1, d), jnp.float32), jnp.ones((1, d), jnp.float32))


def _fold_bn(w, b, g, bt, m, v, eps=BN_EPS):
    # y = (x@w + b - m) * g / sqrt(v+eps) + bt  ==  x@(w*s) + ((b-m)*s + bt)
    scale = g * jax.lax.rsqrt(v + eps)            # (1, out)
    return w * scale, (b - m) * scale + bt


def build_params(key, latent_dim, data_dim, cond_dim):
    cond2 = 2 * cond_dim
    ks = jax.random.split(key, 11)
    bf = jnp.bfloat16

    # ----- Generator -----
    we, be = _linear_init(ks[0], cond2, cond2)                 # label_emb
    w1, b1 = _linear_init(ks[1], cond2 + latent_dim, 128)      # in = cat(emb, z)
    w2, b2 = _linear_init(ks[2], 128, 256)
    w3, b3 = _linear_init(ks[3], 256, 512)
    w4, b4 = _linear_init(ks[4], 512, 1024)
    w5, b5 = _linear_init(ks[5], 1024, data_dim)
    w2, b2 = _fold_bn(w2, b2, *_bn_init(256))
    w3, b3 = _fold_bn(w3, b3, *_bn_init(512))
    w4, b4 = _fold_bn(w4, b4, *_bn_init(1024))

    gen_params = (we.astype(bf), be, w1.astype(bf), b1, w2.astype(bf), b2,
                  w3.astype(bf), b3, w4.astype(bf), b4, w5.astype(bf), b5)

    # ----- Discriminator -----
    wde, bde = _linear_init(ks[6], cond2, cond2)               # label_embedding
    wd1, bd1 = _linear_init(ks[7], data_dim + cond2, 512)      # in = cat(gen, demb)
    wd2, bd2 = _linear_init(ks[8], 512, 512)
    wd3, bd3 = _linear_init(ks[9], 512, 512)
    wd4, bd4 = _linear_init(ks[10], 512, 1)

    disc_params = (wde.astype(bf), bde, wd1.astype(bf), bd1, wd2.astype(bf), bd2,
                   wd3.astype(bf), bd3, wd4.astype(bf), bd4)
    return gen_params, disc_params


if __name__ == "__main__":
    key = jax.random.PRNGKey(0)
    B = 8                   # training batch_size default
    cond_dim = 3            # base_data.shape[-1]
    total_dim = 6           # cover_data.shape[-1] (== data_dim)
    latent_dim = total_dim  # default: latent_dim = total_dim
    num_nbhds = 25

    k0, k1, k2, k3 = jax.random.split(key, 4)
    # TODO(synk): _create_nbhds uses sklearn KMeans (no Pallas equivalent);
    # centers are initialized deterministically at random instead.
    centers = jax.random.normal(k0, (num_nbhds, cond_dim), jnp.float32)
    base_pts = jax.random.normal(k1, (B, cond_dim), jnp.float32)
    z = jax.random.normal(k2, (B, latent_dim), jnp.float32)

    gen_params, disc_params = build_params(k3, latent_dim, total_dim, cond_dim)

    fwd = jax.jit(cgan_nbhd_forward)
    gen_imgs, validity = fwd(z, base_pts, centers, gen_params, disc_params)
    jax.block_until_ready((gen_imgs, validity))

    assert gen_imgs.shape == (B, total_dim)
    assert validity.shape == (B, 1)
    assert bool(jnp.all(jnp.isfinite(gen_imgs)))
    assert bool(jnp.all(jnp.isfinite(validity)))
    print("KERNEL_OK")
</pallas_src>

<mosaic_0001>
module attributes {stable_mosaic.version = 11 : i64} {
  func.func @cgan_fused_kernel(%arg0: i32, %arg1: memref<8x3xf32, #tpu.memory_space<vmem>>, %arg2: memref<8x6xf32, #tpu.memory_space<vmem>>, %arg3: memref<25x3xf32, #tpu.memory_space<vmem>>, %arg4: memref<6x6xbf16, #tpu.memory_space<vmem>>, %arg5: memref<1x6xf32, #tpu.memory_space<vmem>>, %arg6: memref<12x128xbf16, #tpu.memory_space<vmem>>, %arg7: memref<1x128xf32, #tpu.memory_space<vmem>>, %arg8: memref<128x256xbf16, #tpu.memory_space<vmem>>, %arg9: memref<1x256xf32, #tpu.memory_space<vmem>>, %arg10: memref<256x512xbf16, #tpu.memory_space<vmem>>, %arg11: memref<1x512xf32, #tpu.memory_space<vmem>>, %arg12: memref<512x1024xbf16, #tpu.memory_space<vmem>>, %arg13: memref<1x1024xf32, #tpu.memory_space<vmem>>, %arg14: memref<1024x6xbf16, #tpu.memory_space<vmem>>, %arg15: memref<1x6xf32, #tpu.memory_space<vmem>>, %arg16: memref<6x6xbf16, #tpu.memory_space<vmem>>, %arg17: memref<1x6xf32, #tpu.memory_space<vmem>>, %arg18: memref<12x512xbf16, #tpu.memory_space<vmem>>, %arg19: memref<1x512xf32, #tpu.memory_space<vmem>>, %arg20: memref<512x512xbf16, #tpu.memory_space<vmem>>, %arg21: memref<1x512xf32, #tpu.memory_space<vmem>>, %arg22: memref<512x512xbf16, #tpu.memory_space<vmem>>, %arg23: memref<1x512xf32, #tpu.memory_space<vmem>>, %arg24: memref<512x1xbf16, #tpu.memory_space<vmem>>, %arg25: memref<1x1xf32, #tpu.memory_space<vmem>>, %arg26: memref<8x128xf32, #tpu.memory_space<vmem>>) attributes {dimension_semantics = [#tpu.dimension_semantics<parallel>], iteration_bounds = array<i64: 1>, scalar_prefetch = 0 : i64, scratch_operands = 0 : i64, tpu.core_type = #tpu.core_type<tc>, window_params = [{transform_indices = @transform_0, window_bounds = array<i64: 8, 3>}, {transform_indices = @transform_1, window_bounds = array<i64: 8, 6>}, {pipeline_mode = #tpu.pipeline_mode<synchronous>, transform_indices = @transform_2, window_bounds = array<i64: 25, 3>}, {pipeline_mode = #tpu.pipeline_mode<synchronous>, transform_indices = @transform_3, window_bounds = array<i64: 6, 6>}, {pipeline_mode = #tpu.pipeline_mode<synchronous>, transform_indices = @transform_4, window_bounds = array<i64: 1, 6>}, {pipeline_mode = #tpu.pipeline_mode<synchronous>, transform_indices = @transform_5, window_bounds = array<i64: 12, 128>}, {pipeline_mode = #tpu.pipeline_mode<synchronous>, transform_indices = @transform_6, window_bounds = array<i64: 1, 128>}, {pipeline_mode = #tpu.pipeline_mode<synchronous>, transform_indices = @transform_7, window_bounds = array<i64: 128, 256>}, {pipeline_mode = #tpu.pipeline_mode<synchronous>, transform_indices = @transform_8, window_bounds = array<i64: 1, 256>}, {pipeline_mode = #tpu.pipeline_mode<synchronous>, transform_indices = @transform_9, window_bounds = array<i64: 256, 512>}, {pipeline_mode = #tpu.pipeline_mode<synchronous>, transform_indices = @transform_10, window_bounds = array<i64: 1, 512>}, {pipeline_mode = #tpu.pipeline_mode<synchronous>, transform_indices = @transform_11, window_bounds = array<i64: 512, 1024>}, {pipeline_mode = #tpu.pipeline_mode<synchronous>, transform_indices = @transform_12, window_bounds = array<i64: 1, 1024>}, {pipeline_mode = #tpu.pipeline_mode<synchronous>, transform_indices = @transform_13, window_bounds = array<i64: 1024, 6>}, {pipeline_mode = #tpu.pipeline_mode<synchronous>, transform_indices = @transform_14, window_bounds = array<i64: 1, 6>}, {pipeline_mode = #tpu.pipeline_mode<synchronous>, transform_indices = @transform_15, window_bounds = array<i64: 6, 6>}, {pipeline_mode = #tpu.pipeline_mode<synchronous>, transform_indices = @transform_16, window_bounds = array<i64: 1, 6>}, {pipeline_mode = #tpu.pipeline_mode<synchronous>, transform_indices = @transform_17, window_bounds = array<i64: 12, 512>}, {pipeline_mode = #tpu.pipeline_mode<synchronous>, transform_indices = @transform_18, window_bounds = array<i64: 1, 512>}, {pipeline_mode = #tpu.pipeline_mode<synchronous>, transform_indices = @transform_19, window_bounds = array<i64: 512, 512>}, {pipeline_mode = #tpu.pipeline_mode<synchronous>, transform_indices = @transform_20, window_bounds = array<i64: 1, 512>}, {pipeline_mode = #tpu.pipeline_mode<synchronous>, transform_indices = @transform_21, window_bounds = array<i64: 512, 512>}, {pipeline_mode = #tpu.pipeline_mode<synchronous>, transform_indices = @transform_22, window_bounds = array<i64: 1, 512>}, {pipeline_mode = #tpu.pipeline_mode<synchronous>, transform_indices = @transform_23, window_bounds = array<i64: 512, 1>}, {pipeline_mode = #tpu.pipeline_mode<synchronous>, transform_indices = @transform_24, window_bounds = array<i64: 1, 1>}, {transform_indices = @transform_25, window_bounds = array<i64: 8, 128>}]} {
    %c0 = arith.constant 0 : index
    %c0_0 = arith.constant 0 : index
    %0 = vector.load %arg1[%c0, %c0_0] : memref<8x3xf32, #tpu.memory_space<vmem>>, vector<8x3xf32>
    %c0_1 = arith.constant 0 : index
    %c0_2 = arith.constant 0 : index
    %1 = vector.load %arg3[%c0_1, %c0_2] : memref<25x3xf32, #tpu.memory_space<vmem>>, vector<25x3xf32>
    %2 = arith.mulf %0, %0 : vector<8x3xf32>
    %cst = arith.constant dense<0.000000e+00> : vector<8xf32>
    %3 = vector.multi_reduction <add>, %2, %cst [1] : vector<8x3xf32> to vector<8xf32>
    %4 = vector.shape_cast %3 : vector<8xf32> to vector<8x1xf32>
    %5 = arith.mulf %1, %1 : vector<25x3xf32>
    %cst_3 = arith.constant dense<0.000000e+00> : vector<25xf32>
    %6 = vector.multi_reduction <add>, %5, %cst_3 [1] : vector<25x3xf32> to vector<25xf32>
    %7 = vector.shape_cast %6 : vector<25xf32> to vector<1x25xf32>
    %cst_4 = arith.constant dense<0.000000e+00> : vector<8x25xf32>
    %8 = tpu.matmul %0, %1, %cst_4 {dimension_numbers = #tpu.dot_dimension_numbers<[1], [1], [0], [0], [0, 0, 1, 0], [], []>} : vector<8x3xf32>, vector<25x3xf32>, vector<8x25xf32> -> vector<8x25xf32>
    %9 = vector.broadcast %4 : vector<8x1xf32> to vector<8x25xf32>
    %10 = vector.broadcast %7 : vector<1x25xf32> to vector<8x25xf32>
    %11 = arith.addf %9, %10 : vector<8x25xf32>
    %cst_5 = arith.constant 2.000000e+00 : f32
    %12 = vector.broadcast %cst_5 : f32 to vector<8x25xf32>
    %13 = arith.mulf %12, %8 : vector<8x25xf32>
    %14 = arith.subf %11, %13 : vector<8x25xf32>
    %15 = tpu.iota {dimensions = array<i32: 1>} : vector<8x25xi32>
    %cst_6 = arith.constant dense<0x7F800000> : vector<8xf32>
    %16 = vector.multi_reduction <minimumf>, %14, %cst_6 [1] : vector<8x25xf32> to vector<8xf32>
    %17 = vector.shape_cast %16 : vector<8xf32> to vector<8x1xf32>
    %18 = vector.broadcast %17 : vector<8x1xf32> to vector<8x25xf32>
    %19 = arith.cmpf ole, %14, %18 : vector<8x25xf32>
    %c25_i32 = arith.constant 25 : i32
    %20 = vector.broadcast %c25_i32 : i32 to vector<8x25xi32>
    %21 = arith.select %19, %15, %20 : vector<8x25xi1>, vector<8x25xi32>
    %cst_7 = arith.constant dense<2147483647> : vector<8xi32>
    %22 = vector.multi_reduction <minsi>, %21, %cst_7 [1] : vector<8x25xi32> to vector<8xi32>
    %23 = vector.shape_cast %22 : vector<8xi32> to vector<8x1xi32>
    %24 = vector.broadcast %23 : vector<8x1xi32> to vector<8x25xi32>
    %25 = arith.cmpi eq, %15, %24 : vector<8x25xi32>
    %26 = arith.extui %25 : vector<8x25xi1> to vector<8x25xi32>
    %27 = arith.sitofp %26 : vector<8x25xi32> to vector<8x25xf32>
    %28 = arith.truncf %27 : vector<8x25xf32> to vector<8x25xbf16>
    %29 = arith.truncf %1 : vector<25x3xf32> to vector<25x3xbf16>
    %cst_8 = arith.constant dense<0.000000e+00> : vector<8x3xf32>
    %30 = tpu.matmul %28, %29, %cst_8 {dimension_numbers = #tpu.dot_dimension_numbers<[1], [0], [0], [1], [0, 0, 1, 1], [], []>} : vector<8x25xbf16>, vector<25x3xbf16>, vector<8x3xf32> -> vector<8x3xf32>
    %31 = tpu.concatenate %30, %0 in 1 : vector<8x3xf32>, vector<8x3xf32> -> vector<8x6xf32>
    %c0_9 = arith.constant 0 : index
    %c0_10 = arith.constant 0 : index
    %32 = vector.load %arg4[%c0_9, %c0_10] : memref<6x6xbf16, #tpu.memory_space<vmem>>, vector<6x6xbf16>
    %33 = arith.truncf %31 : vector<8x6xf32> to vector<8x6xbf16>
    %cst_11 = arith.constant dense<0.000000e+00> : vector<8x6xf32>
    %34 = tpu.matmul %33, %32, %cst_11 {dimension_numbers = #tpu.dot_dimension_numbers<[1], [0], [0], [1], [0, 0, 1, 1], [], []>} : vector<8x6xbf16>, vector<6x6xbf16>, vector<8x6xf32> -> vector<8x6xf32>
    %c0_12 = arith.constant 0 : index
    %c0_13 = arith.constant 0 : index
    %35 = vector.load %arg5[%c0_12, %c0_13] : memref<1x6xf32, #tpu.memory_space<vmem>>, vector<1x6xf32>
    %36 = vector.broadcast %35 : vector<1x6xf32> to vector<8x6xf32>
    %37 = arith.addf %34, %36 : vector<8x6xf32>
    %c0_14 = arith.constant 0 : index
    %c0_15 = arith.constant 0 : index
    %38 = vector.load %arg2[%c0_14, %c0_15] : memref<8x6xf32, #tpu.memory_space<vmem>>, vector<8x6xf32>
    %39 = tpu.concatenate %37, %38 in 1 : vector<8x6xf32>, vector<8x6xf32> -> vector<8x12xf32>
    %c0_16 = arith.constant 0 : index
    %c0_17 = arith.constant 0 : index
    %40 = vector.load %arg6[%c0_16, %c0_17] : memref<12x128xbf16, #tpu.memory_space<vmem>>, vector<12x128xbf16>
    %41 = arith.truncf %39 : vector<8x12xf32> to vector<8x12xbf16>
    %cst_18 = arith.constant dense<0.000000e+00> : vector<8x128xf32>
    %42 = tpu.matmul %41, %40, %cst_18 {dimension_numbers = #tpu.dot_dimension_numbers<[1], [0], [0], [1], [0, 0, 1, 1], [], []>} : vector<8x12xbf16>, vector<12x128xbf16>, vector<8x128xf32> -> vector<8x128xf32>
    %c0_19 = arith.constant 0 : index
    %c0_20 = arith.constant 0 : index
    %43 = vector.load %arg7[%c0_19, %c0_20] : memref<1x128xf32, #tpu.memory_space<vmem>>, vector<1x128xf32>
    %44 = vector.broadcast %43 : vector<1x128xf32> to vector<8x128xf32>
    %45 = arith.addf %42, %44 : vector<8x128xf32>
    %cst_21 = arith.constant 2.000000e-01 : f32
    %46 = vector.broadcast %cst_21 : f32 to vector<8x128xf32>
    %47 = arith.mulf %46, %45 : vector<8x128xf32>
    %48 = arith.maximumf %45, %47 : vector<8x128xf32>
    %c0_22 = arith.constant 0 : index
    %c0_23 = arith.constant 0 : index
    %49 = vector.load %arg8[%c0_22, %c0_23] : memref<128x256xbf16, #tpu.memory_space<vmem>>, vector<128x256xbf16>
    %50 = arith.truncf %48 : vector<8x128xf32> to vector<8x128xbf16>
    %cst_24 = arith.constant dense<0.000000e+00> : vector<8x256xf32>
    %51 = tpu.matmul %50, %49, %cst_24 {dimension_numbers = #tpu.dot_dimension_numbers<[1], [0], [0], [1], [0, 0, 1, 1], [], []>} : vector<8x128xbf16>, vector<128x256xbf16>, vector<8x256xf32> -> vector<8x256xf32>
    %c0_25 = arith.constant 0 : index
    %c0_26 = arith.constant 0 : index
    %52 = vector.load %arg9[%c0_25, %c0_26] : memref<1x256xf32, #tpu.memory_space<vmem>>, vector<1x256xf32>
    %53 = vector.broadcast %52 : vector<1x256xf32> to vector<8x256xf32>
    %54 = arith.addf %51, %53 : vector<8x256xf32>
    %cst_27 = arith.constant 2.000000e-01 : f32
    %55 = vector.broadcast %cst_27 : f32 to vector<8x256xf32>
    %56 = arith.mulf %55, %54 : vector<8x256xf32>
    %57 = arith.maximumf %54, %56 : vector<8x256xf32>
    %c0_28 = arith.constant 0 : index
    %c0_29 = arith.constant 0 : index
    %58 = vector.load %arg10[%c0_28, %c0_29] : memref<256x512xbf16, #tpu.memory_space<vmem>>, vector<256x512xbf16>
    %59 = arith.truncf %57 : vector<8x256xf32> to vector<8x256xbf16>
    %cst_30 = arith.constant dense<0.000000e+00> : vector<8x512xf32>
    %60 = tpu.matmul %59, %58, %cst_30 {dimension_numbers = #tpu.dot_dimension_numbers<[1], [0], [0], [1], [0, 0, 1, 1], [], []>} : vector<8x256xbf16>, vector<256x512xbf16>, vector<8x512xf32> -> vector<8x512xf32>
    %c0_31 = arith.constant 0 : index
    %c0_32 = arith.constant 0 : index
    %61 = vector.load %arg11[%c0_31, %c0_32] : memref<1x512xf32, #tpu.memory_space<vmem>>, vector<1x512xf32>
    %62 = vector.broadcast %61 : vector<1x512xf32> to vector<8x512xf32>
    %63 = arith.addf %60, %62 : vector<8x512xf32>
    %cst_33 = arith.constant 2.000000e-01 : f32
    %64 = vector.broadcast %cst_33 : f32 to vector<8x512xf32>
    %65 = arith.mulf %64, %63 : vector<8x512xf32>
    %66 = arith.maximumf %63, %65 : vector<8x512xf32>
    %c0_34 = arith.constant 0 : index
    %c0_35 = arith.constant 0 : index
    %67 = vector.load %arg12[%c0_34, %c0_35] : memref<512x1024xbf16, #tpu.memory_space<vmem>>, vector<512x1024xbf16>
    %68 = arith.truncf %66 : vector<8x512xf32> to vector<8x512xbf16>
    %cst_36 = arith.constant dense<0.000000e+00> : vector<8x1024xf32>
    %69 = tpu.matmul %68, %67, %cst_36 {dimension_numbers = #tpu.dot_dimension_numbers<[1], [0], [0], [1], [0, 0, 1, 1], [], []>} : vector<8x512xbf16>, vector<512x1024xbf16>, vector<8x1024xf32> -> vector<8x1024xf32>
    %c0_37 = arith.constant 0 : index
    %c0_38 = arith.constant 0 : index
    %70 = vector.load %arg13[%c0_37, %c0_38] : memref<1x1024xf32, #tpu.memory_space<vmem>>, vector<1x1024xf32>
    %71 = vector.broadcast %70 : vector<1x1024xf32> to vector<8x1024xf32>
    %72 = arith.addf %69, %71 : vector<8x1024xf32>
    %cst_39 = arith.constant 2.000000e-01 : f32
    %73 = vector.broadcast %cst_39 : f32 to vector<8x1024xf32>
    %74 = arith.mulf %73, %72 : vector<8x1024xf32>
    %75 = arith.maximumf %72, %74 : vector<8x1024xf32>
    %c0_40 = arith.constant 0 : index
    %c0_41 = arith.constant 0 : index
    %76 = vector.load %arg14[%c0_40, %c0_41] : memref<1024x6xbf16, #tpu.memory_space<vmem>>, vector<1024x6xbf16>
    %77 = arith.truncf %75 : vector<8x1024xf32> to vector<8x1024xbf16>
    %cst_42 = arith.constant dense<0.000000e+00> : vector<8x6xf32>
    %78 = tpu.matmul %77, %76, %cst_42 {dimension_numbers = #tpu.dot_dimension_numbers<[1], [0], [0], [1], [0, 0, 1, 1], [], []>} : vector<8x1024xbf16>, vector<1024x6xbf16>, vector<8x6xf32> -> vector<8x6xf32>
    %c0_43 = arith.constant 0 : index
    %c0_44 = arith.constant 0 : index
    %79 = vector.load %arg15[%c0_43, %c0_44] : memref<1x6xf32, #tpu.memory_space<vmem>>, vector<1x6xf32>
    %80 = vector.broadcast %79 : vector<1x6xf32> to vector<8x6xf32>
    %81 = arith.addf %78, %80 : vector<8x6xf32>
    %c0_45 = arith.constant 0 : index
    %c0_46 = arith.constant 0 : index
    %82 = vector.load %arg16[%c0_45, %c0_46] : memref<6x6xbf16, #tpu.memory_space<vmem>>, vector<6x6xbf16>
    %83 = arith.truncf %31 : vector<8x6xf32> to vector<8x6xbf16>
    %cst_47 = arith.constant dense<0.000000e+00> : vector<8x6xf32>
    %84 = tpu.matmul %83, %82, %cst_47 {dimension_numbers = #tpu.dot_dimension_numbers<[1], [0], [0], [1], [0, 0, 1, 1], [], []>} : vector<8x6xbf16>, vector<6x6xbf16>, vector<8x6xf32> -> vector<8x6xf32>
    %c0_48 = arith.constant 0 : index
    %c0_49 = arith.constant 0 : index
    %85 = vector.load %arg17[%c0_48, %c0_49] : memref<1x6xf32, #tpu.memory_space<vmem>>, vector<1x6xf32>
    %86 = vector.broadcast %85 : vector<1x6xf32> to vector<8x6xf32>
    %87 = arith.addf %84, %86 : vector<8x6xf32>
    %88 = tpu.concatenate %81, %87 in 1 : vector<8x6xf32>, vector<8x6xf32> -> vector<8x12xf32>
    %c0_50 = arith.constant 0 : index
    %c0_51 = arith.constant 0 : index
    %89 = vector.load %arg18[%c0_50, %c0_51] : memref<12x512xbf16, #tpu.memory_space<vmem>>, vector<12x512xbf16>
    %90 = arith.truncf %88 : vector<8x12xf32> to vector<8x12xbf16>
    %cst_52 = arith.constant dense<0.000000e+00> : vector<8x512xf32>
    %91 = tpu.matmul %90, %89, %cst_52 {dimension_numbers = #tpu.dot_dimension_numbers<[1], [0], [0], [1], [0, 0, 1, 1], [], []>} : vector<8x12xbf16>, vector<12x512xbf16>, vector<8x512xf32> -> vector<8x512xf32>
    %c0_53 = arith.constant 0 : index
    %c0_54 = arith.constant 0 : index
    %92 = vector.load %arg19[%c0_53, %c0_54] : memref<1x512xf32, #tpu.memory_space<vmem>>, vector<1x512xf32>
    %93 = vector.broadcast %92 : vector<1x512xf32> to vector<8x512xf32>
    %94 = arith.addf %91, %93 : vector<8x512xf32>
    %cst_55 = arith.constant 2.000000e-01 : f32
    %95 = vector.broadcast %cst_55 : f32 to vector<8x512xf32>
    %96 = arith.mulf %95, %94 : vector<8x512xf32>
    %97 = arith.maximumf %94, %96 : vector<8x512xf32>
    %c0_56 = arith.constant 0 : index
    %c0_57 = arith.constant 0 : index
    %98 = vector.load %arg20[%c0_56, %c0_57] : memref<512x512xbf16, #tpu.memory_space<vmem>>, vector<512x512xbf16>
    %99 = arith.truncf %97 : vector<8x512xf32> to vector<8x512xbf16>
    %cst_58 = arith.constant dense<0.000000e+00> : vector<8x512xf32>
    %100 = tpu.matmul %99, %98, %cst_58 {dimension_numbers = #tpu.dot_dimension_numbers<[1], [0], [0], [1], [0, 0, 1, 1], [], []>} : vector<8x512xbf16>, vector<512x512xbf16>, vector<8x512xf32> -> vector<8x512xf32>
    %c0_59 = arith.constant 0 : index
    %c0_60 = arith.constant 0 : index
    %101 = vector.load %arg21[%c0_59, %c0_60] : memref<1x512xf32, #tpu.memory_space<vmem>>, vector<1x512xf32>
    %102 = vector.broadcast %101 : vector<1x512xf32> to vector<8x512xf32>
    %103 = arith.addf %100, %102 : vector<8x512xf32>
    %cst_61 = arith.constant 2.000000e-01 : f32
    %104 = vector.broadcast %cst_61 : f32 to vector<8x512xf32>
    %105 = arith.mulf %104, %103 : vector<8x512xf32>
    %106 = arith.maximumf %103, %105 : vector<8x512xf32>
    %c0_62 = arith.constant 0 : index
    %c0_63 = arith.constant 0 : index
    %107 = vector.load %arg22[%c0_62, %c0_63] : memref<512x512xbf16, #tpu.memory_space<vmem>>, vector<512x512xbf16>
    %108 = arith.truncf %106 : vector<8x512xf32> to vector<8x512xbf16>
    %cst_64 = arith.constant dense<0.000000e+00> : vector<8x512xf32>
    %109 = tpu.matmul %108, %107, %cst_64 {dimension_numbers = #tpu.dot_dimension_numbers<[1], [0], [0], [1], [0, 0, 1, 1], [], []>} : vector<8x512xbf16>, vector<512x512xbf16>, vector<8x512xf32> -> vector<8x512xf32>
    %c0_65 = arith.constant 0 : index
    %c0_66 = arith.constant 0 : index
    %110 = vector.load %arg23[%c0_65, %c0_66] : memref<1x512xf32, #tpu.memory_space<vmem>>, vector<1x512xf32>
    %111 = vector.broadcast %110 : vector<1x512xf32> to vector<8x512xf32>
    %112 = arith.addf %109, %111 : vector<8x512xf32>
    %cst_67 = arith.constant 2.000000e-01 : f32
    %113 = vector.broadcast %cst_67 : f32 to vector<8x512xf32>
    %114 = arith.mulf %113, %112 : vector<8x512xf32>
    %115 = arith.maximumf %112, %114 : vector<8x512xf32>
    %c0_68 = arith.constant 0 : index
    %c0_69 = arith.constant 0 : index
    %116 = vector.load %arg24[%c0_68, %c0_69] : memref<512x1xbf16, #tpu.memory_space<vmem>>, vector<512x1xbf16>
    %117 = arith.truncf %115 : vector<8x512xf32> to vector<8x512xbf16>
    %cst_70 = arith.constant dense<0.000000e+00> : vector<8x1xf32>
    %118 = tpu.matmul %117, %116, %cst_70 {dimension_numbers = #tpu.dot_dimension_numbers<[1], [0], [0], [1], [0, 0, 1, 1], [], []>} : vector<8x512xbf16>, vector<512x1xbf16>, vector<8x1xf32> -> vector<8x1xf32>
    %c0_71 = arith.constant 0 : index
    %c0_72 = arith.constant 0 : index
    %119 = vector.load %arg25[%c0_71, %c0_72] : memref<1x1xf32, #tpu.memory_space<vmem>>, vector<1x1xf32>
    %120 = vector.broadcast %119 : vector<1x1xf32> to vector<8x1xf32>
    %121 = arith.addf %118, %120 : vector<8x1xf32>
    %cst_73 = arith.constant 0.000000e+00 : f32
    %122 = vector.broadcast %cst_73 : f32 to vector<8x121xf32>
    %123 = tpu.concatenate %81, %121, %122 in 1 : vector<8x6xf32>, vector<8x1xf32>, vector<8x121xf32> -> vector<8x128xf32>
    %c0_74 = arith.constant 0 : index
    %c0_75 = arith.constant 0 : index
    %124 = vector.load %arg26[%c0_74, %c0_75] : memref<8x128xf32, #tpu.memory_space<vmem>>, vector<8x128xf32>
    tpu.vector_store %arg26[%c0_74, %c0_75], %123 {strides = array<i32>} : memref<8x128xf32, #tpu.memory_space<vmem>>, vector<8x128xf32>,
    return
  }
  func.func @transform_0(%arg0: i32) -> (i32, i32) {
    %c0_i32 = arith.constant 0 : i32
    %c0_i32_0 = arith.constant 0 : i32
    return %arg0, %c0_i32 : i32, i32
  }
  func.func @transform_1(%arg0: i32) -> (i32, i32) {
    %c0_i32 = arith.constant 0 : i32
    %c0_i32_0 = arith.constant 0 : i32
    return %arg0, %c0_i32 : i32, i32
  }
  func.func @transform_2(%arg0: i32) -> (i32, i32) {
    %c0_i32 = arith.constant 0 : i32
    %c0_i32_0 = arith.constant 0 : i32
    %c0_i32_1 = arith.constant 0 : i32
    return %c0_i32, %c0_i32_0 : i32, i32
  }
  func.func @transform_3(%arg0: i32) -> (i32, i32) {
    %c0_i32 = arith.constant 0 : i32
    %c0_i32_0 = arith.constant 0 : i32
    %c0_i32_1 = arith.constant 0 : i32
    return %c0_i32, %c0_i32_0 : i32, i32
  }
  func.func @transform_4(%arg0: i32) -> (i32, i32) {
    %c0_i32 = arith.constant 0 : i32
    %c0_i32_0 = arith.constant 0 : i32
    %c0_i32_1 = arith.constant 0 : i32
    return %c0_i32, %c0_i32_0 : i32, i32
  }
  func.func @transform_5(%arg0: i32) -> (i32, i32) {
    %c0_i32 = arith.constant 0 : i32
    %c0_i32_0 = arith.constant 0 : i32
    %c0_i32_1 = arith.constant 0 : i32
    return %c0_i32, %c0_i32_0 : i32, i32
  }
  func.func @transform_6(%arg0: i32) -> (i32, i32) {
    %c0_i32 = arith.constant 0 : i32
    %c0_i32_0 = arith.constant 0 : i32
    %c0_i32_1 = arith.constant 0 : i32
    return %c0_i32, %c0_i32_0 : i32, i32
  }
  func.func @transform_7(%arg0: i32) -> (i32, i32) {
    %c0_i32 = arith.constant 0 : i32
    %c0_i32_0 = arith.constant 0 : i32
    %c0_i32_1 = arith.constant 0 : i32
    return %c0_i32, %c0_i32_0 : i32, i32
  }
  func.func @transform_8(%arg0: i32) -> (i32, i32) {
    %c0_i32 = arith.constant 0 : i32
    %c0_i32_0 = arith.constant 0 : i32
    %c0_i32_1 = arith.constant 0 : i32
    return %c0_i32, %c0_i32_0 : i32, i32
  }
  func.func @transform_9(%arg0: i32) -> (i32, i32) {
    %c0_i32 = arith.constant 0 : i32
    %c0_i32_0 = arith.constant 0 : i32
    %c0_i32_1 = arith.constant 0 : i32
    return %c0_i32, %c0_i32_0 : i32, i32
  }
  func.func @transform_10(%arg0: i32) -> (i32, i32) {
    %c0_i32 = arith.constant 0 : i32
    %c0_i32_0 = arith.constant 0 : i32
    %c0_i32_1 = arith.constant 0 : i32
    return %c0_i32, %c0_i32_0 : i32, i32
  }
  func.func @transform_11(%arg0: i32) -> (i32, i32) {
    %c0_i32 = arith.constant 0 : i32
    %c0_i32_0 = arith.constant 0 : i32
    %c0_i32_1 = arith.constant 0 : i32
    return %c0_i32, %c0_i32_0 : i32, i32
  }
  func.func @transform_12(%arg0: i32) -> (i32, i32) {
    %c0_i32 = arith.constant 0 : i32
    %c0_i32_0 = arith.constant 0 : i32
    %c0_i32_1 = arith.constant 0 : i32
    return %c0_i32, %c0_i32_0 : i32, i32
  }
  func.func @transform_13(%arg0: i32) -> (i32, i32) {
    %c0_i32 = arith.constant 0 : i32
    %c0_i32_0 = arith.constant 0 : i32
    %c0_i32_1 = arith.constant 0 : i32
    return %c0_i32, %c0_i32_0 : i32, i32
  }
  func.func @transform_14(%arg0: i32) -> (i32, i32) {
    %c0_i32 = arith.constant 0 : i32
    %c0_i32_0 = arith.constant 0 : i32
    %c0_i32_1 = arith.constant 0 : i32
    return %c0_i32, %c0_i32_0 : i32, i32
  }
  func.func @transform_15(%arg0: i32) -> (i32, i32) {
    %c0_i32 = arith.constant 0 : i32
    %c0_i32_0 = arith.constant 0 : i32
    %c0_i32_1 = arith.constant 0 : i32
    return %c0_i32, %c0_i32_0 : i32, i32
  }
  func.func @transform_16(%arg0: i32) -> (i32, i32) {
    %c0_i32 = arith.constant 0 : i32
    %c0_i32_0 = arith.constant 0 : i32
    %c0_i32_1 = arith.constant 0 : i32
    return %c0_i32, %c0_i32_0 : i32, i32
  }
  func.func @transform_17(%arg0: i32) -> (i32, i32) {
    %c0_i32 = arith.constant 0 : i32
    %c0_i32_0 = arith.constant 0 : i32
    %c0_i32_1 = arith.constant 0 : i32
    return %c0_i32, %c0_i32_0 : i32, i32
  }
  func.func @transform_18(%arg0: i32) -> (i32, i32) {
    %c0_i32 = arith.constant 0 : i32
    %c0_i32_0 = arith.constant 0 : i32
    %c0_i32_1 = arith.constant 0 : i32
    return %c0_i32, %c0_i32_0 : i32, i32
  }
  func.func @transform_19(%arg0: i32) -> (i32, i32) {
    %c0_i32 = arith.constant 0 : i32
    %c0_i32_0 = arith.constant 0 : i32
    %c0_i32_1 = arith.constant 0 : i32
    return %c0_i32, %c0_i32_0 : i32, i32
  }
  func.func @transform_20(%arg0: i32) -> (i32, i32) {
    %c0_i32 = arith.constant 0 : i32
    %c0_i32_0 = arith.constant 0 : i32
    %c0_i32_1 = arith.constant 0 : i32
    return %c0_i32, %c0_i32_0 : i32, i32
  }
  func.func @transform_21(%arg0: i32) -> (i32, i32) {
    %c0_i32 = arith.constant 0 : i32
    %c0_i32_0 = arith.constant 0 : i32
    %c0_i32_1 = arith.constant 0 : i32
    return %c0_i32, %c0_i32_0 : i32, i32
  }
  func.func @transform_22(%arg0: i32) -> (i32, i32) {
    %c0_i32 = arith.constant 0 : i32
    %c0_i32_0 = arith.constant 0 : i32
    %c0_i32_1 = arith.constant 0 : i32
    return %c0_i32, %c0_i32_0 : i32, i32
  }
  func.func @transform_23(%arg0: i32) -> (i32, i32) {
    %c0_i32 = arith.constant 0 : i32
    %c0_i32_0 = arith.constant 0 : i32
    %c0_i32_1 = arith.constant 0 : i32
    return %c0_i32, %c0_i32_0 : i32, i32
  }
  func.func @transform_24(%arg0: i32) -> (i32, i32) {
    %c0_i32 = arith.constant 0 : i32
    %c0_i32_0 = arith.constant 0 : i32
    %c0_i32_1 = arith.constant 0 : i32
    return %c0_i32, %c0_i32_0 : i32, i32
  }
  func.func @transform_25(%arg0: i32) -> (i32, i32) {
    %c0_i32 = arith.constant 0 : i32
    %c0_i32_0 = arith.constant 0 : i32
    return %arg0, %c0_i32 : i32, i32
  }
}

</mosaic_0001>

<llo_original>
// kernel: cgan_nbhd_forward.1
$region0: #{cgan_nbhd_forward.1}
  #allocation0 [shape = 'u32[]', space=smem, size = 0x4, offset = 0x4, fixed_abs, tag = 'smem constant byte address 0x4 - core index']
  #allocation1 [shape = 'u32[72,128]{1,0:T(1,128)}', space=vmem, size = 0x9000, scoped, tag = 'internal scratch']
  #allocation2 [shape = 'f32[1,1]{1,0:T(1,128)S(1)}', space=vmem, size = 0x200, scoped, tag = 'scoped memory for cgan_nbhd_forward.1']
  %s0 = inlined_call_operand.vmem [shape: f32[8,3], index: 0, kind: input, shape index: {}]
  %s1 = inlined_call_operand.vmem [shape: f32[8,6], index: 1, kind: input, shape index: {}]
  %s2 = inlined_call_operand.vmem [shape: f32[25,3], index: 2, kind: input, shape index: {}]
  %s3 = inlined_call_operand.vmem [shape: bf16[6,6], index: 3, kind: input, shape index: {}]
  %s4 = inlined_call_operand.vmem [shape: f32[1,6], index: 4, kind: input, shape index: {}]
  %s5 = inlined_call_operand.vmem [shape: bf16[12,128], index: 5, kind: input, shape index: {}]
  %s6 = inlined_call_operand.vmem [shape: f32[1,128], index: 6, kind: input, shape index: {}]
  %s7 = inlined_call_operand.vmem [shape: bf16[128,256], index: 7, kind: input, shape index: {}]
  %s8 = inlined_call_operand.vmem [shape: f32[1,256], index: 8, kind: input, shape index: {}]
  %s9 = inlined_call_operand.vmem [shape: bf16[256,512], index: 9, kind: input, shape index: {}]
  %s10 = inlined_call_operand.vmem [shape: f32[1,512], index: 10, kind: input, shape index: {}]
  %s11 = inlined_call_operand.hbm [shape: bf16[512,1024], index: 11, kind: input, shape index: {}]
  %s12 = inlined_call_operand.vmem [shape: f32[1,1024], index: 12, kind: input, shape index: {}]
  %s13 = inlined_call_operand.vmem [shape: bf16[1024,6], index: 13, kind: input, shape index: {}]
  %s14 = inlined_call_operand.vmem [shape: f32[1,6], index: 14, kind: input, shape index: {}]
  %s15 = inlined_call_operand.vmem [shape: bf16[6,6], index: 15, kind: input, shape index: {}]
  %s16 = inlined_call_operand.vmem [shape: f32[1,6], index: 16, kind: input, shape index: {}]
  %s17 = inlined_call_operand.vmem [shape: bf16[12,512], index: 17, kind: input, shape index: {}]
  %s18 = inlined_call_operand.vmem [shape: f32[1,512], index: 18, kind: input, shape index: {}]
  %s19 = inlined_call_operand.hbm [shape: bf16[512,512], index: 19, kind: input, shape index: {}]
  %s20 = inlined_call_operand.vmem [shape: f32[1,512], index: 20, kind: input, shape index: {}]
  %s21 = inlined_call_operand.hbm [shape: bf16[512,512], index: 21, kind: input, shape index: {}]
  %s22 = inlined_call_operand.vmem [shape: f32[1,512], index: 22, kind: input, shape index: {}]
  %s23 = inlined_call_operand.vmem [shape: bf16[512,1], index: 23, kind: input, shape index: {}]
  %s24 = inlined_call_operand.<no memory space> [shape: f32[1,1], index: 24, kind: input, shape index: {}]
  %s25 = inlined_call_operand.vmem [shape: f32[8,128], index: 25, kind: output, shape index: {}]
  %s26 = sld [smem:[#allocation0]]
  $region122: #{cgan_nbhd_forward.1} parent=0
    _
  %s28 = ssub.s32 1, %s26
  %s29 = scalar_select 0, %s28, %s26
  %v30 = vstv %s24
  %31 = vst [vmem:[#allocation2] sm:$0x1] %v30
  $region1: #{cgan_nbhd_forward.1} parent=0
    #allocation3 [shape = 'u8[1048576]{0}', space=vmem, size = 0x100000, scoped, tag = 'input window, operand 11, single buffered']
    #allocation4 [shape = 's32[1]{0}', space=sflag, size = 0x4, scoped, tag = 'scoped memory for cgan_nbhd_forward.1']
    #allocation5 [shape = 'u8[524288]{0}', space=vmem, size = 0x80000, scoped, tag = 'input window, operand 19, single buffered']
    #allocation6 [shape = 's32[1]{0}', space=sflag, size = 0x4, scoped, tag = 'scoped memory for cgan_nbhd_forward.1']
    #allocation7 [shape = 'u8[524288]{0}', space=vmem, size = 0x80000, scoped, tag = 'input window, operand 21, single buffered']
    %32 = vsyncpa [#allocation4], 0
    %33 = vsyncpa [#allocation6], 0
    // Predicated region
    $region2: #{cgan_nbhd_forward.1} parent=1 // pred_check
      _
    $region3: #{cgan_nbhd_forward.1} parent=1 // pred_check_branch
      %35 = sbr.rel (0) target = $region5
    $region4: #{cgan_nbhd_forward.1} parent=1 // pred_region
      _
    $region5: #{cgan_nbhd_forward.1} parent=1 // pred_fallthru
      _
    // Predicated region
    $region6: #{cgan_nbhd_forward.1} parent=1 // pred_check
      _
    $region7: #{cgan_nbhd_forward.1} parent=1 // pred_check_branch
      %37 = sbr.rel (0) target = $region9
    $region8: #{cgan_nbhd_forward.1} parent=1 // pred_region
      _
    $region9: #{cgan_nbhd_forward.1} parent=1 // pred_fallthru
      _
    // Predicated region
    $region10: #{cgan_nbhd_forward.1} parent=1 // pred_check
      _
    $region11: #{cgan_nbhd_forward.1} parent=1 // pred_check_branch
      %39 = sbr.rel (0) target = $region13
    $region12: #{cgan_nbhd_forward.1} parent=1 // pred_region
      _
    $region13: #{cgan_nbhd_forward.1} parent=1 // pred_fallthru
      _
    // Predicated region
    $region14: #{cgan_nbhd_forward.1} parent=1 // pred_check
      _
    $region15: #{cgan_nbhd_forward.1} parent=1 // pred_check_branch
      %41 = sbr.rel (0) target = $region17
    $region16: #{cgan_nbhd_forward.1} parent=1 // pred_region
      _
    $region17: #{cgan_nbhd_forward.1} parent=1 // pred_fallthru
      _
    // Predicated region
    $region18: #{cgan_nbhd_forward.1} parent=1 // pred_check
      _
    $region19: #{cgan_nbhd_forward.1} parent=1 // pred_check_branch
      %43 = sbr.rel (0) target = $region21
    $region20: #{cgan_nbhd_forward.1} parent=1 // pred_region
      _
    $region21: #{cgan_nbhd_forward.1} parent=1 // pred_fallthru
      _
    // Predicated region
    $region22: #{cgan_nbhd_forward.1} parent=1 // pred_check
      _
    $region23: #{cgan_nbhd_forward.1} parent=1 // pred_check_branch
      %45 = sbr.rel (0) target = $region25
    $region24: #{cgan_nbhd_forward.1} parent=1 // pred_region
      _
    $region25: #{cgan_nbhd_forward.1} parent=1 // pred_fallthru
      _
    // Predicated region
    $region26: #{cgan_nbhd_forward.1} parent=1 // pred_check
      _
    $region27: #{cgan_nbhd_forward.1} parent=1 // pred_check_branch
      %47 = sbr.rel (0) target = $region29
    $region28: #{cgan_nbhd_forward.1} parent=1 // pred_region
      _
    $region29: #{cgan_nbhd_forward.1} parent=1 // pred_fallthru
      _
    // Predicated region
    $region30: #{cgan_nbhd_forward.1} parent=1 // pred_check
      _
    $region31: #{cgan_nbhd_forward.1} parent=1 // pred_check_branch
      %49 = sbr.rel (0) target = $region33
    $region32: #{cgan_nbhd_forward.1} parent=1 // pred_region
      _
    $region33: #{cgan_nbhd_forward.1} parent=1 // pred_fallthru
      _
    // Predicated region
    $region34: #{cgan_nbhd_forward.1} parent=1 // pred_check
      _
    $region35: #{cgan_nbhd_forward.1} parent=1 // pred_check_branch
      %51 = sbr.rel (0) target = $region37
    $region36: #{cgan_nbhd_forward.1} parent=1 // pred_region
      _
    $region37: #{cgan_nbhd_forward.1} parent=1 // pred_fallthru
      _
    // Predicated region
    $region38: #{cgan_nbhd_forward.1} parent=1 // pred_check
      _
    $region39: #{cgan_nbhd_forward.1} parent=1 // pred_check_branch
      %53 = sbr.rel (0) target = $region41
    $region40: #{cgan_nbhd_forward.1} parent=1 // pred_region
      _
    $region41: #{cgan_nbhd_forward.1} parent=1 // pred_fallthru
      _
    // Predicated region
    $region42: #{cgan_nbhd_forward.1} parent=1 // pred_check
      _
    $region43: #{cgan_nbhd_forward.1} parent=1 // pred_check_branch
      %55 = sbr.rel (0) target = $region45
    $region44: #{cgan_nbhd_forward.1} parent=1 // pred_region
      _
    $region45: #{cgan_nbhd_forward.1} parent=1 // pred_fallthru
      _
    // Predicated region
    $region46: #{cgan_nbhd_forward.1} parent=1 // pred_check
      _
    $region47: #{cgan_nbhd_forward.1} parent=1 // pred_check_branch
      %57 = sbr.rel (0) target = $region49
    $region48: #{cgan_nbhd_forward.1} parent=1 // pred_region
      %59 = vsyncadd [#allocation4], 0
      %s60 = sshll.u32 %s11, 4
      %s61 = int_to_ptr.hbm [resolvable:$true] %s60
      %s62 = sshll.u32 [#allocation3], 4
      %s63 = int_to_ptr.vmem [resolvable:$true] %s62
      %68 = dma.hbm_to_vmem [thread:$0]  %s61, 32768, %s63, [#allocation4], 512, 512, 32
    $region49: #{cgan_nbhd_forward.1} parent=1 // pred_fallthru
      _
    // Predicated region
    $region50: #{cgan_nbhd_forward.1} parent=1 // pred_check
      _
    $region51: #{cgan_nbhd_forward.1} parent=1 // pred_check_branch
      %70 = sbr.rel (0) target = $region53
    $region52: #{cgan_nbhd_forward.1} parent=1 // pred_region
      _
    $region53: #{cgan_nbhd_forward.1} parent=1 // pred_fallthru
      _
    // Predicated region
    $region54: #{cgan_nbhd_forward.1} parent=1 // pred_check
      _
    $region55: #{cgan_nbhd_forward.1} parent=1 // pred_check_branch
      %72 = sbr.rel (0) target = $region57
    $region56: #{cgan_nbhd_forward.1} parent=1 // pred_region
      _
    $region57: #{cgan_nbhd_forward.1} parent=1 // pred_fallthru
      _
    // Predicated region
    $region58: #{cgan_nbhd_forward.1} parent=1 // pred_check
      _
    $region59: #{cgan_nbhd_forward.1} parent=1 // pred_check_branch
      %74 = sbr.rel (0) target = $region61
    $region60: #{cgan_nbhd_forward.1} parent=1 // pred_region
      _
    $region61: #{cgan_nbhd_forward.1} parent=1 // pred_fallthru
      _
    // Predicated region
    $region62: #{cgan_nbhd_forward.1} parent=1 // pred_check
      _
    $region63: #{cgan_nbhd_forward.1} parent=1 // pred_check_branch
      %76 = sbr.rel (0) target = $region65
    $region64: #{cgan_nbhd_forward.1} parent=1 // pred_region
      _
    $region65: #{cgan_nbhd_forward.1} parent=1 // pred_fallthru
      _
    // Predicated region
    $region66: #{cgan_nbhd_forward.1} parent=1 // pred_check
      _
    $region67: #{cgan_nbhd_forward.1} parent=1 // pred_check_branch
      %78 = sbr.rel (0) target = $region69
    $region68: #{cgan_nbhd_forward.1} parent=1 // pred_region
      _
    $region69: #{cgan_nbhd_forward.1} parent=1 // pred_fallthru
      _
    // Predicated region
    $region70: #{cgan_nbhd_forward.1} parent=1 // pred_check
      _
    $region71: #{cgan_nbhd_forward.1} parent=1 // pred_check_branch
      %80 = sbr.rel (0) target = $region73
    $region72: #{cgan_nbhd_forward.1} parent=1 // pred_region
      _
    $region73: #{cgan_nbhd_forward.1} parent=1 // pred_fallthru
      _
    // Predicated region
    $region74: #{cgan_nbhd_forward.1} parent=1 // pred_check
      _
    $region75: #{cgan_nbhd_forward.1} parent=1 // pred_check_branch
      %82 = sbr.rel (0) target = $region77
    $region76: #{cgan_nbhd_forward.1} parent=1 // pred_region
      _
    $region77: #{cgan_nbhd_forward.1} parent=1 // pred_fallthru
      _
    // Predicated region
    $region78: #{cgan_nbhd_forward.1} parent=1 // pred_check
      _
    $region79: #{cgan_nbhd_forward.1} parent=1 // pred_check_branch
      %84 = sbr.rel (0) target = $region81
    $region80: #{cgan_nbhd_forward.1} parent=1 // pred_region
      %86 = vsyncadd [#allocation6], 0
      %s87 = sshll.u32 %s19, 4
      %s88 = int_to_ptr.hbm [resolvable:$true] %s87
      %s89 = sshll.u32 [#allocation5], 4
      %s90 = int_to_ptr.vmem [resolvable:$true] %s89
      %95 = dma.hbm_to_vmem [thread:$0]  %s88, 16384, %s90, [#allocation6], 256, 256, 16
    $region81: #{cgan_nbhd_forward.1} parent=1 // pred_fallthru
      _
    // Predicated region
    $region82: #{cgan_nbhd_forward.1} parent=1 // pred_check
      _
    $region83: #{cgan_nbhd_forward.1} parent=1 // pred_check_branch
      %97 = sbr.rel (0) target = $region85
    $region84: #{cgan_nbhd_forward.1} parent=1 // pred_region
      _
    $region85: #{cgan_nbhd_forward.1} parent=1 // pred_fallthru
      _
    // Predicated region
    $region86: #{cgan_nbhd_forward.1} parent=1 // pred_check
      _
    $region87: #{cgan_nbhd_forward.1} parent=1 // pred_check_branch
      %99 = sbr.rel (0) target = $region89
    $region88: #{cgan_nbhd_forward.1} parent=1 // pred_region
      %101 = vsyncadd [#allocation6], 0
      %s102 = sshll.u32 %s21, 4
      %s103 = int_to_ptr.hbm [resolvable:$true] %s102
      %s104 = sshll.u32 [#allocation7], 4
      %s105 = int_to_ptr.vmem [resolvable:$true] %s104
      %110 = dma.hbm_to_vmem [thread:$0]  %s103, 16384, %s105, [#allocation6], 256, 256, 16
    $region89: #{cgan_nbhd_forward.1} parent=1 // pred_fallthru
      _
    // Predicated region
    $region90: #{cgan_nbhd_forward.1} parent=1 // pred_check
      _
    $region91: #{cgan_nbhd_forward.1} parent=1 // pred_check_branch
      %112 = sbr.rel (0) target = $region93
    $region92: #{cgan_nbhd_forward.1} parent=1 // pred_region
      _
    $region93: #{cgan_nbhd_forward.1} parent=1 // pred_fallthru
      _
    // Predicated region
    $region94: #{cgan_nbhd_forward.1} parent=1 // pred_check
      _
    $region95: #{cgan_nbhd_forward.1} parent=1 // pred_check_branch
      %114 = sbr.rel (0) target = $region97
    $region96: #{cgan_nbhd_forward.1} parent=1 // pred_region
      _
    $region97: #{cgan_nbhd_forward.1} parent=1 // pred_fallthru
      _
    // Predicated region
    $region98: #{cgan_nbhd_forward.1} parent=1 // pred_check
      _
    $region99: #{cgan_nbhd_forward.1} parent=1 // pred_check_branch
      %116 = sbr.rel (0) target = $region101
    $region100: #{cgan_nbhd_forward.1} parent=1 // pred_region
      _
    $region101: #{cgan_nbhd_forward.1} parent=1 // pred_fallthru
      _
    // Predicated region
    $region102: #{cgan_nbhd_forward.1} parent=1 // pred_check
      _
    $region103: #{cgan_nbhd_forward.1} parent=1 // pred_check_branch
      %118 = sbr.rel (0) target = $region105
    $region104: #{cgan_nbhd_forward.1} parent=1 // pred_region
      %120 = dma.done [#allocation4], 32768
    $region105: #{cgan_nbhd_forward.1} parent=1 // pred_fallthru
      _
    // Predicated region
    $region106: #{cgan_nbhd_forward.1} parent=1 // pred_check
      _
    $region107: #{cgan_nbhd_forward.1} parent=1 // pred_check_branch
      %122 = sbr.rel (0) target = $region109
    $region108: #{cgan_nbhd_forward.1} parent=1 // pred_region
      %124 = dma.done [#allocation6], 16384
    $region109: #{cgan_nbhd_forward.1} parent=1 // pred_fallthru
      _
    // Predicated region
    $region110: #{cgan_nbhd_forward.1} parent=1 // pred_check
      _
    $region111: #{cgan_nbhd_forward.1} parent=1 // pred_check_branch
      %126 = sbr.rel (0) target = $region113
    $region112: #{cgan_nbhd_forward.1} parent=1 // pred_region
      %128 = dma.done [#allocation6], 16384
    $region113: #{cgan_nbhd_forward.1} parent=1 // pred_fallthru
      _
    %v130 = vld [vmem:[%s0] sm:$0xff]
    %v131 = vld [vmem:[%s2] sm:$0xff]
    %v132 = vld [vmem:[%s2 + $0x8] sm:$0xff]
    %v133 = vld [vmem:[%s2 + $0x10] sm:$0xff]
    %v134 = vld [vmem:[%s2 + $0x18] sm:$0x1]
    %v135 = vmul.f32 %v130, %v130
    %vm136 = vcmask 23552
    %v137 = vsel %vm136, %v135, 0.0
    %138 = vadd.xlane.f32.xlu0 %v137
    %v139 = vpop.xlane.xlu0 %138
    %v140 = vmul.f32 %v131, %v131
    %v141 = vmul.f32 %v132, %v132
    %v142 = vmul.f32 %v133, %v133
    %v143 = vmul.f32 %v134, %v134
    %v144 = vsel %vm136, %v140, 0.0
    %145 = vadd.xlane.f32.xlu0 %v144
    %v146 = vpop.xlane.xlu0 %145
    %v147 = vsel %vm136, %v141, 0.0
    %148 = vadd.xlane.f32.xlu0 %v147
    %v149 = vpop.xlane.xlu0 %148
    %v150 = vsel %vm136, %v142, 0.0
    %151 = vadd.xlane.f32.xlu0 %v150
    %v152 = vpop.xlane.xlu0 %151
    %vm153 = vcmask 16384
    %v154 = vsel %vm153, %v143, 0.0
    %155 = vadd.xlane.f32.xlu0 %v154
    %v156 = vpop.xlane.xlu0 %155
    %v158 = vsel %vm136, %v130, 0
    %v161 = vsel %vm136, %v131, 0
    %v164 = vsel %vm136, %v132, 0
    %v167 = vsel %vm136, %v133, 0
    %v170 = vsel %vm136, %v134, 0
    %172 = vmatpush.xpose.msra.mxu0 0.0
    %173 = vmatpush.xpose.msra.mxu0 0.0
    %174 = vmatpush.xpose.msra.mxu0 0.0
    %175 = vmatpush.xpose.msra.mxu0 0.0
    %176 = vmatpush.xpose.msra.mxu0 0.0
    %177 = vmatpush.xpose.msra.mxu0 0.0
    %178 = vmatpush.xpose.msra.mxu0 0.0
    %179 = vmatpush.xpose.msra.mxu0 0.0
    %180 = vmatpush.xpose.msra.mxu0 0.0
    %181 = vmatpush.xpose.msra.mxu0 0.0
    %182 = vmatpush.xpose.msra.mxu0 0.0
    %183 = vmatpush.xpose.msra.mxu0 0.0
    %184 = vmatpush.xpose.msra.mxu0 %v170
    %185 = vmatpush.xpose.msra.mxu0 %v167
    %186 = vmatpush.xpose.msra.mxu0 %v164
    %187 = vmatpush.xpose.msra.mxu0 %v161
    %188 = vmatmul.f32.gmra.mxu0 %v158
    %v189 = vpop.f32.mrf.mxu0
    %v190 = vadd.f32 0.0, %v189
    %191 = vdwg.mxu0
    %v196 = vlaneseq
    %v197 = vand.u32 %v196, 127
    %v198 = vperm.slane %v146, %v197
    %v199 = vadd.s32 %v197, 4294967288
    %v200 = vperm.slane %v149, %v199
    %vm201 = vcmask 130112
    %v202 = vsel %vm201, %v200, %v198
    %v203 = vadd.s32 %v197, 4294967280
    %v204 = vperm.slane %v152, %v203
    %vm205 = vcmask 195712
    %v206 = vsel %vm205, %v204, %v202
    %v207 = vadd.s32 %v197, 4294967272
    %v208 = vperm.slane %v156, %v207
    %vm209 = vcmask 261312
    %v210 = vsel %vm209, %v208, %v206
    %vm211 = vcmask 1042434
    %v212 = vsel %vm211, %v210, %v210
    %vm213 = vcmask 1043459
    %v214 = vsel %vm213, %v210, %v212
    %vm215 = vcmask 1044484
    %v216 = vsel %vm215, %v210, %v214
    %vm217 = vcmask 1045509
    %v218 = vsel %vm217, %v210, %v216
    %vm219 = vcmask 1046534
    %v220 = vsel %vm219, %v210, %v218
    %vm221 = vcmask 1047559
    %v222 = vsel %vm221, %v210, %v220
    %v224 = vadd.f32 %v139, %v222
    %v225 = vmul.f32 %v190, 2.0
    %v226 = vsub.f32 %v224, %v225
    %vm227 = vcmask 203776
    %v228 = vsel %vm227, %v226, inf
    %229 = vmin.xlane.f32.xlu0 %v228
    %v230 = vpop.xlane.xlu0 %229
    %vm231 = vcmp.le.f32.partialorder %v226, %v230
    %v232 = vsel %vm231, %v197, 25
    %v233 = vsel %vm227, %v232, 2147483647
    %v234 = vand.u32 %v233, 65535
    %v235 = vshra.s32 %v233, 16
    %v236 = vcvt.s32.f32 %v234
    %v237 = vcvt.s32.f32 %v235
    %238 = vmin.xlane.f32.xlu0 %v237
    %v239 = vpop.xlane.xlu0 %238
    %vm240 = vcmp.eq.f32.partialorder %v237, %v239
    %v241 = vsel %vm240, %v236, inf
    %242 = vmin.xlane.f32.xlu0 %v241
    %v243 = vpop.xlane.xlu0 %242
    %v244 = vcvt.f32.s32 %v243
    %v245 = vcvt.f32.s32 %v239
    %v246 = vshll.u32 %v245, 16
    %v247 = vadd.s32 %v246, %v244
    %vm248 = vcmp.eq.s32.totalorder %v197, %v247
    %v249 = vsel %vm248, 1, 0
    %v250 = vcvt.s32.f32 %v249
    %v251 = vpack.c.bf16 %v250, %v250
    %v252 = vpack.c.bf16 %v132, %v131
    %v253 = vpack.c.bf16 %v134, %v133
    %v255 = vsel %vm227, %v251, 0
    %vm257 = vcmask 1043456
    %vm258 = vcmask 1044480
    %v259 = vsel %vm257, 4294967295, 65535
    %v260 = vsel %vm258, %v259, 0
    %v262 = vand.u32 %v253, %v260
    %264 = vmatpush.bf16.msra.mxu0 0
    %265 = vmatpush.bf16.msra.mxu0 0
    %266 = vmatpush.bf16.msra.mxu0 0
    %267 = vmatpush.bf16.msra.mxu0 0
    %268 = vmatpush.bf16.msra.mxu0 0
    %269 = vmatpush.bf16.msra.mxu0 0
    %270 = vmatpush.bf16.msra.mxu0 %v262
    %271 = vmatpush.bf16.msra.mxu0 %v252
    %272 = vmatmul.bf16.gmra.mxu0 %v255
    %v273 = vpop.f32.mrf.mxu0
    %v274 = vadd.f32 0.0, %v273
    %v275 = vpop.f32.mrf.mxu0
    %276 = vdwg.mxu0
    %277 = vrot.lane.b32.xlu0 %v130, 3
    %v278 = vpop.permute.xlu0 %277
    %v280 = vsel %vm136, %v274, %v278
    %v281 = vld [vmem:[%s3] sm:$0x7]
    %v282 = vpack.c.bf16 %v280, %v280
    %v283 = vld [vmem:[%s4] sm:$0x1]
    %v285 = vperm.slane %v283, 0
    %vm287 = vcmask 48128
    %v289 = vsel %vm287, %v282, 0
    %vm291 = vcmask 1042432
    %v293 = vsel %vm291, %v281, 0
    %295 = vmatpush.bf16.msra.mxu0 0
    %296 = vmatpush.bf16.msra.mxu0 0
    %297 = vmatpush.bf16.msra.mxu0 0
    %298 = vmatpush.bf16.msra.mxu0 0
    %299 = vmatpush.bf16.msra.mxu0 0
    %300 = vmatpush.bf16.msra.mxu0 0
    %301 = vmatpush.bf16.msra.mxu0 0
    %302 = vmatpush.bf16.msra.mxu0 %v293
    %303 = vmatmul.bf16.gmra.mxu0 %v289
    %v304 = vpop.f32.mrf.mxu0
    %v305 = vadd.f32 %v285, %v304
    %v306 = vpop.f32.mrf.mxu0
    %307 = vdwg.mxu0
    %v308 = vld [vmem:[%s1] sm:$0xff]
    %310 = vrot.lane.b32.xlu0 %v308, 6
    %v311 = vpop.permute.xlu0 %310
    %v313 = vsel %vm287, %v305, %v311
    %v314 = vld [vmem:[%s5] sm:$0xf]
    %v315 = vld [vmem:[%s5 + $0x4] sm:$0x3]
    %v316 = vpack.c.bf16 %v313, %v313
    %v317 = vld [vmem:[%s6] sm:$0x1]
    %v319 = vperm.slane %v317, 0
    %v323 = vunpack.c.l.b16 %v314
    %v324 = vunpack.c.l.b16 %v315
    %v325 = vpack.c.b16 %v324, %v323
    %vm326 = vcmask 97280
    %v328 = vsel %vm326, %v316, 0
    %vm330 = vcmask 1045504
    %v332 = vsel %vm330, %v325, 0
    %334 = vmatpush.bf16.msra.mxu0 0
    %335 = vmatpush.bf16.msra.mxu0 0
    %336 = vmatpush.bf16.msra.mxu0 0
    %337 = vmatpush.bf16.msra.mxu0 0
    %338 = vmatpush.bf16.msra.mxu0 0
    %339 = vmatpush.bf16.msra.mxu0 0
    %340 = vmatpush.bf16.msra.mxu0 0
    %341 = vmatpush.bf16.msra.mxu0 %v332
    %342 = vmatmul.bf16.gmra.mxu0 %v328
    %v343 = vpop.f32.mrf.mxu0
    %v344 = vadd.f32 %v319, %v343
    %v345 = vpop.f32.mrf.mxu0
    %346 = vdwg.mxu0
    %v347 = vmul.f32 %v344, 0.2
    %v348 = vmax.f32 %v344, %v347
    %v349 = vld [vmem:[%s7] sm:$0xff]
    %v350 = vld [vmem:[%s7 + $0x8] sm:$0xff]
    %v351 = vld [vmem:[%s7 + $0x10] sm:$0xff]
    %v352 = vld [vmem:[%s7 + $0x18] sm:$0xff]
    %v353 = vld [vmem:[%s7 + $0x20] sm:$0xff]
    %v354 = vld [vmem:[%s7 + $0x28] sm:$0xff]
    %v355 = vld [vmem:[%s7 + $0x30] sm:$0xff]
    %v356 = vld [vmem:[%s7 + $0x38] sm:$0xff]
    %v357 = vld [vmem:[%s7 + $0x40] sm:$0xff]
    %v358 = vld [vmem:[%s7 + $0x48] sm:$0xff]
    %v359 = vld [vmem:[%s7 + $0x50] sm:$0xff]
    %v360 = vld [vmem:[%s7 + $0x58] sm:$0xff]
    %v361 = vld [vmem:[%s7 + $0x60] sm:$0xff]
    %v362 = vld [vmem:[%s7 + $0x68] sm:$0xff]
    %v363 = vld [vmem:[%s7 + $0x70] sm:$0xff]
    %v364 = vld [vmem:[%s7 + $0x78] sm:$0xff]
    %v365 = vpack.c.bf16 %v348, %v348
    %v366 = vld [vmem:[%s8] sm:$0x3]
    %v368 = vperm.slane %v366, 0
    %v369 = vperm.slane %v366, 1
    %v388 = vunpack.c.l.b16 %v349
    %v389 = vunpack.c.h.b16 %v349
    %v390 = vunpack.c.l.b16 %v350
    %v391 = vunpack.c.h.b16 %v350
    %v392 = vunpack.c.l.b16 %v351
    %v393 = vunpack.c.h.b16 %v351
    %v394 = vunpack.c.l.b16 %v352
    %v395 = vunpack.c.h.b16 %v352
    %v396 = vunpack.c.l.b16 %v353
    %v397 = vunpack.c.h.b16 %v353
    %v398 = vunpack.c.l.b16 %v354
    %v399 = vunpack.c.h.b16 %v354
    %v400 = vunpack.c.l.b16 %v355
    %v401 = vunpack.c.h.b16 %v355
    %v402 = vunpack.c.l.b16 %v356
    %v403 = vunpack.c.h.b16 %v356
    %v404 = vunpack.c.l.b16 %v357
    %v405 = vunpack.c.h.b16 %v357
    %v406 = vunpack.c.l.b16 %v358
    %v407 = vunpack.c.h.b16 %v358
    %v408 = vunpack.c.l.b16 %v359
    %v409 = vunpack.c.h.b16 %v359
    %v410 = vunpack.c.l.b16 %v360
    %v411 = vunpack.c.h.b16 %v360
    %v412 = vunpack.c.l.b16 %v361
    %v413 = vunpack.c.h.b16 %v361
    %v414 = vunpack.c.l.b16 %v362
    %v415 = vunpack.c.h.b16 %v362
    %v416 = vunpack.c.l.b16 %v363
    %v417 = vunpack.c.h.b16 %v363
    %v418 = vunpack.c.l.b16 %v364
    %v419 = vunpack.c.h.b16 %v364
    %v420 = vpack.c.b16 %v390, %v388
    %v421 = vpack.c.b16 %v391, %v389
    %v422 = vpack.c.b16 %v394, %v392
    %v423 = vpack.c.b16 %v395, %v393
    %v424 = vpack.c.b16 %v398, %v396
    %v425 = vpack.c.b16 %v399, %v397
    %v426 = vpack.c.b16 %v402, %v400
    %v427 = vpack.c.b16 %v403, %v401
    %v428 = vpack.c.b16 %v406, %v404
    %v429 = vpack.c.b16 %v407, %v405
    %v430 = vpack.c.b16 %v410, %v408
    %v431 = vpack.c.b16 %v411, %v409
    %v432 = vpack.c.b16 %v414, %v412
    %v433 = vpack.c.b16 %v415, %v413
    %v434 = vpack.c.b16 %v418, %v416
    %v435 = vpack.c.b16 %v419, %v417
    %452 = vmatpush.bf16.msra.mxu0 %v434
    %453 = vmatpush.bf16.msra.mxu0 %v432
    %454 = vmatpush.bf16.msra.mxu0 %v430
    %455 = vmatpush.bf16.msra.mxu0 %v428
    %456 = vmatpush.bf16.msra.mxu0 %v426
    %457 = vmatpush.bf16.msra.mxu0 %v424
    %458 = vmatpush.bf16.msra.mxu0 %v422
    %459 = vmatpush.bf16.msra.mxu0 %v420
    %460 = vmatmul.bf16.gmra.mxu0 %v365
    %v461 = vpop.f32.mrf.mxu0
    %v462 = vadd.f32 %v368, %v461
    %v463 = vpop.f32.mrf.mxu0
    %464 = vdwg.mxu0
    %465 = vmatpush.bf16.msra.mxu0 %v435
    %466 = vmatpush.bf16.msra.mxu0 %v433
    %467 = vmatpush.bf16.msra.mxu0 %v431
    %468 = vmatpush.bf16.msra.mxu0 %v429
    %469 = vmatpush.bf16.msra.mxu0 %v427
    %470 = vmatpush.bf16.msra.mxu0 %v425
    %471 = vmatpush.bf16.msra.mxu0 %v423
    %472 = vmatpush.bf16.msra.mxu0 %v421
    %473 = vmatmul.bf16.gmra.mxu0 %v365
    %v474 = vpop.f32.mrf.mxu0
    %v475 = vadd.f32 %v369, %v474
    %v476 = vpop.f32.mrf.mxu0
    %477 = vdwg.mxu0
    %v478 = vmul.f32 %v462, 0.2
    %v479 = vmul.f32 %v475, 0.2
    %v480 = vmax.f32 %v462, %v478
    %v481 = vmax.f32 %v475, %v479
    %v482 = vld [vmem:[%s9] sm:$0xff]
    %v483 = vld [vmem:[%s9 + $0x8] sm:$0xff]
    %v484 = vld [vmem:[%s9 + $0x10] sm:$0xff]
    %v485 = vld [vmem:[%s9 + $0x18] sm:$0xff]
    %v486 = vld [vmem:[%s9 + $0x20] sm:$0xff]
    %v487 = vld [vmem:[%s9 + $0x28] sm:$0xff]
    %v488 = vld [vmem:[%s9 + $0x30] sm:$0xff]
    %v489 = vld [vmem:[%s9 + $0x38] sm:$0xff]
    %v490 = vld [vmem:[%s9 + $0x40] sm:$0xff]
    %v491 = vld [vmem:[%s9 + $0x48] sm:$0xff]
    %v492 = vld [vmem:[%s9 + $0x50] sm:$0xff]
    %v493 = vld [vmem:[%s9 + $0x58] sm:$0xff]
    %v494 = vld [vmem:[%s9 + $0x60] sm:$0xff]
    %v495 = vld [vmem:[%s9 + $0x68] sm:$0xff]
    %v496 = vld [vmem:[%s9 + $0x70] sm:$0xff]
    %v497 = vld [vmem:[%s9 + $0x78] sm:$0xff]
    %v498 = vld [vmem:[%s9 + $0x80] sm:$0xff]
    %v499 = vld [vmem:[%s9 + $0x88] sm:$0xff]
    %v500 = vld [vmem:[%s9 + $0x90] sm:$0xff]
    %v501 = vld [vmem:[%s9 + $0x98] sm:$0xff]
    %v502 = vld [vmem:[%s9 + $0xa0] sm:$0xff]
    %v503 = vld [vmem:[%s9 + $0xa8] sm:$0xff]
    %v504 = vld [vmem:[%s9 + $0xb0] sm:$0xff]
    %v505 = vld [vmem:[%s9 + $0xb8] sm:$0xff]
    %v506 = vld [vmem:[%s9 + $0xc0] sm:$0xff]
    %v507 = vld [vmem:[%s9 + $0xc8] sm:$0xff]
    %v508 = vld [vmem:[%s9 + $0xd0] sm:$0xff]
    %v509 = vld [vmem:[%s9 + $0xd8] sm:$0xff]
    %v510 = vld [vmem:[%s9 + $0xe0] sm:$0xff]
    %v511 = vld [vmem:[%s9 + $0xe8] sm:$0xff]
    %v512 = vld [vmem:[%s9 + $0xf0] sm:$0xff]
    %v513 = vld [vmem:[%s9 + $0xf8] sm:$0xff]
    %v514 = vld [vmem:[%s9 + $0x100] sm:$0xff]
    %v515 = vld [vmem:[%s9 + $0x108] sm:$0xff]
    %v516 = vld [vmem:[%s9 + $0x110] sm:$0xff]
    %v517 = vld [vmem:[%s9 + $0x118] sm:$0xff]
    %v518 = vld [vmem:[%s9 + $0x120] sm:$0xff]
    %v519 = vld [vmem:[%s9 + $0x128] sm:$0xff]
    %v520 = vld [vmem:[%s9 + $0x130] sm:$0xff]
    %v521 = vld [vmem:[%s9 + $0x138] sm:$0xff]
    %v522 = vld [vmem:[%s9 + $0x140] sm:$0xff]
    %v523 = vld [vmem:[%s9 + $0x148] sm:$0xff]
    %v524 = vld [vmem:[%s9 + $0x150] sm:$0xff]
    %v525 = vld [vmem:[%s9 + $0x158] sm:$0xff]
    %v526 = vld [vmem:[%s9 + $0x160] sm:$0xff]
    %v527 = vld [vmem:[%s9 + $0x168] sm:$0xff]
    %v528 = vld [vmem:[%s9 + $0x170] sm:$0xff]
    %v529 = vld [vmem:[%s9 + $0x178] sm:$0xff]
    %v530 = vld [vmem:[%s9 + $0x180] sm:$0xff]
    %v531 = vld [vmem:[%s9 + $0x188] sm:$0xff]
    %v532 = vld [vmem:[%s9 + $0x190] sm:$0xff]
    %v533 = vld [vmem:[%s9 + $0x198] sm:$0xff]
    %v534 = vld [vmem:[%s9 + $0x1a0] sm:$0xff]
    %v535 = vld [vmem:[%s9 + $0x1a8] sm:$0xff]
    %v536 = vld [vmem:[%s9 + $0x1b0] sm:$0xff]
    %v537 = vld [vmem:[%s9 + $0x1b8] sm:$0xff]
    %v538 = vld [vmem:[%s9 + $0x1c0] sm:$0xff]
    %v539 = vld [vmem:[%s9 + $0x1c8] sm:$0xff]
    %v540 = vld [vmem:[%s9 + $0x1d0] sm:$0xff]
    %v541 = vld [vmem:[%s9 + $0x1d8] sm:$0xff]
    %v542 = vld [vmem:[%s9 + $0x1e0] sm:$0xff]
    %v543 = vld [vmem:[%s9 + $0x1e8] sm:$0xff]
    %v544 = vld [vmem:[%s9 + $0x1f0] sm:$0xff]
    %v545 = vld [vmem:[%s9 + $0x1f8] sm:$0xff]
    %v546 = vpack.c.bf16 %v480, %v480
    %v547 = vpack.c.bf16 %v481, %v481
    %v548 = vld [vmem:[%s10] sm:$0xf]
    %v550 = vperm.slane %v548, 0
    %v551 = vperm.slane %v548, 1
    %v552 = vperm.slane %v548, 2
    %v553 = vperm.slane %v548, 3
    %v622 = vunpack.c.l.b16 %v482
    %v623 = vunpack.c.h.b16 %v482
    %v624 = vunpack.c.l.b16 %v483
    %v625 = vunpack.c.h.b16 %v483
    %v626 = vunpack.c.l.b16 %v484
    %v627 = vunpack.c.h.b16 %v484
    %v628 = vunpack.c.l.b16 %v485
    %v629 = vunpack.c.h.b16 %v485
    %v630 = vunpack.c.l.b16 %v486
    %v631 = vunpack.c.h.b16 %v486
    %v632 = vunpack.c.l.b16 %v487
    %v633 = vunpack.c.h.b16 %v487
    %v634 = vunpack.c.l.b16 %v488
    %v635 = vunpack.c.h.b16 %v488
    %v636 = vunpack.c.l.b16 %v489
    %v637 = vunpack.c.h.b16 %v489
    %v638 = vunpack.c.l.b16 %v490
    %v639 = vunpack.c.h.b16 %v490
    %v640 = vunpack.c.l.b16 %v491
    %v641 = vunpack.c.h.b16 %v491
    %v642 = vunpack.c.l.b16 %v492
    %v643 = vunpack.c.h.b16 %v492
    %v644 = vunpack.c.l.b16 %v493
    %v645 = vunpack.c.h.b16 %v493
    %v646 = vunpack.c.l.b16 %v494
    %v647 = vunpack.c.h.b16 %v494
    %v648 = vunpack.c.l.b16 %v495
    %v649 = vunpack.c.h.b16 %v495
    %v650 = vunpack.c.l.b16 %v496
    %v651 = vunpack.c.h.b16 %v496
    %v652 = vunpack.c.l.b16 %v497
    %v653 = vunpack.c.h.b16 %v497
    %v654 = vunpack.c.l.b16 %v498
    %v655 = vunpack.c.h.b16 %v498
    %v656 = vunpack.c.l.b16 %v499
    %v657 = vunpack.c.h.b16 %v499
    %v658 = vunpack.c.l.b16 %v500
    %v659 = vunpack.c.h.b16 %v500
    %v660 = vunpack.c.l.b16 %v501
    %v661 = vunpack.c.h.b16 %v501
    %v662 = vunpack.c.l.b16 %v502
    %v663 = vunpack.c.h.b16 %v502
    %v664 = vunpack.c.l.b16 %v503
    %v665 = vunpack.c.h.b16 %v503
    %v666 = vunpack.c.l.b16 %v504
    %v667 = vunpack.c.h.b16 %v504
    %v668 = vunpack.c.l.b16 %v505
    %v669 = vunpack.c.h.b16 %v505
    %v670 = vunpack.c.l.b16 %v506
    %v671 = vunpack.c.h.b16 %v506
    %v672 = vunpack.c.l.b16 %v507
    %v673 = vunpack.c.h.b16 %v507
    %v674 = vunpack.c.l.b16 %v508
    %v675 = vunpack.c.h.b16 %v508
    %v676 = vunpack.c.l.b16 %v509
    %v677 = vunpack.c.h.b16 %v509
    %v678 = vunpack.c.l.b16 %v510
    %v679 = vunpack.c.h.b16 %v510
    %v680 = vunpack.c.l.b16 %v511
    %v681 = vunpack.c.h.b16 %v511
    %v682 = vunpack.c.l.b16 %v512
    %v683 = vunpack.c.h.b16 %v512
    %v684 = vunpack.c.l.b16 %v513
    %v685 = vunpack.c.h.b16 %v513
    %v686 = vunpack.c.l.b16 %v514
    %v687 = vunpack.c.h.b16 %v514
    %v688 = vunpack.c.l.b16 %v515
    %v689 = vunpack.c.h.b16 %v515
    %v690 = vunpack.c.l.b16 %v516
    %v691 = vunpack.c.h.b16 %v516
    %v692 = vunpack.c.l.b16 %v517
    %v693 = vunpack.c.h.b16 %v517
    %v694 = vunpack.c.l.b16 %v518
    %v695 = vunpack.c.h.b16 %v518
    %v696 = vunpack.c.l.b16 %v519
    %v697 = vunpack.c.h.b16 %v519
    %v698 = vunpack.c.l.b16 %v520
    %v699 = vunpack.c.h.b16 %v520
    %v700 = vunpack.c.l.b16 %v521
    %v701 = vunpack.c.h.b16 %v521
    %v702 = vunpack.c.l.b16 %v522
    %v703 = vunpack.c.h.b16 %v522
    %v704 = vunpack.c.l.b16 %v523
    %v705 = vunpack.c.h.b16 %v523
    %v706 = vunpack.c.l.b16 %v524
    %v707 = vunpack.c.h.b16 %v524
    %v708 = vunpack.c.l.b16 %v525
    %v709 = vunpack.c.h.b16 %v525
    %v710 = vunpack.c.l.b16 %v526
    %v711 = vunpack.c.h.b16 %v526
    %v712 = vunpack.c.l.b16 %v527
    %v713 = vunpack.c.h.b16 %v527
    %v714 = vunpack.c.l.b16 %v528
    %v715 = vunpack.c.h.b16 %v528
    %v716 = vunpack.c.l.b16 %v529
    %v717 = vunpack.c.h.b16 %v529
    %v718 = vunpack.c.l.b16 %v530
    %v719 = vunpack.c.h.b16 %v530
    %v720 = vunpack.c.l.b16 %v531
    %v721 = vunpack.c.h.b16 %v531
    %v722 = vunpack.c.l.b16 %v532
    %v723 = vunpack.c.h.b16 %v532
    %v724 = vunpack.c.l.b16 %v533
    %v725 = vunpack.c.h.b16 %v533
    %v726 = vunpack.c.l.b16 %v534
    %v727 = vunpack.c.h.b16 %v534
    %v728 = vunpack.c.l.b16 %v535
    %v729 = vunpack.c.h.b16 %v535
    %v730 = vunpack.c.l.b16 %v536
    %v731 = vunpack.c.h.b16 %v536
    %v732 = vunpack.c.l.b16 %v537
    %v733 = vunpack.c.h.b16 %v537
    %v734 = vunpack.c.l.b16 %v538
    %v735 = vunpack.c.h.b16 %v538
    %v736 = vunpack.c.l.b16 %v539
    %v737 = vunpack.c.h.b16 %v539
    %v738 = vunpack.c.l.b16 %v540
    %v739 = vunpack.c.h.b16 %v540
    %v740 = vunpack.c.l.b16 %v541
    %v741 = vunpack.c.h.b16 %v541
    %v742 = vunpack.c.l.b16 %v542
    %v743 = vunpack.c.h.b16 %v542
    %v744 = vunpack.c.l.b16 %v543
    %v745 = vunpack.c.h.b16 %v543
    %v746 = vunpack.c.l.b16 %v544
    %v747 = vunpack.c.h.b16 %v544
    %v748 = vunpack.c.l.b16 %v545
    %v749 = vunpack.c.h.b16 %v545
    %v750 = vpack.c.b16 %v626, %v622
    %v751 = vpack.c.b16 %v627, %v623
    %v752 = vpack.c.b16 %v628, %v624
    %v753 = vpack.c.b16 %v629, %v625
    %v754 = vpack.c.b16 %v634, %v630
    %v755 = vpack.c.b16 %v635, %v631
    %v756 = vpack.c.b16 %v636, %v632
    %v757 = vpack.c.b16 %v637, %v633
    %v758 = vpack.c.b16 %v642, %v638
    %v759 = vpack.c.b16 %v643, %v639
    %v760 = vpack.c.b16 %v644, %v640
    %v761 = vpack.c.b16 %v645, %v641
    %v762 = vpack.c.b16 %v650, %v646
    %v763 = vpack.c.b16 %v651, %v647
    %v764 = vpack.c.b16 %v652, %v648
    %v765 = vpack.c.b16 %v653, %v649
    %v766 = vpack.c.b16 %v658, %v654
    %v767 = vpack.c.b16 %v659, %v655
    %v768 = vpack.c.b16 %v660, %v656
    %v769 = vpack.c.b16 %v661, %v657
    %v770 = vpack.c.b16 %v666, %v662
    %v771 = vpack.c.b16 %v667, %v663
    %v772 = vpack.c.b16 %v668, %v664
    %v773 = vpack.c.b16 %v669, %v665
    %v774 = vpack.c.b16 %v674, %v670
    %v775 = vpack.c.b16 %v675, %v671
    %v776 = vpack.c.b16 %v676, %v672
    %v777 = vpack.c.b16 %v677, %v673
    %v778 = vpack.c.b16 %v682, %v678
    %v779 = vpack.c.b16 %v683, %v679
    %v780 = vpack.c.b16 %v684, %v680
    %v781 = vpack.c.b16 %v685, %v681
    %v782 = vpack.c.b16 %v690, %v686
    %v783 = vpack.c.b16 %v691, %v687
    %v784 = vpack.c.b16 %v692, %v688
    %v785 = vpack.c.b16 %v693, %v689
    %v786 = vpack.c.b16 %v698, %v694
    %v787 = vpack.c.b16 %v699, %v695
    %v788 = vpack.c.b16 %v700, %v696
    %v789 = vpack.c.b16 %v701, %v697
    %v790 = vpack.c.b16 %v706, %v702
    %v791 = vpack.c.b16 %v707, %v703
    %v792 = vpack.c.b16 %v708, %v704
    %v793 = vpack.c.b16 %v709, %v705
    %v794 = vpack.c.b16 %v714, %v710
    %v795 = vpack.c.b16 %v715, %v711
    %v796 = vpack.c.b16 %v716, %v712
    %v797 = vpack.c.b16 %v717, %v713
    %v798 = vpack.c.b16 %v722, %v718
    %v799 = vpack.c.b16 %v723, %v719
    %v800 = vpack.c.b16 %v724, %v720
    %v801 = vpack.c.b16 %v725, %v721
    %v802 = vpack.c.b16 %v730, %v726
    %v803 = vpack.c.b16 %v731, %v727
    %v804 = vpack.c.b16 %v732, %v728
    %v805 = vpack.c.b16 %v733, %v729
    %v806 = vpack.c.b16 %v738, %v734
    %v807 = vpack.c.b16 %v739, %v735
    %v808 = vpack.c.b16 %v740, %v736
    %v809 = vpack.c.b16 %v741, %v737
    %v810 = vpack.c.b16 %v746, %v742
    %v811 = vpack.c.b16 %v747, %v743
    %v812 = vpack.c.b16 %v748, %v744
    %v813 = vpack.c.b16 %v749, %v745
    %878 = vmatpush.bf16.msra.mxu0 %v778
    %879 = vmatpush.bf16.msra.mxu0 %v774
    %880 = vmatpush.bf16.msra.mxu0 %v770
    %881 = vmatpush.bf16.msra.mxu0 %v766
    %882 = vmatpush.bf16.msra.mxu0 %v762
    %883 = vmatpush.bf16.msra.mxu0 %v758
    %884 = vmatpush.bf16.msra.mxu0 %v754
    %885 = vmatpush.bf16.msra.mxu0 %v750
    %886 = vmatmul.bf16.gmra.mxu0 %v546
    %v887 = vpop.f32.mrf.mxu0
    %v888 = vadd.f32 %v550, %v887
    %v889 = vpop.f32.mrf.mxu0
    %890 = vdwg.mxu0
    %891 = vmatpush.bf16.msra.mxu0 %v810
    %892 = vmatpush.bf16.msra.mxu0 %v806
    %893 = vmatpush.bf16.msra.mxu0 %v802
    %894 = vmatpush.bf16.msra.mxu0 %v798
    %895 = vmatpush.bf16.msra.mxu0 %v794
    %896 = vmatpush.bf16.msra.mxu0 %v790
    %897 = vmatpush.bf16.msra.mxu0 %v786
    %898 = vmatpush.bf16.msra.mxu0 %v782
    %899 = vmatmul.bf16.gmra.mxu0 %v547
    %v900 = vpop.f32.mrf.mxu0
    %v901 = vadd.f32 %v888, %v900
    %v902 = vpop.f32.mrf.mxu0
    %903 = vdwg.mxu0
    %904 = vmatpush.bf16.msra.mxu0 %v779
    %905 = vmatpush.bf16.msra.mxu0 %v775
    %906 = vmatpush.bf16.msra.mxu0 %v771
    %907 = vmatpush.bf16.msra.mxu0 %v767
    %908 = vmatpush.bf16.msra.mxu0 %v763
    %909 = vmatpush.bf16.msra.mxu0 %v759
    %910 = vmatpush.bf16.msra.mxu0 %v755
    %911 = vmatpush.bf16.msra.mxu0 %v751
    %912 = vmatmul.bf16.gmra.mxu0 %v546
    %v913 = vpop.f32.mrf.mxu0
    %v914 = vadd.f32 %v551, %v913
    %v915 = vpop.f32.mrf.mxu0
    %916 = vdwg.mxu0
    %917 = vmatpush.bf16.msra.mxu0 %v811
    %918 = vmatpush.bf16.msra.mxu0 %v807
    %919 = vmatpush.bf16.msra.mxu0 %v803
    %920 = vmatpush.bf16.msra.mxu0 %v799
    %921 = vmatpush.bf16.msra.mxu0 %v795
    %922 = vmatpush.bf16.msra.mxu0 %v791
    %923 = vmatpush.bf16.msra.mxu0 %v787
    %924 = vmatpush.bf16.msra.mxu0 %v783
    %925 = vmatmul.bf16.gmra.mxu0 %v547
    %v926 = vpop.f32.mrf.mxu0
    %v927 = vadd.f32 %v914, %v926
    %v928 = vpop.f32.mrf.mxu0
    %929 = vdwg.mxu0
    %930 = vmatpush.bf16.msra.mxu0 %v780
    %931 = vmatpush.bf16.msra.mxu0 %v776
    %932 = vmatpush.bf16.msra.mxu0 %v772
    %933 = vmatpush.bf16.msra.mxu0 %v768
    %934 = vmatpush.bf16.msra.mxu0 %v764
    %935 = vmatpush.bf16.msra.mxu0 %v760
    %936 = vmatpush.bf16.msra.mxu0 %v756
    %937 = vmatpush.bf16.msra.mxu0 %v752
    %938 = vmatmul.bf16.gmra.mxu0 %v546
    %v939 = vpop.f32.mrf.mxu0
    %v940 = vadd.f32 %v552, %v939
    %v941 = vpop.f32.mrf.mxu0
    %942 = vdwg.mxu0
    %943 = vmatpush.bf16.msra.mxu0 %v812
    %944 = vmatpush.bf16.msra.mxu0 %v808
    %945 = vmatpush.bf16.msra.mxu0 %v804
    %946 = vmatpush.bf16.msra.mxu0 %v800
    %947 = vmatpush.bf16.msra.mxu0 %v796
    %948 = vmatpush.bf16.msra.mxu0 %v792
    %949 = vmatpush.bf16.msra.mxu0 %v788
    %950 = vmatpush.bf16.msra.mxu0 %v784
    %951 = vmatmul.bf16.gmra.mxu0 %v547
    %v952 = vpop.f32.mrf.mxu0
    %v953 = vadd.f32 %v940, %v952
    %v954 = vpop.f32.mrf.mxu0
    %955 = vdwg.mxu0
    %956 = vmatpush.bf16.msra.mxu0 %v781
    %957 = vmatpush.bf16.msra.mxu0 %v777
    %958 = vmatpush.bf16.msra.mxu0 %v773
    %959 = vmatpush.bf16.msra.mxu0 %v769
    %960 = vmatpush.bf16.msra.mxu0 %v765
    %961 = vmatpush.bf16.msra.mxu0 %v761
    %962 = vmatpush.bf16.msra.mxu0 %v757
    %963 = vmatpush.bf16.msra.mxu0 %v753
    %964 = vmatmul.bf16.gmra.mxu0 %v546
    %v965 = vpop.f32.mrf.mxu0
    %v966 = vadd.f32 %v553, %v965
    %v967 = vpop.f32.mrf.mxu0
    %968 = vdwg.mxu0
    %969 = vmatpush.bf16.msra.mxu0 %v813
    %970 = vmatpush.bf16.msra.mxu0 %v809
    %971 = vmatpush.bf16.msra.mxu0 %v805
    %972 = vmatpush.bf16.msra.mxu0 %v801
    %973 = vmatpush.bf16.msra.mxu0 %v797
    %974 = vmatpush.bf16.msra.mxu0 %v793
    %975 = vmatpush.bf16.msra.mxu0 %v789
    %976 = vmatpush.bf16.msra.mxu0 %v785
    %977 = vmatmul.bf16.gmra.mxu0 %v547
    %v978 = vpop.f32.mrf.mxu0
    %v979 = vadd.f32 %v966, %v978
    %v980 = vpop.f32.mrf.mxu0
    %981 = vdwg.mxu0
    %v982 = vmul.f32 %v901, 0.2
    %v983 = vmul.f32 %v927, 0.2
    %v984 = vmul.f32 %v953, 0.2
    %v985 = vmul.f32 %v979, 0.2
    %v986 = vmax.f32 %v901, %v982
    %v987 = vmax.f32 %v927, %v983
    %v988 = vmax.f32 %v953, %v984
    %v989 = vmax.f32 %v979, %v985
    %v990 = vld [vmem:[#allocation3] sm:$0xff]
    %v991 = vld [vmem:[#allocation3 + $0x8] sm:$0xff]
    %v992 = vld [vmem:[#allocation3 + $0x10] sm:$0xff]
    %v993 = vld [vmem:[#allocation3 + $0x18] sm:$0xff]
    %v994 = vld [vmem:[#allocation3 + $0x20] sm:$0xff]
    %v995 = vld [vmem:[#allocation3 + $0x28] sm:$0xff]
    %v996 = vld [vmem:[#allocation3 + $0x30] sm:$0xff]
    %v997 = vld [vmem:[#allocation3 + $0x38] sm:$0xff]
    %v998 = vld [vmem:[#allocation3 + $0x40] sm:$0xff]
    %v999 = vld [vmem:[#allocation3 + $0x48] sm:$0xff]
    %v1000 = vld [vmem:[#allocation3 + $0x50] sm:$0xff]
    %v1001 = vld [vmem:[#allocation3 + $0x58] sm:$0xff]
    %v1002 = vld [vmem:[#allocation3 + $0x60] sm:$0xff]
    %v1003 = vld [vmem:[#allocation3 + $0x68] sm:$0xff]
    %v1004 = vld [vmem:[#allocation3 + $0x70] sm:$0xff]
    %v1005 = vld [vmem:[#allocation3 + $0x78] sm:$0xff]
    %v1006 = vld [vmem:[#allocation3 + $0x80] sm:$0xff]
    %v1007 = vld [vmem:[#allocation3 + $0x88] sm:$0xff]
    %v1008 = vld [vmem:[#allocation3 + $0x90] sm:$0xff]
    %v1009 = vld [vmem:[#allocation3 + $0x98] sm:$0xff]
    %v1010 = vld [vmem:[#allocation3 + $0xa0] sm:$0xff]
    %v1011 = vld [vmem:[#allocation3 + $0xa8] sm:$0xff]
    %v1012 = vld [vmem:[#allocation3 + $0xb0] sm:$0xff]
    %v1013 = vld [vmem:[#allocation3 + $0xb8] sm:$0xff]
    %v1014 = vld [vmem:[#allocation3 + $0xc0] sm:$0xff]
    %v1015 = vld [vmem:[#allocation3 + $0xc8] sm:$0xff]
    %v1016 = vld [vmem:[#allocation3 + $0xd0] sm:$0xff]
    %v1017 = vld [vmem:[#allocation3 + $0xd8] sm:$0xff]
    %v1018 = vld [vmem:[#allocation3 + $0xe0] sm:$0xff]
    %v1019 = vld [vmem:[#allocation3 + $0xe8] sm:$0xff]
    %v1020 = vld [vmem:[#allocation3 + $0xf0] sm:$0xff]
    %v1021 = vld [vmem:[#allocation3 + $0xf8] sm:$0xff]
    %v1022 = vld [vmem:[#allocation3 + $0x100] sm:$0xff]
    %v1023 = vld [vmem:[#allocation3 + $0x108] sm:$0xff]
    %v1024 = vld [vmem:[#allocation3 + $0x110] sm:$0xff]
    %v1025 = vld [vmem:[#allocation3 + $0x118] sm:$0xff]
    %v1026 = vld [vmem:[#allocation3 + $0x120] sm:$0xff]
    %v1027 = vld [vmem:[#allocation3 + $0x128] sm:$0xff]
    %v1028 = vld [vmem:[#allocation3 + $0x130] sm:$0xff]
    %v1029 = vld [vmem:[#allocation3 + $0x138] sm:$0xff]
    %v1030 = vld [vmem:[#allocation3 + $0x140] sm:$0xff]
    %v1031 = vld [vmem:[#allocation3 + $0x148] sm:$0xff]
    %v1032 = vld [vmem:[#allocation3 + $0x150] sm:$0xff]
    %v1033 = vld [vmem:[#allocation3 + $0x158] sm:$0xff]
    %v1034 = vld [vmem:[#allocation3 + $0x160] sm:$0xff]
    %v1035 = vld [vmem:[#allocation3 + $0x168] sm:$0xff]
    %v1036 = vld [vmem:[#allocation3 + $0x170] sm:$0xff]
    %v1037 = vld [vmem:[#allocation3 + $0x178] sm:$0xff]
    %v1038 = vld [vmem:[#allocation3 + $0x180] sm:$0xff]
    %v1039 = vld [vmem:[#allocation3 + $0x188] sm:$0xff]
    %v1040 = vld [vmem:[#allocation3 + $0x190] sm:$0xff]
    %v1041 = vld [vmem:[#allocation3 + $0x198] sm:$0xff]
    %v1042 = vld [vmem:[#allocation3 + $0x1a0] sm:$0xff]
    %v1043 = vld [vmem:[#allocation3 + $0x1a8] sm:$0xff]
    %v1044 = vld [vmem:[#allocation3 + $0x1b0] sm:$0xff]
    %v1045 = vld [vmem:[#allocation3 + $0x1b8] sm:$0xff]
    %v1046 = vld [vmem:[#allocation3 + $0x1c0] sm:$0xff]
    %v1047 = vld [vmem:[#allocation3 + $0x1c8] sm:$0xff]
    %v1048 = vld [vmem:[#allocation3 + $0x1d0] sm:$0xff]
    %v1049 = vld [vmem:[#allocation3 + $0x1d8] sm:$0xff]
    %v1050 = vld [vmem:[#allocation3 + $0x1e0] sm:$0xff]
    %v1051 = vld [vmem:[#allocation3 + $0x1e8] sm:$0xff]
    %v1052 = vld [vmem:[#allocation3 + $0x1f0] sm:$0xff]
    %v1053 = vld [vmem:[#allocation3 + $0x1f8] sm:$0xff]
    %v1054 = vld [vmem:[#allocation3 + $0x200] sm:$0xff]
    %v1055 = vld [vmem:[#allocation3 + $0x208] sm:$0xff]
    %v1056 = vld [vmem:[#allocation3 + $0x210] sm:$0xff]
    %v1057 = vld [vmem:[#allocation3 + $0x218] sm:$0xff]
    %v1058 = vld [vmem:[#allocation3 + $0x220] sm:$0xff]
    %v1059 = vld [vmem:[#allocation3 + $0x228] sm:$0xff]
    %v1060 = vld [vmem:[#allocation3 + $0x230] sm:$0xff]
    %v1061 = vld [vmem:[#allocation3 + $0x238] sm:$0xff]
    %v1062 = vld [vmem:[#allocation3 + $0x240] sm:$0xff]
    %v1063 = vld [vmem:[#allocation3 + $0x248] sm:$0xff]
    %v1064 = vld [vmem:[#allocation3 + $0x250] sm:$0xff]
    %v1065 = vld [vmem:[#allocation3 + $0x258] sm:$0xff]
    %v1066 = vld [vmem:[#allocation3 + $0x260] sm:$0xff]
    %v1067 = vld [vmem:[#allocation3 + $0x268] sm:$0xff]
    %v1068 = vld [vmem:[#allocation3 + $0x270] sm:$0xff]
    %v1069 = vld [vmem:[#allocation3 + $0x278] sm:$0xff]
    %v1070 = vld [vmem:[#allocation3 + $0x280] sm:$0xff]
    %v1071 = vld [vmem:[#allocation3 + $0x288] sm:$0xff]
    %v1072 = vld [vmem:[#allocation3 + $0x290] sm:$0xff]
    %v1073 = vld [vmem:[#allocation3 + $0x298] sm:$0xff]
    %v1074 = vld [vmem:[#allocation3 + $0x2a0] sm:$0xff]
    %v1075 = vld [vmem:[#allocation3 + $0x2a8] sm:$0xff]
    %v1076 = vld [vmem:[#allocation3 + $0x2b0] sm:$0xff]
    %v1077 = vld [vmem:[#allocation3 + $0x2b8] sm:$0xff]
    %v1078 = vld [vmem:[#allocation3 + $0x2c0] sm:$0xff]
    %v1079 = vld [vmem:[#allocation3 + $0x2c8] sm:$0xff]
    %v1080 = vld [vmem:[#allocation3 + $0x2d0] sm:$0xff]
    %v1081 = vld [vmem:[#allocation3 + $0x2d8] sm:$0xff]
    %v1082 = vld [vmem:[#allocation3 + $0x2e0] sm:$0xff]
    %v1083 = vld [vmem:[#allocation3 + $0x2e8] sm:$0xff]
    %v1084 = vld [vmem:[#allocation3 + $0x2f0] sm:$0xff]
    %v1085 = vld [vmem:[#allocation3 + $0x2f8] sm:$0xff]
    %v1086 = vld [vmem:[#allocation3 + $0x300] sm:$0xff]
    %v1087 = vld [vmem:[#allocation3 + $0x308] sm:$0xff]
    %v1088 = vld [vmem:[#allocation3 + $0x310] sm:$0xff]
    %v1089 = vld [vmem:[#allocation3 + $0x318] sm:$0xff]
    %v1090 = vld [vmem:[#allocation3 + $0x320] sm:$0xff]
    %v1091 = vld [vmem:[#allocation3 + $0x328] sm:$0xff]
    %v1092 = vld [vmem:[#allocation3 + $0x330] sm:$0xff]
    %v1093 = vld [vmem:[#allocation3 + $0x338] sm:$0xff]
    %v1094 = vld [vmem:[#allocation3 + $0x340] sm:$0xff]
    %v1095 = vld [vmem:[#allocation3 + $0x348] sm:$0xff]
    %v1096 = vld [vmem:[#allocation3 + $0x350] sm:$0xff]
    %v1097 = vld [vmem:[#allocation3 + $0x358] sm:$0xff]
    %v1098 = vld [vmem:[#allocation3 + $0x360] sm:$0xff]
    %v1099 = vld [vmem:[#allocation3 + $0x368] sm:$0xff]
    %v1100 = vld [vmem:[#allocation3 + $0x370] sm:$0xff]
    %v1101 = vld [vmem:[#allocation3 + $0x378] sm:$0xff]
    %v1102 = vld [vmem:[#allocation3 + $0x380] sm:$0xff]
    %v1103 = vld [vmem:[#allocation3 + $0x388] sm:$0xff]
    %v1104 = vld [vmem:[#allocation3 + $0x390] sm:$0xff]
    %v1105 = vld [vmem:[#allocation3 + $0x398] sm:$0xff]
    %v1106 = vld [vmem:[#allocation3 + $0x3a0] sm:$0xff]
    %v1107 = vld [vmem:[#allocation3 + $0x3a8] sm:$0xff]
    %v1108 = vld [vmem:[#allocation3 + $0x3b0] sm:$0xff]
    %v1109 = vld [vmem:[#allocation3 + $0x3b8] sm:$0xff]
    %v1110 = vld [vmem:[#allocation3 + $0x3c0] sm:$0xff]
    %v1111 = vld [vmem:[#allocation3 + $0x3c8] sm:$0xff]
    %v1112 = vld [vmem:[#allocation3 + $0x3d0] sm:$0xff]
    %v1113 = vld [vmem:[#allocation3 + $0x3d8] sm:$0xff]
    %v1114 = vld [vmem:[#allocation3 + $0x3e0] sm:$0xff]
    %v1115 = vld [vmem:[#allocation3 + $0x3e8] sm:$0xff]
    %v1116 = vld [vmem:[#allocation3 + $0x3f0] sm:$0xff]
    %v1117 = vld [vmem:[#allocation3 + $0x3f8] sm:$0xff]
    %v1118 = vld [vmem:[#allocation3 + $0x400] sm:$0xff]
    %v1119 = vld [vmem:[#allocation3 + $0x408] sm:$0xff]
    %v1120 = vld [vmem:[#allocation3 + $0x410] sm:$0xff]
    %v1121 = vld [vmem:[#allocation3 + $0x418] sm:$0xff]
    %v1122 = vld [vmem:[#allocation3 + $0x420] sm:$0xff]
    %v1123 = vld [vmem:[#allocation3 + $0x428] sm:$0xff]
    %v1124 = vld [vmem:[#allocation3 + $0x430] sm:$0xff]
    %v1125 = vld [vmem:[#allocation3 + $0x438] sm:$0xff]
    %v1126 = vld [vmem:[#allocation3 + $0x440] sm:$0xff]
    %v1127 = vld [vmem:[#allocation3 + $0x448] sm:$0xff]
    %v1128 = vld [vmem:[#allocation3 + $0x450] sm:$0xff]
    %v1129 = vld [vmem:[#allocation3 + $0x458] sm:$0xff]
    %v1130 = vld [vmem:[#allocation3 + $0x460] sm:$0xff]
    %v1131 = vld [vmem:[#allocation3 + $0x468] sm:$0xff]
    %v1132 = vld [vmem:[#allocation3 + $0x470] sm:$0xff]
    %v1133 = vld [vmem:[#allocation3 + $0x478] sm:$0xff]
    %v1134 = vld [vmem:[#allocation3 + $0x480] sm:$0xff]
    %v1135 = vld [vmem:[#allocation3 + $0x488] sm:$0xff]
    %v1136 = vld [vmem:[#allocation3 + $0x490] sm:$0xff]
    %v1137 = vld [vmem:[#allocation3 + $0x498] sm:$0xff]
    %v1138 = vld [vmem:[#allocation3 + $0x4a0] sm:$0xff]
    %v1139 = vld [vmem:[#allocation3 + $0x4a8] sm:$0xff]
    %v1140 = vld [vmem:[#allocation3 + $0x4b0] sm:$0xff]
    %v1141 = vld [vmem:[#allocation3 + $0x4b8] sm:$0xff]
    %v1142 = vld [vmem:[#allocation3 + $0x4c0] sm:$0xff]
    %v1143 = vld [vmem:[#allocation3 + $0x4c8] sm:$0xff]
    %v1144 = vld [vmem:[#allocation3 + $0x4d0] sm:$0xff]
    %v1145 = vld [vmem:[#allocation3 + $0x4d8] sm:$0xff]
    %v1146 = vld [vmem:[#allocation3 + $0x4e0] sm:$0xff]
    %v1147 = vld [vmem:[#allocation3 + $0x4e8] sm:$0xff]
    %v1148 = vld [vmem:[#allocation3 + $0x4f0] sm:$0xff]
    %v1149 = vld [vmem:[#allocation3 + $0x4f8] sm:$0xff]
    %v1150 = vld [vmem:[#allocation3 + $0x500] sm:$0xff]
    %v1151 = vld [vmem:[#allocation3 + $0x508] sm:$0xff]
    %v1152 = vld [vmem:[#allocation3 + $0x510] sm:$0xff]
    %v1153 = vld [vmem:[#allocation3 + $0x518] sm:$0xff]
    %v1154 = vld [vmem:[#allocation3 + $0x520] sm:$0xff]
    %v1155 = vld [vmem:[#allocation3 + $0x528] sm:$0xff]
    %v1156 = vld [vmem:[#allocation3 + $0x530] sm:$0xff]
    %v1157 = vld [vmem:[#allocation3 + $0x538] sm:$0xff]
    %v1158 = vld [vmem:[#allocation3 + $0x540] sm:$0xff]
    %v1159 = vld [vmem:[#allocation3 + $0x548] sm:$0xff]
    %v1160 = vld [vmem:[#allocation3 + $0x550] sm:$0xff]
    %v1161 = vld [vmem:[#allocation3 + $0x558] sm:$0xff]
    %v1162 = vld [vmem:[#allocation3 + $0x560] sm:$0xff]
    %v1163 = vld [vmem:[#allocation3 + $0x568] sm:$0xff]
    %v1164 = vld [vmem:[#allocation3 + $0x570] sm:$0xff]
    %v1165 = vld [vmem:[#allocation3 + $0x578] sm:$0xff]
    %v1166 = vld [vmem:[#allocation3 + $0x580] sm:$0xff]
    %v1167 = vld [vmem:[#allocation3 + $0x588] sm:$0xff]
    %v1168 = vld [vmem:[#allocation3 + $0x590] sm:$0xff]
    %v1169 = vld [vmem:[#allocation3 + $0x598] sm:$0xff]
    %v1170 = vld [vmem:[#allocation3 + $0x5a0] sm:$0xff]
    %v1171 = vld [vmem:[#allocation3 + $0x5a8] sm:$0xff]
    %v1172 = vld [vmem:[#allocation3 + $0x5b0] sm:$0xff]
    %v1173 = vld [vmem:[#allocation3 + $0x5b8] sm:$0xff]
    %v1174 = vld [vmem:[#allocation3 + $0x5c0] sm:$0xff]
    %v1175 = vld [vmem:[#allocation3 + $0x5c8] sm:$0xff]
    %v1176 = vld [vmem:[#allocation3 + $0x5d0] sm:$0xff]
    %v1177 = vld [vmem:[#allocation3 + $0x5d8] sm:$0xff]
    %v1178 = vld [vmem:[#allocation3 + $0x5e0] sm:$0xff]
    %v1179 = vld [vmem:[#allocation3 + $0x5e8] sm:$0xff]
    %v1180 = vld [vmem:[#allocation3 + $0x5f0] sm:$0xff]
    %v1181 = vld [vmem:[#allocation3 + $0x5f8] sm:$0xff]
    %v1182 = vld [vmem:[#allocation3 + $0x600] sm:$0xff]
    %v1183 = vld [vmem:[#allocation3 + $0x608] sm:$0xff]
    %v1184 = vld [vmem:[#allocation3 + $0x610] sm:$0xff]
    %v1185 = vld [vmem:[#allocation3 + $0x618] sm:$0xff]
    %v1186 = vld [vmem:[#allocation3 + $0x620] sm:$0xff]
    %v1187 = vld [vmem:[#allocation3 + $0x628] sm:$0xff]
    %v1188 = vld [vmem:[#allocation3 + $0x630] sm:$0xff]
    %v1189 = vld [vmem:[#allocation3 + $0x638] sm:$0xff]
    %v1190 = vld [vmem:[#allocation3 + $0x640] sm:$0xff]
    %v1191 = vld [vmem:[#allocation3 + $0x648] sm:$0xff]
    %v1192 = vld [vmem:[#allocation3 + $0x650] sm:$0xff]
    %v1193 = vld [vmem:[#allocation3 + $0x658] sm:$0xff]
    %v1194 = vld [vmem:[#allocation3 + $0x660] sm:$0xff]
    %v1195 = vld [vmem:[#allocation3 + $0x668] sm:$0xff]
    %v1196 = vld [vmem:[#allocation3 + $0x670] sm:$0xff]
    %v1197 = vld [vmem:[#allocation3 + $0x678] sm:$0xff]
    %v1198 = vld [vmem:[#allocation3 + $0x680] sm:$0xff]
    %v1199 = vld [vmem:[#allocation3 + $0x688] sm:$0xff]
    %v1200 = vld [vmem:[#allocation3 + $0x690] sm:$0xff]
    %v1201 = vld [vmem:[#allocation3 + $0x698] sm:$0xff]
    %v1202 = vld [vmem:[#allocation3 + $0x6a0] sm:$0xff]
    %v1203 = vld [vmem:[#allocation3 + $0x6a8] sm:$0xff]
    %v1204 = vld [vmem:[#allocation3 + $0x6b0] sm:$0xff]
    %v1205 = vld [vmem:[#allocation3 + $0x6b8] sm:$0xff]
    %v1206 = vld [vmem:[#allocation3 + $0x6c0] sm:$0xff]
    %v1207 = vld [vmem:[#allocation3 + $0x6c8] sm:$0xff]
    %v1208 = vld [vmem:[#allocation3 + $0x6d0] sm:$0xff]
    %v1209 = vld [vmem:[#allocation3 + $0x6d8] sm:$0xff]
    %v1210 = vld [vmem:[#allocation3 + $0x6e0] sm:$0xff]
    %v1211 = vld [vmem:[#allocation3 + $0x6e8] sm:$0xff]
    %v1212 = vld [vmem:[#allocation3 + $0x6f0] sm:$0xff]
    %v1213 = vld [vmem:[#allocation3 + $0x6f8] sm:$0xff]
    %v1214 = vld [vmem:[#allocation3 + $0x700] sm:$0xff]
    %v1215 = vld [vmem:[#allocation3 + $0x708] sm:$0xff]
    %v1216 = vld [vmem:[#allocation3 + $0x710] sm:$0xff]
    %v1217 = vld [vmem:[#allocation3 + $0x718] sm:$0xff]
    %v1218 = vld [vmem:[#allocation3 + $0x720] sm:$0xff]
    %v1219 = vld [vmem:[#allocation3 + $0x728] sm:$0xff]
    %v1220 = vld [vmem:[#allocation3 + $0x730] sm:$0xff]
    %v1221 = vld [vmem:[#allocation3 + $0x738] sm:$0xff]
    %v1222 = vld [vmem:[#allocation3 + $0x740] sm:$0xff]
    %v1223 = vld [vmem:[#allocation3 + $0x748] sm:$0xff]
    %v1224 = vld [vmem:[#allocation3 + $0x750] sm:$0xff]
    %v1225 = vld [vmem:[#allocation3 + $0x758] sm:$0xff]
    %v1226 = vld [vmem:[#allocation3 + $0x760] sm:$0xff]
    %v1227 = vld [vmem:[#allocation3 + $0x768] sm:$0xff]
    %v1228 = vld [vmem:[#allocation3 + $0x770] sm:$0xff]
    %v1229 = vld [vmem:[#allocation3 + $0x778] sm:$0xff]
    %v1230 = vld [vmem:[#allocation3 + $0x780] sm:$0xff]
    %v1231 = vld [vmem:[#allocation3 + $0x788] sm:$0xff]
    %v1232 = vld [vmem:[#allocation3 + $0x790] sm:$0xff]
    %v1233 = vld [vmem:[#allocation3 + $0x798] sm:$0xff]
    %v1234 = vld [vmem:[#allocation3 + $0x7a0] sm:$0xff]
    %v1235 = vld [vmem:[#allocation3 + $0x7a8] sm:$0xff]
    %v1236 = vld [vmem:[#allocation3 + $0x7b0] sm:$0xff]
    %v1237 = vld [vmem:[#allocation3 + $0x7b8] sm:$0xff]
    %v1238 = vld [vmem:[#allocation3 + $0x7c0] sm:$0xff]
    %v1239 = vld [vmem:[#allocation3 + $0x7c8] sm:$0xff]
    %v1240 = vld [vmem:[#allocation3 + $0x7d0] sm:$0xff]
    %v1241 = vld [vmem:[#allocation3 + $0x7d8] sm:$0xff]
    %v1242 = vld [vmem:[#allocation3 + $0x7e0] sm:$0xff]
    %v1243 = vld [vmem:[#allocation3 + $0x7e8] sm:$0xff]
    %v1244 = vld [vmem:[#allocation3 + $0x7f0] sm:$0xff]
    %v1245 = vld [vmem:[#allocation3 + $0x7f8] sm:$0xff]
    %v1246 = vpack.c.bf16 %v986, %v986
    %v1247 = vpack.c.bf16 %v987, %v987
    %v1248 = vpack.c.bf16 %v988, %v988
    %v1249 = vpack.c.bf16 %v989, %v989
    %v1250 = vld [vmem:[%s12] sm:$0xff]
    %v1252 = vperm.slane %v1250, 0
    %v1253 = vperm.slane %v1250, 1
    %v1254 = vperm.slane %v1250, 2
    %v1255 = vperm.slane %v1250, 3
    %v1256 = vperm.slane %v1250, 4
    %v1257 = vperm.slane %v1250, 5
    %v1258 = vperm.slane %v1250, 6
    %v1259 = vperm.slane %v1250, 7
    %v1524 = vunpack.c.l.b16 %v990
    %v1525 = vunpack.c.h.b16 %v990
    %v1526 = vunpack.c.l.b16 %v991
    %v1527 = vunpack.c.h.b16 %v991
    %v1528 = vunpack.c.l.b16 %v992
    %v1529 = vunpack.c.h.b16 %v992
    %v1530 = vunpack.c.l.b16 %v993
    %v1531 = vunpack.c.h.b16 %v993
    %v1532 = vunpack.c.l.b16 %v994
    %v1533 = vunpack.c.h.b16 %v994
    %v1534 = vunpack.c.l.b16 %v995
    %v1535 = vunpack.c.h.b16 %v995
    %v1536 = vunpack.c.l.b16 %v996
    %v1537 = vunpack.c.h.b16 %v996
    %v1538 = vunpack.c.l.b16 %v997
    %v1539 = vunpack.c.h.b16 %v997
    %v1540 = vunpack.c.l.b16 %v998
    %v1541 = vunpack.c.h.b16 %v998
    %v1542 = vunpack.c.l.b16 %v999
    %v1543 = vunpack.c.h.b16 %v999
    %v1544 = vunpack.c.l.b16 %v1000
    %v1545 = vunpack.c.h.b16 %v1000
    %v1546 = vunpack.c.l.b16 %v1001
    %v1547 = vunpack.c.h.b16 %v1001
    %v1548 = vunpack.c.l.b16 %v1002
    %v1549 = vunpack.c.h.b16 %v1002
    %v1550 = vunpack.c.l.b16 %v1003
    %v1551 = vunpack.c.h.b16 %v1003
    %v1552 = vunpack.c.l.b16 %v1004
    %v1553 = vunpack.c.h.b16 %v1004
    %v1554 = vunpack.c.l.b16 %v1005
    %v1555 = vunpack.c.h.b16 %v1005
    %v1556 = vunpack.c.l.b16 %v1006
    %v1557 = vunpack.c.h.b16 %v1006
    %v1558 = vunpack.c.l.b16 %v1007
    %v1559 = vunpack.c.h.b16 %v1007
    %v1560 = vunpack.c.l.b16 %v1008
    %v1561 = vunpack.c.h.b16 %v1008
    %v1562 = vunpack.c.l.b16 %v1009
    %v1563 = vunpack.c.h.b16 %v1009
    %v1564 = vunpack.c.l.b16 %v1010
    %v1565 = vunpack.c.h.b16 %v1010
    %v1566 = vunpack.c.l.b16 %v1011
    %v1567 = vunpack.c.h.b16 %v1011
    %v1568 = vunpack.c.l.b16 %v1012
    %v1569 = vunpack.c.h.b16 %v1012
    %v1570 = vunpack.c.l.b16 %v1013
    %v1571 = vunpack.c.h.b16 %v1013
    %v1572 = vunpack.c.l.b16 %v1014
    %v1573 = vunpack.c.h.b16 %v1014
    %v1574 = vunpack.c.l.b16 %v1015
    %v1575 = vunpack.c.h.b16 %v1015
    %v1576 = vunpack.c.l.b16 %v1016
    %v1577 = vunpack.c.h.b16 %v1016
    %v1578 = vunpack.c.l.b16 %v1017
    %v1579 = vunpack.c.h.b16 %v1017
    %v1580 = vunpack.c.l.b16 %v1018
    %v1581 = vunpack.c.h.b16 %v1018
    %v1582 = vunpack.c.l.b16 %v1019
    %v1583 = vunpack.c.h.b16 %v1019
    %v1584 = vunpack.c.l.b16 %v1020
    %v1585 = vunpack.c.h.b16 %v1020
    %v1586 = vunpack.c.l.b16 %v1021
    %v1587 = vunpack.c.h.b16 %v1021
    %v1588 = vunpack.c.l.b16 %v1022
    %v1589 = vunpack.c.h.b16 %v1022
    %v1590 = vunpack.c.l.b16 %v1023
    %v1591 = vunpack.c.h.b16 %v1023
    %v1592 = vunpack.c.l.b16 %v1024
    %v1593 = vunpack.c.h.b16 %v1024
    %v1594 = vunpack.c.l.b16 %v1025
    %v1595 = vunpack.c.h.b16 %v1025
    %v1596 = vunpack.c.l.b16 %v1026
    %v1597 = vunpack.c.h.b16 %v1026
    %v1598 = vunpack.c.l.b16 %v1027
    %v1599 = vunpack.c.h.b16 %v1027
    %v1600 = vunpack.c.l.b16 %v1028
    %v1601 = vunpack.c.h.b16 %v1028
    %v1602 = vunpack.c.l.b16 %v1029
    %v1603 = vunpack.c.h.b16 %v1029
    %v1604 = vunpack.c.l.b16 %v1030
    %v1605 = vunpack.c.h.b16 %v1030
    %v1606 = vunpack.c.l.b16 %v1031
    %v1607 = vunpack.c.h.b16 %v1031
    %v1608 = vunpack.c.l.b16 %v1032
    %v1609 = vunpack.c.h.b16 %v1032
    %v1610 = vunpack.c.l.b16 %v1033
    %v1611 = vunpack.c.h.b16 %v1033
    %v1612 = vunpack.c.l.b16 %v1034
    %v1613 = vunpack.c.h.b16 %v1034
    %v1614 = vunpack.c.l.b16 %v1035
    %v1615 = vunpack.c.h.b16 %v1035
    %v1616 = vunpack.c.l.b16 %v1036
    %v1617 = vunpack.c.h.b16 %v1036
    %v1618 = vunpack.c.l.b16 %v1037
    %v1619 = vunpack.c.h.b16 %v1037
    %v1620 = vunpack.c.l.b16 %v1038
    %v1621 = vunpack.c.h.b16 %v1038
    %v1622 = vunpack.c.l.b16 %v1039
    %v1623 = vunpack.c.h.b16 %v1039
    %v1624 = vunpack.c.l.b16 %v1040
    %v1625 = vunpack.c.h.b16 %v1040
    %v1626 = vunpack.c.l.b16 %v1041
    %v1627 = vunpack.c.h.b16 %v1041
    %v1628 = vunpack.c.l.b16 %v1042
    %v1629 = vunpack.c.h.b16 %v1042
    %v1630 = vunpack.c.l.b16 %v1043
    %v1631 = vunpack.c.h.b16 %v1043
    %v1632 = vunpack.c.l.b16 %v1044
    %v1633 = vunpack.c.h.b16 %v1044
    %v1634 = vunpack.c.l.b16 %v1045
    %v1635 = vunpack.c.h.b16 %v1045
    %v1636 = vunpack.c.l.b16 %v1046
    %v1637 = vunpack.c.h.b16 %v1046
    %v1638 = vunpack.c.l.b16 %v1047
    %v1639 = vunpack.c.h.b16 %v1047
    %v1640 = vunpack.c.l.b16 %v1048
    %v1641 = vunpack.c.h.b16 %v1048
    %v1642 = vunpack.c.l.b16 %v1049
    %v1643 = vunpack.c.h.b16 %v1049
    %v1644 = vunpack.c.l.b16 %v1050
    %v1645 = vunpack.c.h.b16 %v1050
    %v1646 = vunpack.c.l.b16 %v1051
    %v1647 = vunpack.c.h.b16 %v1051
    %v1648 = vunpack.c.l.b16 %v1052
    %v1649 = vunpack.c.h.b16 %v1052
    %v1650 = vunpack.c.l.b16 %v1053
    %v1651 = vunpack.c.h.b16 %v1053
    %v1652 = vunpack.c.l.b16 %v1054
    %v1653 = vunpack.c.h.b16 %v1054
    %v1654 = vunpack.c.l.b16 %v1055
    %v1655 = vunpack.c.h.b16 %v1055
    %v1656 = vunpack.c.l.b16 %v1056
    %v1657 = vunpack.c.h.b16 %v1056
    %v1658 = vunpack.c.l.b16 %v1057
    %v1659 = vunpack.c.h.b16 %v1057
    %v1660 = vunpack.c.l.b16 %v1058
    %v1661 = vunpack.c.h.b16 %v1058
    %v1662 = vunpack.c.l.b16 %v1059
    %v1663 = vunpack.c.h.b16 %v1059
    %v1664 = vunpack.c.l.b16 %v1060
    %v1665 = vunpack.c.h.b16 %v1060
    %v1666 = vunpack.c.l.b16 %v1061
    %v1667 = vunpack.c.h.b16 %v1061
    %v1668 = vunpack.c.l.b16 %v1062
    %v1669 = vunpack.c.h.b16 %v1062
    %v1670 = vunpack.c.l.b16 %v1063
    %v1671 = vunpack.c.h.b16 %v1063
    %v1672 = vunpack.c.l.b16 %v1064
    %v1673 = vunpack.c.h.b16 %v1064
    %v1674 = vunpack.c.l.b16 %v1065
    %v1675 = vunpack.c.h.b16 %v1065
    %v1676 = vunpack.c.l.b16 %v1066
    %v1677 = vunpack.c.h.b16 %v1066
    %v1678 = vunpack.c.l.b16 %v1067
    %v1679 = vunpack.c.h.b16 %v1067
    %v1680 = vunpack.c.l.b16 %v1068
    %v1681 = vunpack.c.h.b16 %v1068
    %v1682 = vunpack.c.l.b16 %v1069
    %v1683 = vunpack.c.h.b16 %v1069
    %v1684 = vunpack.c.l.b16 %v1070
    %v1685 = vunpack.c.h.b16 %v1070
    %v1686 = vunpack.c.l.b16 %v1071
    %v1687 = vunpack.c.h.b16 %v1071
    %v1688 = vunpack.c.l.b16 %v1072
    %v1689 = vunpack.c.h.b16 %v1072
    %v1690 = vunpack.c.l.b16 %v1073
    %v1691 = vunpack.c.h.b16 %v1073
    %v1692 = vunpack.c.l.b16 %v1074
    %v1693 = vunpack.c.h.b16 %v1074
    %v1694 = vunpack.c.l.b16 %v1075
    %v1695 = vunpack.c.h.b16 %v1075
    %v1696 = vunpack.c.l.b16 %v1076
    %v1697 = vunpack.c.h.b16 %v1076
    %v1698 = vunpack.c.l.b16 %v1077
    %v1699 = vunpack.c.h.b16 %v1077
    %v1700 = vunpack.c.l.b16 %v1078
    %v1701 = vunpack.c.h.b16 %v1078
    %v1702 = vunpack.c.l.b16 %v1079
    %v1703 = vunpack.c.h.b16 %v1079
    %v1704 = vunpack.c.l.b16 %v1080
    %v1705 = vunpack.c.h.b16 %v1080
    %v1706 = vunpack.c.l.b16 %v1081
    %v1707 = vunpack.c.h.b16 %v1081
    %v1708 = vunpack.c.l.b16 %v1082
    %v1709 = vunpack.c.h.b16 %v1082
    %v1710 = vunpack.c.l.b16 %v1083
    %v1711 = vunpack.c.h.b16 %v1083
    %v1712 = vunpack.c.l.b16 %v1084
    %v1713 = vunpack.c.h.b16 %v1084
    %v1714 = vunpack.c.l.b16 %v1085
    %v1715 = vunpack.c.h.b16 %v1085
    %v1716 = vunpack.c.l.b16 %v1086
    %v1717 = vunpack.c.h.b16 %v1086
    %v1718 = vunpack.c.l.b16 %v1087
    %v1719 = vunpack.c.h.b16 %v1087
    %v1720 = vunpack.c.l.b16 %v1088
    %v1721 = vunpack.c.h.b16 %v1088
    %v1722 = vunpack.c.l.b16 %v1089
    %v1723 = vunpack.c.h.b16 %v1089
    %v1724 = vunpack.c.l.b16 %v1090
    %v1725 = vunpack.c.h.b16 %v1090
    %v1726 = vunpack.c.l.b16 %v1091
    %v1727 = vunpack.c.h.b16 %v1091
    %v1728 = vunpack.c.l.b16 %v1092
    %v1729 = vunpack.c.h.b16 %v1092
    %v1730 = vunpack.c.l.b16 %v1093
    %v1731 = vunpack.c.h.b16 %v1093
    %v1732 = vunpack.c.l.b16 %v1094
    %v1733 = vunpack.c.h.b16 %v1094
    %v1734 = vunpack.c.l.b16 %v1095
    %v1735 = vunpack.c.h.b16 %v1095
    %v1736 = vunpack.c.l.b16 %v1096
    %v1737 = vunpack.c.h.b16 %v1096
    %v1738 = vunpack.c.l.b16 %v1097
    %v1739 = vunpack.c.h.b16 %v1097
    %v1740 = vunpack.c.l.b16 %v1098
    %v1741 = vunpack.c.h.b16 %v1098
    %v1742 = vunpack.c.l.b16 %v1099
    %v1743 = vunpack.c.h.b16 %v1099
    %v1744 = vunpack.c.l.b16 %v1100
    %v1745 = vunpack.c.h.b16 %v1100
    %v1746 = vunpack.c.l.b16 %v1101
    %v1747 = vunpack.c.h.b16 %v1101
    %v1748 = vunpack.c.l.b16 %v1102
    %v1749 = vunpack.c.h.b16 %v1102
    %v1750 = vunpack.c.l.b16 %v1103
    %v1751 = vunpack.c.h.b16 %v1103
    %v1752 = vunpack.c.l.b16 %v1104
    %v1753 = vunpack.c.h.b16 %v1104
    %v1754 = vunpack.c.l.b16 %v1105
    %v1755 = vunpack.c.h.b16 %v1105
    %v1756 = vunpack.c.l.b16 %v1106
    %v1757 = vunpack.c.h.b16 %v1106
    %v1758 = vunpack.c.l.b16 %v1107
    %v1759 = vunpack.c.h.b16 %v1107
    %v1760 = vunpack.c.l.b16 %v1108
    %v1761 = vunpack.c.h.b16 %v1108
    %v1762 = vunpack.c.l.b16 %v1109
    %v1763 = vunpack.c.h.b16 %v1109
    %v1764 = vunpack.c.l.b16 %v1110
    %v1765 = vunpack.c.h.b16 %v1110
    %v1766 = vunpack.c.l.b16 %v1111
    %v1767 = vunpack.c.h.b16 %v1111
    %v1768 = vunpack.c.l.b16 %v1112
    %v1769 = vunpack.c.h.b16 %v1112
    %v1770 = vunpack.c.l.b16 %v1113
    %v1771 = vunpack.c.h.b16 %v1113
    %v1772 = vunpack.c.l.b16 %v1114
    %v1773 = vunpack.c.h.b16 %v1114
    %v1774 = vunpack.c.l.b16 %v1115
    %v1775 = vunpack.c.h.b16 %v1115
    %v1776 = vunpack.c.l.b16 %v1116
    %v1777 = vunpack.c.h.b16 %v1116
    %v1778 = vunpack.c.l.b16 %v1117
    %v1779 = vunpack.c.h.b16 %v1117
    %v1780 = vunpack.c.l.b16 %v1118
    %v1781 = vunpack.c.h.b16 %v1118
    %v1782 = vunpack.c.l.b16 %v1119
    %v1783 = vunpack.c.h.b16 %v1119
    %v1784 = vunpack.c.l.b16 %v1120
    %v1785 = vunpack.c.h.b16 %v1120
    %v1786 = vunpack.c.l.b16 %v1121
    %v1787 = vunpack.c.h.b16 %v1121
    %v1788 = vunpack.c.l.b16 %v1122
    %v1789 = vunpack.c.h.b16 %v1122
    %v1790 = vunpack.c.l.b16 %v1123
    %v1791 = vunpack.c.h.b16 %v1123
    %v1792 = vunpack.c.l.b16 %v1124
    %v1793 = vunpack.c.h.b16 %v1124
    %v1794 = vunpack.c.l.b16 %v1125
    %v1795 = vunpack.c.h.b16 %v1125
    %v1796 = vunpack.c.l.b16 %v1126
    %v1797 = vunpack.c.h.b16 %v1126
    %v1798 = vunpack.c.l.b16 %v1127
    %v1799 = vunpack.c.h.b16 %v1127
    %v1800 = vunpack.c.l.b16 %v1128
    %v1801 = vunpack.c.h.b16 %v1128
    %v1802 = vunpack.c.l.b16 %v1129
    %v1803 = vunpack.c.h.b16 %v1129
    %v1804 = vunpack.c.l.b16 %v1130
    %v1805 = vunpack.c.h.b16 %v1130
    %v1806 = vunpack.c.l.b16 %v1131
    %v1807 = vunpack.c.h.b16 %v1131
    %v1808 = vunpack.c.l.b16 %v1132
    %v1809 = vunpack.c.h.b16 %v1132
    %v1810 = vunpack.c.l.b16 %v1133
    %v1811 = vunpack.c.h.b16 %v1133
    %v1812 = vunpack.c.l.b16 %v1134
    %v1813 = vunpack.c.h.b16 %v1134
    %v1814 = vunpack.c.l.b16 %v1135
    %v1815 = vunpack.c.h.b16 %v1135
    %v1816 = vunpack.c.l.b16 %v1136
    %v1817 = vunpack.c.h.b16 %v1136
    %v1818 = vunpack.c.l.b16 %v1137
    %v1819 = vunpack.c.h.b16 %v1137
    %v1820 = vunpack.c.l.b16 %v1138
    %v1821 = vunpack.c.h.b16 %v1138
    %v1822 = vunpack.c.l.b16 %v1139
    %v1823 = vunpack.c.h.b16 %v1139
    %v1824 = vunpack.c.l.b16 %v1140
    %v1825 = vunpack.c.h.b16 %v1140
    %v1826 = vunpack.c.l.b16 %v1141
    %v1827 = vunpack.c.h.b16 %v1141
    %v1828 = vunpack.c.l.b16 %v1142
    %v1829 = vunpack.c.h.b16 %v1142
    %v1830 = vunpack.c.l.b16 %v1143
    %v1831 = vunpack.c.h.b16 %v1143
    %v1832 = vunpack.c.l.b16 %v1144
    %v1833 = vunpack.c.h.b16 %v1144
    %v1834 = vunpack.c.l.b16 %v1145
    %v1835 = vunpack.c.h.b16 %v1145
    %v1836 = vunpack.c.l.b16 %v1146
    %v1837 = vunpack.c.h.b16 %v1146
    %v1838 = vunpack.c.l.b16 %v1147
    %v1839 = vunpack.c.h.b16 %v1147
    %v1840 = vunpack.c.l.b16 %v1148
    %v1841 = vunpack.c.h.b16 %v1148
    %v1842 = vunpack.c.l.b16 %v1149
    %v1843 = vunpack.c.h.b16 %v1149
    %v1844 = vunpack.c.l.b16 %v1150
    %v1845 = vunpack.c.h.b16 %v1150
    %v1846 = vunpack.c.l.b16 %v1151
    %v1847 = vunpack.c.h.b16 %v1151
    %v1848 = vunpack.c.l.b16 %v1152
    %v1849 = vunpack.c.h.b16 %v1152
    %v1850 = vunpack.c.l.b16 %v1153
    %v1851 = vunpack.c.h.b16 %v1153
    %v1852 = vunpack.c.l.b16 %v1154
    %v1853 = vunpack.c.h.b16 %v1154
    %v1854 = vunpack.c.l.b16 %v1155
    %v1855 = vunpack.c.h.b16 %v1155
    %v1856 = vunpack.c.l.b16 %v1156
    %v1857 = vunpack.c.h.b16 %v1156
    %v1858 = vunpack.c.l.b16 %v1157
    %v1859 = vunpack.c.h.b16 %v1157
    %v1860 = vunpack.c.l.b16 %v1158
    %v1861 = vunpack.c.h.b16 %v1158
    %v1862 = vunpack.c.l.b16 %v1159
    %v1863 = vunpack.c.h.b16 %v1159
    %v1864 = vunpack.c.l.b16 %v1160
    %v1865 = vunpack.c.h.b16 %v1160
    %v1866 = vunpack.c.l.b16 %v1161
    %v1867 = vunpack.c.h.b16 %v1161
    %v1868 = vunpack.c.l.b16 %v1162
    %v1869 = vunpack.c.h.b16 %v1162
    %v1870 = vunpack.c.l.b16 %v1163
    %v1871 = vunpack.c.h.b16 %v1163
    %v1872 = vunpack.c.l.b16 %v1164
    %v1873 = vunpack.c.h.b16 %v1164
    %v1874 = vunpack.c.l.b16 %v1165
    %v1875 = vunpack.c.h.b16 %v1165
    %v1876 = vunpack.c.l.b16 %v1166
    %v1877 = vunpack.c.h.b16 %v1166
    %v1878 = vunpack.c.l.b16 %v1167
    %v1879 = vunpack.c.h.b16 %v1167
    %v1880 = vunpack.c.l.b16 %v1168
    %v1881 = vunpack.c.h.b16 %v1168
    %v1882 = vunpack.c.l.b16 %v1169
    %v1883 = vunpack.c.h.b16 %v1169
    %v1884 = vunpack.c.l.b16 %v1170
    %v1885 = vunpack.c.h.b16 %v1170
    %v1886 = vunpack.c.l.b16 %v1171
    %v1887 = vunpack.c.h.b16 %v1171
    %v1888 = vunpack.c.l.b16 %v1172
    %v1889 = vunpack.c.h.b16 %v1172
    %v1890 = vunpack.c.l.b16 %v1173
    %v1891 = vunpack.c.h.b16 %v1173
    %v1892 = vunpack.c.l.b16 %v1174
    %v1893 = vunpack.c.h.b16 %v1174
    %v1894 = vunpack.c.l.b16 %v1175
    %v1895 = vunpack.c.h.b16 %v1175
    %v1896 = vunpack.c.l.b16 %v1176
    %v1897 = vunpack.c.h.b16 %v1176
    %v1898 = vunpack.c.l.b16 %v1177
    %v1899 = vunpack.c.h.b16 %v1177
    %v1900 = vunpack.c.l.b16 %v1178
    %v1901 = vunpack.c.h.b16 %v1178
    %v1902 = vunpack.c.l.b16 %v1179
    %v1903 = vunpack.c.h.b16 %v1179
    %v1904 = vunpack.c.l.b16 %v1180
    %v1905 = vunpack.c.h.b16 %v1180
    %v1906 = vunpack.c.l.b16 %v1181
    %v1907 = vunpack.c.h.b16 %v1181
    %v1908 = vunpack.c.l.b16 %v1182
    %v1909 = vunpack.c.h.b16 %v1182
    %v1910 = vunpack.c.l.b16 %v1183
    %v1911 = vunpack.c.h.b16 %v1183
    %v1912 = vunpack.c.l.b16 %v1184
    %v1913 = vunpack.c.h.b16 %v1184
    %v1914 = vunpack.c.l.b16 %v1185
    %v1915 = vunpack.c.h.b16 %v1185
    %v1916 = vunpack.c.l.b16 %v1186
    %v1917 = vunpack.c.h.b16 %v1186
    %v1918 = vunpack.c.l.b16 %v1187
    %v1919 = vunpack.c.h.b16 %v1187
    %v1920 = vunpack.c.l.b16 %v1188
    %v1921 = vunpack.c.h.b16 %v1188
    %v1922 = vunpack.c.l.b16 %v1189
    %v1923 = vunpack.c.h.b16 %v1189
    %v1924 = vunpack.c.l.b16 %v1190
    %v1925 = vunpack.c.h.b16 %v1190
    %v1926 = vunpack.c.l.b16 %v1191
    %v1927 = vunpack.c.h.b16 %v1191
    %v1928 = vunpack.c.l.b16 %v1192
    %v1929 = vunpack.c.h.b16 %v1192
    %v1930 = vunpack.c.l.b16 %v1193
    %v1931 = vunpack.c.h.b16 %v1193
    %v1932 = vunpack.c.l.b16 %v1194
    %v1933 = vunpack.c.h.b16 %v1194
    %v1934 = vunpack.c.l.b16 %v1195
    %v1935 = vunpack.c.h.b16 %v1195
    %v1936 = vunpack.c.l.b16 %v1196
    %v1937 = vunpack.c.h.b16 %v1196
    %v1938 = vunpack.c.l.b16 %v1197
    %v1939 = vunpack.c.h.b16 %v1197
    %v1940 = vunpack.c.l.b16 %v1198
    %v1941 = vunpack.c.h.b16 %v1198
    %v1942 = vunpack.c.l.b16 %v1199
    %v1943 = vunpack.c.h.b16 %v1199
    %v1944 = vunpack.c.l.b16 %v1200
    %v1945 = vunpack.c.h.b16 %v1200
    %v1946 = vunpack.c.l.b16 %v1201
    %v1947 = vunpack.c.h.b16 %v1201
    %v1948 = vunpack.c.l.b16 %v1202
    %v1949 = vunpack.c.h.b16 %v1202
    %v1950 = vunpack.c.l.b16 %v1203
    %v1951 = vunpack.c.h.b16 %v1203
    %v1952 = vunpack.c.l.b16 %v1204
    %v1953 = vunpack.c.h.b16 %v1204
    %v1954 = vunpack.c.l.b16 %v1205
    %v1955 = vunpack.c.h.b16 %v1205
    %v1956 = vunpack.c.l.b16 %v1206
    %v1957 = vunpack.c.h.b16 %v1206
    %v1958 = vunpack.c.l.b16 %v1207
    %v1959 = vunpack.c.h.b16 %v1207
    %v1960 = vunpack.c.l.b16 %v1208
    %v1961 = vunpack.c.h.b16 %v1208
    %v1962 = vunpack.c.l.b16 %v1209
    %v1963 = vunpack.c.h.b16 %v1209
    %v1964 = vunpack.c.l.b16 %v1210
    %v1965 = vunpack.c.h.b16 %v1210
    %v1966 = vunpack.c.l.b16 %v1211
    %v1967 = vunpack.c.h.b16 %v1211
    %v1968 = vunpack.c.l.b16 %v1212
    %v1969 = vunpack.c.h.b16 %v1212
    %v1970 = vunpack.c.l.b16 %v1213
    %v1971 = vunpack.c.h.b16 %v1213
    %v1972 = vunpack.c.l.b16 %v1214
    %v1973 = vunpack.c.h.b16 %v1214
    %v1974 = vunpack.c.l.b16 %v1215
    %v1975 = vunpack.c.h.b16 %v1215
    %v1976 = vunpack.c.l.b16 %v1216
    %v1977 = vunpack.c.h.b16 %v1216
    %v1978 = vunpack.c.l.b16 %v1217
    %v1979 = vunpack.c.h.b16 %v1217
    %v1980 = vunpack.c.l.b16 %v1218
    %v1981 = vunpack.c.h.b16 %v1218
    %v1982 = vunpack.c.l.b16 %v1219
    %v1983 = vunpack.c.h.b16 %v1219
    %v1984 = vunpack.c.l.b16 %v1220
    %v1985 = vunpack.c.h.b16 %v1220
    %v1986 = vunpack.c.l.b16 %v1221
    %v1987 = vunpack.c.h.b16 %v1221
    %v1988 = vunpack.c.l.b16 %v1222
    %v1989 = vunpack.c.h.b16 %v1222
    %v1990 = vunpack.c.l.b16 %v1223
    %v1991 = vunpack.c.h.b16 %v1223
    %v1992 = vunpack.c.l.b16 %v1224
    %v1993 = vunpack.c.h.b16 %v1224
    %v1994 = vunpack.c.l.b16 %v1225
    %v1995 = vunpack.c.h.b16 %v1225
    %v1996 = vunpack.c.l.b16 %v1226
    %v1997 = vunpack.c.h.b16 %v1226
    %v1998 = vunpack.c.l.b16 %v1227
    %v1999 = vunpack.c.h.b16 %v1227
    %v2000 = vunpack.c.l.b16 %v1228
    %v2001 = vunpack.c.h.b16 %v1228
    %v2002 = vunpack.c.l.b16 %v1229
    %v2003 = vunpack.c.h.b16 %v1229
    %v2004 = vunpack.c.l.b16 %v1230
    %v2005 = vunpack.c.h.b16 %v1230
    %v2006 = vunpack.c.l.b16 %v1231
    %v2007 = vunpack.c.h.b16 %v1231
    %v2008 = vunpack.c.l.b16 %v1232
    %v2009 = vunpack.c.h.b16 %v1232
    %v2010 = vunpack.c.l.b16 %v1233
    %v2011 = vunpack.c.h.b16 %v1233
    %v2012 = vunpack.c.l.b16 %v1234
    %v2013 = vunpack.c.h.b16 %v1234
    %v2014 = vunpack.c.l.b16 %v1235
    %v2015 = vunpack.c.h.b16 %v1235
    %v2016 = vunpack.c.l.b16 %v1236
    %v2017 = vunpack.c.h.b16 %v1236
    %v2018 = vunpack.c.l.b16 %v1237
    %v2019 = vunpack.c.h.b16 %v1237
    %v2020 = vunpack.c.l.b16 %v1238
    %v2021 = vunpack.c.h.b16 %v1238
    %v2022 = vunpack.c.l.b16 %v1239
    %v2023 = vunpack.c.h.b16 %v1239
    %v2024 = vunpack.c.l.b16 %v1240
    %v2025 = vunpack.c.h.b16 %v1240
    %v2026 = vunpack.c.l.b16 %v1241
    %v2027 = vunpack.c.h.b16 %v1241
    %v2028 = vunpack.c.l.b16 %v1242
    %v2029 = vunpack.c.h.b16 %v1242
    %v2030 = vunpack.c.l.b16 %v1243
    %v2031 = vunpack.c.h.b16 %v1243
    %v2032 = vunpack.c.l.b16 %v1244
    %v2033 = vunpack.c.h.b16 %v1244
    %v2034 = vunpack.c.l.b16 %v1245
    %v2035 = vunpack.c.h.b16 %v1245
    %v2036 = vpack.c.b16 %v1532, %v1524
    %v2037 = vpack.c.b16 %v1533, %v1525
    %v2038 = vpack.c.b16 %v1534, %v1526
    %v2039 = vpack.c.b16 %v1535, %v1527
    %v2040 = vpack.c.b16 %v1536, %v1528
    %v2041 = vpack.c.b16 %v1537, %v1529
    %v2042 = vpack.c.b16 %v1538, %v1530
    %v2043 = vpack.c.b16 %v1539, %v1531
    %v2044 = vpack.c.b16 %v1548, %v1540
    %v2045 = vpack.c.b16 %v1549, %v1541
    %v2046 = vpack.c.b16 %v1550, %v1542
    %v2047 = vpack.c.b16 %v1551, %v1543
    %v2048 = vpack.c.b16 %v1552, %v1544
    %v2049 = vpack.c.b16 %v1553, %v1545
    %v2050 = vpack.c.b16 %v1554, %v1546
    %v2051 = vpack.c.b16 %v1555, %v1547
    %v2052 = vpack.c.b16 %v1564, %v1556
    %v2053 = vpack.c.b16 %v1565, %v1557
    %v2054 = vpack.c.b16 %v1566, %v1558
    %v2055 = vpack.c.b16 %v1567, %v1559
    %v2056 = vpack.c.b16 %v1568, %v1560
    %v2057 = vpack.c.b16 %v1569, %v1561
    %v2058 = vpack.c.b16 %v1570, %v1562
    %v2059 = vpack.c.b16 %v1571, %v1563
    %v2060 = vpack.c.b16 %v1580, %v1572
    %v2061 = vpack.c.b16 %v1581, %v1573
    %v2062 = vpack.c.b16 %v1582, %v1574
    %v2063 = vpack.c.b16 %v1583, %v1575
    %v2064 = vpack.c.b16 %v1584, %v1576
    %v2065 = vpack.c.b16 %v1585, %v1577
    %v2066 = vpack.c.b16 %v1586, %v1578
    %v2067 = vpack.c.b16 %v1587, %v1579
    %v2068 = vpack.c.b16 %v1596, %v1588
    %v2069 = vpack.c.b16 %v1597, %v1589
    %v2070 = vpack.c.b16 %v1598, %v1590
    %v2071 = vpack.c.b16 %v1599, %v1591
    %v2072 = vpack.c.b16 %v1600, %v1592
    %v2073 = vpack.c.b16 %v1601, %v1593
    %v2074 = vpack.c.b16 %v1602, %v1594
    %v2075 = vpack.c.b16 %v1603, %v1595
    %v2076 = vpack.c.b16 %v1612, %v1604
    %v2077 = vpack.c.b16 %v1613, %v1605
    %v2078 = vpack.c.b16 %v1614, %v1606
    %v2079 = vpack.c.b16 %v1615, %v1607
    %v2080 = vpack.c.b16 %v1616, %v1608
    %v2081 = vpack.c.b16 %v1617, %v1609
    %v2082 = vpack.c.b16 %v1618, %v1610
    %v2083 = vpack.c.b16 %v1619, %v1611
    %v2084 = vpack.c.b16 %v1628, %v1620
    %v2085 = vpack.c.b16 %v1629, %v1621
    %v2086 = vpack.c.b16 %v1630, %v1622
    %v2087 = vpack.c.b16 %v1631, %v1623
    %v2088 = vpack.c.b16 %v1632, %v1624
    %v2089 = vpack.c.b16 %v1633, %v1625
    %v2090 = vpack.c.b16 %v1634, %v1626
    %v2091 = vpack.c.b16 %v1635, %v1627
    %v2092 = vpack.c.b16 %v1644, %v1636
    %v2093 = vpack.c.b16 %v1645, %v1637
    %v2094 = vpack.c.b16 %v1646, %v1638
    %v2095 = vpack.c.b16 %v1647, %v1639
    %v2096 = vpack.c.b16 %v1648, %v1640
    %v2097 = vpack.c.b16 %v1649, %v1641
    %v2098 = vpack.c.b16 %v1650, %v1642
    %v2099 = vpack.c.b16 %v1651, %v1643
    %v2100 = vpack.c.b16 %v1660, %v1652
    %v2101 = vpack.c.b16 %v1661, %v1653
    %v2102 = vpack.c.b16 %v1662, %v1654
    %v2103 = vpack.c.b16 %v1663, %v1655
    %v2104 = vpack.c.b16 %v1664, %v1656
    %v2105 = vpack.c.b16 %v1665, %v1657
    %v2106 = vpack.c.b16 %v1666, %v1658
    %v2107 = vpack.c.b16 %v1667, %v1659
    %v2108 = vpack.c.b16 %v1676, %v1668
    %v2109 = vpack.c.b16 %v1677, %v1669
    %v2110 = vpack.c.b16 %v1678, %v1670
    %v2111 = vpack.c.b16 %v1679, %v1671
    %v2112 = vpack.c.b16 %v1680, %v1672
    %v2113 = vpack.c.b16 %v1681, %v1673
    %v2114 = vpack.c.b16 %v1682, %v1674
    %v2115 = vpack.c.b16 %v1683, %v1675
    %v2116 = vpack.c.b16 %v1692, %v1684
    %v2117 = vpack.c.b16 %v1693, %v1685
    %v2118 = vpack.c.b16 %v1694, %v1686
    %v2119 = vpack.c.b16 %v1695, %v1687
    %v2120 = vpack.c.b16 %v1696, %v1688
    %v2121 = vpack.c.b16 %v1697, %v1689
    %v2122 = vpack.c.b16 %v1698, %v1690
    %v2123 = vpack.c.b16 %v1699, %v1691
    %v2124 = vpack.c.b16 %v1708, %v1700
    %v2125 = vpack.c.b16 %v1709, %v1701
    %v2126 = vpack.c.b16 %v1710, %v1702
    %v2127 = vpack.c.b16 %v1711, %v1703
    %v2128 = vpack.c.b16 %v1712, %v1704
    %v2129 = vpack.c.b16 %v1713, %v1705
    %v2130 = vpack.c.b16 %v1714, %v1706
    %v2131 = vpack.c.b16 %v1715, %v1707
    %v2132 = vpack.c.b16 %v1724, %v1716
    %v2133 = vpack.c.b16 %v1725, %v1717
    %v2134 = vpack.c.b16 %v1726, %v1718
    %v2135 = vpack.c.b16 %v1727, %v1719
    %v2136 = vpack.c.b16 %v1728, %v1720
    %v2137 = vpack.c.b16 %v1729, %v1721
    %v2138 = vpack.c.b16 %v1730, %v1722
    %v2139 = vpack.c.b16 %v1731, %v1723
    %v2140 = vpack.c.b16 %v1740, %v1732
    %v2141 = vpack.c.b16 %v1741, %v1733
    %v2142 = vpack.c.b16 %v1742, %v1734
    %v2143 = vpack.c.b16 %v1743, %v1735
    %v2144 = vpack.c.b16 %v1744, %v1736
    %v2145 = vpack.c.b16 %v1745, %v1737
    %v2146 = vpack.c.b16 %v1746, %v1738
    %v2147 = vpack.c.b16 %v1747, %v1739
    %v2148 = vpack.c.b16 %v1756, %v1748
    %v2149 = vpack.c.b16 %v1757, %v1749
    %v2150 = vpack.c.b16 %v1758, %v1750
    %v2151 = vpack.c.b16 %v1759, %v1751
    %v2152 = vpack.c.b16 %v1760, %v1752
    %v2153 = vpack.c.b16 %v1761, %v1753
    %v2154 = vpack.c.b16 %v1762, %v1754
    %v2155 = vpack.c.b16 %v1763, %v1755
    %v2156 = vpack.c.b16 %v1772, %v1764
    %v2157 = vpack.c.b16 %v1773, %v1765
    %v2158 = vpack.c.b16 %v1774, %v1766
    %v2159 = vpack.c.b16 %v1775, %v1767
    %v2160 = vpack.c.b16 %v1776, %v1768
    %v2161 = vpack.c.b16 %v1777, %v1769
    %v2162 = vpack.c.b16 %v1778, %v1770
    %v2163 = vpack.c.b16 %v1779, %v1771
    %v2164 = vpack.c.b16 %v1788, %v1780
    %v2165 = vpack.c.b16 %v1789, %v1781
    %v2166 = vpack.c.b16 %v1790, %v1782
    %v2167 = vpack.c.b16 %v1791, %v1783
    %v2168 = vpack.c.b16 %v1792, %v1784
    %v2169 = vpack.c.b16 %v1793, %v1785
    %v2170 = vpack.c.b16 %v1794, %v1786
    %v2171 = vpack.c.b16 %v1795, %v1787
    %v2172 = vpack.c.b16 %v1804, %v1796
    %v2173 = vpack.c.b16 %v1805, %v1797
    %v2174 = vpack.c.b16 %v1806, %v1798
    %v2175 = vpack.c.b16 %v1807, %v1799
    %v2176 = vpack.c.b16 %v1808, %v1800
    %v2177 = vpack.c.b16 %v1809, %v1801
    %v2178 = vpack.c.b16 %v1810, %v1802
    %v2179 = vpack.c.b16 %v1811, %v1803
    %v2180 = vpack.c.b16 %v1820, %v1812
    %v2181 = vpack.c.b16 %v1821, %v1813
    %v2182 = vpack.c.b16 %v1822, %v1814
    %v2183 = vpack.c.b16 %v1823, %v1815
    %v2184 = vpack.c.b16 %v1824, %v1816
    %v2185 = vpack.c.b16 %v1825, %v1817
    %v2186 = vpack.c.b16 %v1826, %v1818
    %v2187 = vpack.c.b16 %v1827, %v1819
    %v2188 = vpack.c.b16 %v1836, %v1828
    %v2189 = vpack.c.b16 %v1837, %v1829
    %v2190 = vpack.c.b16 %v1838, %v1830
    %v2191 = vpack.c.b16 %v1839, %v1831
    %v2192 = vpack.c.b16 %v1840, %v1832
    %v2193 = vpack.c.b16 %v1841, %v1833
    %v2194 = vpack.c.b16 %v1842, %v1834
    %v2195 = vpack.c.b16 %v1843, %v1835
    %v2196 = vpack.c.b16 %v1852, %v1844
    %v2197 = vpack.c.b16 %v1853, %v1845
    %v2198 = vpack.c.b16 %v1854, %v1846
    %v2199 = vpack.c.b16 %v1855, %v1847
    %v2200 = vpack.c.b16 %v1856, %v1848
    %v2201 = vpack.c.b16 %v1857, %v1849
    %v2202 = vpack.c.b16 %v1858, %v1850
    %v2203 = vpack.c.b16 %v1859, %v1851
    %v2204 = vpack.c.b16 %v1868, %v1860
    %v2205 = vpack.c.b16 %v1869, %v1861
    %v2206 = vpack.c.b16 %v1870, %v1862
    %v2207 = vpack.c.b16 %v1871, %v1863
    %v2208 = vpack.c.b16 %v1872, %v1864
    %v2209 = vpack.c.b16 %v1873, %v1865
    %v2210 = vpack.c.b16 %v1874, %v1866
    %v2211 = vpack.c.b16 %v1875, %v1867
    %v2212 = vpack.c.b16 %v1884, %v1876
    %v2213 = vpack.c.b16 %v1885, %v1877
    %v2214 = vpack.c.b16 %v1886, %v1878
    %v2215 = vpack.c.b16 %v1887, %v1879
    %v2216 = vpack.c.b16 %v1888, %v1880
    %v2217 = vpack.c.b16 %v1889, %v1881
    %v2218 = vpack.c.b16 %v1890, %v1882
    %v2219 = vpack.c.b16 %v1891, %v1883
    %v2220 = vpack.c.b16 %v1900, %v1892
    %v2221 = vpack.c.b16 %v1901, %v1893
    %v2222 = vpack.c.b16 %v1902, %v1894
    %v2223 = vpack.c.b16 %v1903, %v1895
    %v2224 = vpack.c.b16 %v1904, %v1896
    %v2225 = vpack.c.b16 %v1905, %v1897
    %v2226 = vpack.c.b16 %v1906, %v1898
    %v2227 = vpack.c.b16 %v1907, %v1899
    %v2228 = vpack.c.b16 %v1916, %v1908
    %v2229 = vpack.c.b16 %v1917, %v1909
    %v2230 = vpack.c.b16 %v1918, %v1910
    %v2231 = vpack.c.b16 %v1919, %v1911
    %v2232 = vpack.c.b16 %v1920, %v1912
    %v2233 = vpack.c.b16 %v1921, %v1913
    %v2234 = vpack.c.b16 %v1922, %v1914
    %v2235 = vpack.c.b16 %v1923, %v1915
    %v2236 = vpack.c.b16 %v1932, %v1924
    %v2237 = vpack.c.b16 %v1933, %v1925
    %v2238 = vpack.c.b16 %v1934, %v1926
    %v2239 = vpack.c.b16 %v1935, %v1927
    %v2240 = vpack.c.b16 %v1936, %v1928
    %v2241 = vpack.c.b16 %v1937, %v1929
    %v2242 = vpack.c.b16 %v1938, %v1930
    %v2243 = vpack.c.b16 %v1939, %v1931
    %v2244 = vpack.c.b16 %v1948, %v1940
    %v2245 = vpack.c.b16 %v1949, %v1941
    %v2246 = vpack.c.b16 %v1950, %v1942
    %v2247 = vpack.c.b16 %v1951, %v1943
    %v2248 = vpack.c.b16 %v1952, %v1944
    %v2249 = vpack.c.b16 %v1953, %v1945
    %v2250 = vpack.c.b16 %v1954, %v1946
    %v2251 = vpack.c.b16 %v1955, %v1947
    %v2252 = vpack.c.b16 %v1964, %v1956
    %v2253 = vpack.c.b16 %v1965, %v1957
    %v2254 = vpack.c.b16 %v1966, %v1958
    %v2255 = vpack.c.b16 %v1967, %v1959
    %v2256 = vpack.c.b16 %v1968, %v1960
    %v2257 = vpack.c.b16 %v1969, %v1961
    %v2258 = vpack.c.b16 %v1970, %v1962
    %v2259 = vpack.c.b16 %v1971, %v1963
    %v2260 = vpack.c.b16 %v1980, %v1972
    %v2261 = vpack.c.b16 %v1981, %v1973
    %v2262 = vpack.c.b16 %v1982, %v1974
    %v2263 = vpack.c.b16 %v1983, %v1975
    %v2264 = vpack.c.b16 %v1984, %v1976
    %v2265 = vpack.c.b16 %v1985, %v1977
    %v2266 = vpack.c.b16 %v1986, %v1978
    %v2267 = vpack.c.b16 %v1987, %v1979
    %v2268 = vpack.c.b16 %v1996, %v1988
    %v2269 = vpack.c.b16 %v1997, %v1989
    %v2270 = vpack.c.b16 %v1998, %v1990
    %v2271 = vpack.c.b16 %v1999, %v1991
    %v2272 = vpack.c.b16 %v2000, %v1992
    %v2273 = vpack.c.b16 %v2001, %v1993
    %v2274 = vpack.c.b16 %v2002, %v1994
    %v2275 = vpack.c.b16 %v2003, %v1995
    %v2276 = vpack.c.b16 %v2012, %v2004
    %v2277 = vpack.c.b16 %v2013, %v2005
    %v2278 = vpack.c.b16 %v2014, %v2006
    %v2279 = vpack.c.b16 %v2015, %v2007
    %v2280 = vpack.c.b16 %v2016, %v2008
    %v2281 = vpack.c.b16 %v2017, %v2009
    %v2282 = vpack.c.b16 %v2018, %v2010
    %v2283 = vpack.c.b16 %v2019, %v2011
    %v2284 = vpack.c.b16 %v2028, %v2020
    %v2285 = vpack.c.b16 %v2029, %v2021
    %v2286 = vpack.c.b16 %v2030, %v2022
    %v2287 = vpack.c.b16 %v2031, %v2023
    %v2288 = vpack.c.b16 %v2032, %v2024
    %v2289 = vpack.c.b16 %v2033, %v2025
    %v2290 = vpack.c.b16 %v2034, %v2026
    %v2291 = vpack.c.b16 %v2035, %v2027
    %2548 = vmatpush.bf16.msra.mxu0 %v2092
    %2549 = vmatpush.bf16.msra.mxu0 %v2084
    %2550 = vmatpush.bf16.msra.mxu0 %v2076
    %2551 = vmatpush.bf16.msra.mxu0 %v2068
    %2552 = vmatpush.bf16.msra.mxu0 %v2060
    %2553 = vmatpush.bf16.msra.mxu0 %v2052
    %2554 = vmatpush.bf16.msra.mxu0 %v2044
    %2555 = vmatpush.bf16.msra.mxu0 %v2036
    %2556 = vmatmul.bf16.gmra.mxu0 %v1246
    %v2557 = vpop.f32.mrf.mxu0
    %v2558 = vadd.f32 %v1252, %v2557
    %v2559 = vpop.f32.mrf.mxu0
    %2560 = vdwg.mxu0
    %2561 = vmatpush.bf16.msra.mxu0 %v2156
    %2562 = vmatpush.bf16.msra.mxu0 %v2148
    %2563 = vmatpush.bf16.msra.mxu0 %v2140
    %2564 = vmatpush.bf16.msra.mxu0 %v2132
    %2565 = vmatpush.bf16.msra.mxu0 %v2124
    %2566 = vmatpush.bf16.msra.mxu0 %v2116
    %2567 = vmatpush.bf16.msra.mxu0 %v2108
    %2568 = vmatpush.bf16.msra.mxu0 %v2100
    %2569 = vmatmul.bf16.gmra.mxu0 %v1247
    %v2570 = vpop.f32.mrf.mxu0
    %v2571 = vadd.f32 %v2558, %v2570
    %v2572 = vpop.f32.mrf.mxu0
    %2573 = vdwg.mxu0
    %2574 = vmatpush.bf16.msra.mxu0 %v2220
    %2575 = vmatpush.bf16.msra.mxu0 %v2212
    %2576 = vmatpush.bf16.msra.mxu0 %v2204
    %2577 = vmatpush.bf16.msra.mxu0 %v2196
    %2578 = vmatpush.bf16.msra.mxu0 %v2188
    %2579 = vmatpush.bf16.msra.mxu0 %v2180
    %2580 = vmatpush.bf16.msra.mxu0 %v2172
    %2581 = vmatpush.bf16.msra.mxu0 %v2164
    %2582 = vmatmul.bf16.gmra.mxu0 %v1248
    %v2583 = vpop.f32.mrf.mxu0
    %v2584 = vadd.f32 %v2571, %v2583
    %v2585 = vpop.f32.mrf.mxu0
    %2586 = vdwg.mxu0
    %2587 = vmatpush.bf16.msra.mxu0 %v2284
    %2588 = vmatpush.bf16.msra.mxu0 %v2276
    %2589 = vmatpush.bf16.msra.mxu0 %v2268
    %2590 = vmatpush.bf16.msra.mxu0 %v2260
    %2591 = vmatpush.bf16.msra.mxu0 %v2252
    %2592 = vmatpush.bf16.msra.mxu0 %v2244
    %2593 = vmatpush.bf16.msra.mxu0 %v2236
    %2594 = vmatpush.bf16.msra.mxu0 %v2228
    %2595 = vmatmul.bf16.gmra.mxu0 %v1249
    %v2596 = vpop.f32.mrf.mxu0
    %v2597 = vadd.f32 %v2584, %v2596
    %v2598 = vpop.f32.mrf.mxu0
    %2599 = vdwg.mxu0
    %2600 = vmatpush.bf16.msra.mxu0 %v2093
    %2601 = vmatpush.bf16.msra.mxu0 %v2085
    %2602 = vmatpush.bf16.msra.mxu0 %v2077
    %2603 = vmatpush.bf16.msra.mxu0 %v2069
    %2604 = vmatpush.bf16.msra.mxu0 %v2061
    %2605 = vmatpush.bf16.msra.mxu0 %v2053
    %2606 = vmatpush.bf16.msra.mxu0 %v2045
    %2607 = vmatpush.bf16.msra.mxu0 %v2037
    %2608 = vmatmul.bf16.gmra.mxu0 %v1246
    %v2609 = vpop.f32.mrf.mxu0
    %v2610 = vadd.f32 %v1253, %v2609
    %v2611 = vpop.f32.mrf.mxu0
    %2612 = vdwg.mxu0
    %2613 = vmatpush.bf16.msra.mxu0 %v2157
    %2614 = vmatpush.bf16.msra.mxu0 %v2149
    %2615 = vmatpush.bf16.msra.mxu0 %v2141
    %2616 = vmatpush.bf16.msra.mxu0 %v2133
    %2617 = vmatpush.bf16.msra.mxu0 %v2125
    %2618 = vmatpush.bf16.msra.mxu0 %v2117
    %2619 = vmatpush.bf16.msra.mxu0 %v2109
    %2620 = vmatpush.bf16.msra.mxu0 %v2101
    %2621 = vmatmul.bf16.gmra.mxu0 %v1247
    %v2622 = vpop.f32.mrf.mxu0
    %v2623 = vadd.f32 %v2610, %v2622
    %v2624 = vpop.f32.mrf.mxu0
    %2625 = vdwg.mxu0
    %2626 = vmatpush.bf16.msra.mxu0 %v2221
    %2627 = vmatpush.bf16.msra.mxu0 %v2213
    %2628 = vmatpush.bf16.msra.mxu0 %v2205
    %2629 = vmatpush.bf16.msra.mxu0 %v2197
    %2630 = vmatpush.bf16.msra.mxu0 %v2189
    %2631 = vmatpush.bf16.msra.mxu0 %v2181
    %2632 = vmatpush.bf16.msra.mxu0 %v2173
    %2633 = vmatpush.bf16.msra.mxu0 %v2165
    %2634 = vmatmul.bf16.gmra.mxu0 %v1248
    %v2635 = vpop.f32.mrf.mxu0
    %v2636 = vadd.f32 %v2623, %v2635
    %v2637 = vpop.f32.mrf.mxu0
    %2638 = vdwg.mxu0
    %2639 = vmatpush.bf16.msra.mxu0 %v2285
    %2640 = vmatpush.bf16.msra.mxu0 %v2277
    %2641 = vmatpush.bf16.msra.mxu0 %v2269
    %2642 = vmatpush.bf16.msra.mxu0 %v2261
    %2643 = vmatpush.bf16.msra.mxu0 %v2253
    %2644 = vmatpush.bf16.msra.mxu0 %v2245
    %2645 = vmatpush.bf16.msra.mxu0 %v2237
    %2646 = vmatpush.bf16.msra.mxu0 %v2229
    %2647 = vmatmul.bf16.gmra.mxu0 %v1249
    %v2648 = vpop.f32.mrf.mxu0
    %v2649 = vadd.f32 %v2636, %v2648
    %v2650 = vpop.f32.mrf.mxu0
    %2651 = vdwg.mxu0
    %2652 = vmatpush.bf16.msra.mxu0 %v2094
    %2653 = vmatpush.bf16.msra.mxu0 %v2086
    %2654 = vmatpush.bf16.msra.mxu0 %v2078
    %2655 = vmatpush.bf16.msra.mxu0 %v2070
    %2656 = vmatpush.bf16.msra.mxu0 %v2062
    %2657 = vmatpush.bf16.msra.mxu0 %v2054
    %2658 = vmatpush.bf16.msra.mxu0 %v2046
    %2659 = vmatpush.bf16.msra.mxu0 %v2038
    %2660 = vmatmul.bf16.gmra.mxu0 %v1246
    %v2661 = vpop.f32.mrf.mxu0
    %v2662 = vadd.f32 %v1254, %v2661
    %v2663 = vpop.f32.mrf.mxu0
    %2664 = vdwg.mxu0
    %2665 = vmatpush.bf16.msra.mxu0 %v2158
    %2666 = vmatpush.bf16.msra.mxu0 %v2150
    %2667 = vmatpush.bf16.msra.mxu0 %v2142
    %2668 = vmatpush.bf16.msra.mxu0 %v2134
    %2669 = vmatpush.bf16.msra.mxu0 %v2126
    %2670 = vmatpush.bf16.msra.mxu0 %v2118
    %2671 = vmatpush.bf16.msra.mxu0 %v2110
    %2672 = vmatpush.bf16.msra.mxu0 %v2102
    %2673 = vmatmul.bf16.gmra.mxu0 %v1247
    %v2674 = vpop.f32.mrf.mxu0
    %v2675 = vadd.f32 %v2662, %v2674
    %v2676 = vpop.f32.mrf.mxu0
    %2677 = vdwg.mxu0
    %2678 = vmatpush.bf16.msra.mxu0 %v2222
    %2679 = vmatpush.bf16.msra.mxu0 %v2214
    %2680 = vmatpush.bf16.msra.mxu0 %v2206
    %2681 = vmatpush.bf16.msra.mxu0 %v2198
    %2682 = vmatpush.bf16.msra.mxu0 %v2190
    %2683 = vmatpush.bf16.msra.mxu0 %v2182
    %2684 = vmatpush.bf16.msra.mxu0 %v2174
    %2685 = vmatpush.bf16.msra.mxu0 %v2166
    %2686 = vmatmul.bf16.gmra.mxu0 %v1248
    %v2687 = vpop.f32.mrf.mxu0
    %v2688 = vadd.f32 %v2675, %v2687
    %v2689 = vpop.f32.mrf.mxu0
    %2690 = vdwg.mxu0
    %2691 = vmatpush.bf16.msra.mxu0 %v2286
    %2692 = vmatpush.bf16.msra.mxu0 %v2278
    %2693 = vmatpush.bf16.msra.mxu0 %v2270
    %2694 = vmatpush.bf16.msra.mxu0 %v2262
    %2695 = vmatpush.bf16.msra.mxu0 %v2254
    %2696 = vmatpush.bf16.msra.mxu0 %v2246
    %2697 = vmatpush.bf16.msra.mxu0 %v2238
    %2698 = vmatpush.bf16.msra.mxu0 %v2230
    %2699 = vmatmul.bf16.gmra.mxu0 %v1249
    %v2700 = vpop.f32.mrf.mxu0
    %v2701 = vadd.f32 %v2688, %v2700
    %v2702 = vpop.f32.mrf.mxu0
    %2703 = vdwg.mxu0
    %2704 = vmatpush.bf16.msra.mxu0 %v2095
    %2705 = vmatpush.bf16.msra.mxu0 %v2087
    %2706 = vmatpush.bf16.msra.mxu0 %v2079
    %2707 = vmatpush.bf16.msra.mxu0 %v2071
    %2708 = vmatpush.bf16.msra.mxu0 %v2063
    %2709 = vmatpush.bf16.msra.mxu0 %v2055
    %2710 = vmatpush.bf16.msra.mxu0 %v2047
    %2711 = vmatpush.bf16.msra.mxu0 %v2039
    %2712 = vmatmul.bf16.gmra.mxu0 %v1246
    %v2713 = vpop.f32.mrf.mxu0
    %v2714 = vadd.f32 %v1255, %v2713
    %v2715 = vpop.f32.mrf.mxu0
    %2716 = vdwg.mxu0
    %2717 = vmatpush.bf16.msra.mxu0 %v2159
    %2718 = vmatpush.bf16.msra.mxu0 %v2151
    %2719 = vmatpush.bf16.msra.mxu0 %v2143
    %2720 = vmatpush.bf16.msra.mxu0 %v2135
    %2721 = vmatpush.bf16.msra.mxu0 %v2127
    %2722 = vmatpush.bf16.msra.mxu0 %v2119
    %2723 = vmatpush.bf16.msra.mxu0 %v2111
    %2724 = vmatpush.bf16.msra.mxu0 %v2103
    %2725 = vmatmul.bf16.gmra.mxu0 %v1247
    %v2726 = vpop.f32.mrf.mxu0
    %v2727 = vadd.f32 %v2714, %v2726
    %v2728 = vpop.f32.mrf.mxu0
    %2729 = vdwg.mxu0
    %2730 = vmatpush.bf16.msra.mxu0 %v2223
    %2731 = vmatpush.bf16.msra.mxu0 %v2215
    %2732 = vmatpush.bf16.msra.mxu0 %v2207
    %2733 = vmatpush.bf16.msra.mxu0 %v2199
    %2734 = vmatpush.bf16.msra.mxu0 %v2191
    %2735 = vmatpush.bf16.msra.mxu0 %v2183
    %2736 = vmatpush.bf16.msra.mxu0 %v2175
    %2737 = vmatpush.bf16.msra.mxu0 %v2167
    %2738 = vmatmul.bf16.gmra.mxu0 %v1248
    %v2739 = vpop.f32.mrf.mxu0
    %v2740 = vadd.f32 %v2727, %v2739
    %v2741 = vpop.f32.mrf.mxu0
    %2742 = vdwg.mxu0
    %2743 = vmatpush.bf16.msra.mxu0 %v2287
    %2744 = vmatpush.bf16.msra.mxu0 %v2279
    %2745 = vmatpush.bf16.msra.mxu0 %v2271
    %2746 = vmatpush.bf16.msra.mxu0 %v2263
    %2747 = vmatpush.bf16.msra.mxu0 %v2255
    %2748 = vmatpush.bf16.msra.mxu0 %v2247
    %2749 = vmatpush.bf16.msra.mxu0 %v2239
    %2750 = vmatpush.bf16.msra.mxu0 %v2231
    %2751 = vmatmul.bf16.gmra.mxu0 %v1249
    %v2752 = vpop.f32.mrf.mxu0
    %v2753 = vadd.f32 %v2740, %v2752
    %v2754 = vpop.f32.mrf.mxu0
    %2755 = vdwg.mxu0
    %2756 = vmatpush.bf16.msra.mxu0 %v2096
    %2757 = vmatpush.bf16.msra.mxu0 %v2088
    %2758 = vmatpush.bf16.msra.mxu0 %v2080
    %2759 = vmatpush.bf16.msra.mxu0 %v2072
    %2760 = vmatpush.bf16.msra.mxu0 %v2064
    %2761 = vmatpush.bf16.msra.mxu0 %v2056
    %2762 = vmatpush.bf16.msra.mxu0 %v2048
    %2763 = vmatpush.bf16.msra.mxu0 %v2040
    %2764 = vmatmul.bf16.gmra.mxu0 %v1246
    %v2765 = vpop.f32.mrf.mxu0
    %v2766 = vadd.f32 %v1256, %v2765
    %v2767 = vpop.f32.mrf.mxu0
    %2768 = vdwg.mxu0
    %2769 = vmatpush.bf16.msra.mxu0 %v2160
    %2770 = vmatpush.bf16.msra.mxu0 %v2152
    %2771 = vmatpush.bf16.msra.mxu0 %v2144
    %2772 = vmatpush.bf16.msra.mxu0 %v2136
    %2773 = vmatpush.bf16.msra.mxu0 %v2128
    %2774 = vmatpush.bf16.msra.mxu0 %v2120
    %2775 = vmatpush.bf16.msra.mxu0 %v2112
    %2776 = vmatpush.bf16.msra.mxu0 %v2104
    %2777 = vmatmul.bf16.gmra.mxu0 %v1247
    %v2778 = vpop.f32.mrf.mxu0
    %v2779 = vadd.f32 %v2766, %v2778
    %v2780 = vpop.f32.mrf.mxu0
    %2781 = vdwg.mxu0
    %2782 = vmatpush.bf16.msra.mxu0 %v2224
    %2783 = vmatpush.bf16.msra.mxu0 %v2216
    %2784 = vmatpush.bf16.msra.mxu0 %v2208
    %2785 = vmatpush.bf16.msra.mxu0 %v2200
    %2786 = vmatpush.bf16.msra.mxu0 %v2192
    %2787 = vmatpush.bf16.msra.mxu0 %v2184
    %2788 = vmatpush.bf16.msra.mxu0 %v2176
    %2789 = vmatpush.bf16.msra.mxu0 %v2168
    %2790 = vmatmul.bf16.gmra.mxu0 %v1248
    %v2791 = vpop.f32.mrf.mxu0
    %v2792 = vadd.f32 %v2779, %v2791
    %v2793 = vpop.f32.mrf.mxu0
    %2794 = vdwg.mxu0
    %2795 = vmatpush.bf16.msra.mxu0 %v2288
    %2796 = vmatpush.bf16.msra.mxu0 %v2280
    %2797 = vmatpush.bf16.msra.mxu0 %v2272
    %2798 = vmatpush.bf16.msra.mxu0 %v2264
    %2799 = vmatpush.bf16.msra.mxu0 %v2256
    %2800 = vmatpush.bf16.msra.mxu0 %v2248
    %2801 = vmatpush.bf16.msra.mxu0 %v2240
    %2802 = vmatpush.bf16.msra.mxu0 %v2232
    %2803 = vmatmul.bf16.gmra.mxu0 %v1249
    %v2804 = vpop.f32.mrf.mxu0
    %v2805 = vadd.f32 %v2792, %v2804
    %v2806 = vpop.f32.mrf.mxu0
    %2807 = vdwg.mxu0
    %2808 = vmatpush.bf16.msra.mxu0 %v2097
    %2809 = vmatpush.bf16.msra.mxu0 %v2089
    %2810 = vmatpush.bf16.msra.mxu0 %v2081
    %2811 = vmatpush.bf16.msra.mxu0 %v2073
    %2812 = vmatpush.bf16.msra.mxu0 %v2065
    %2813 = vmatpush.bf16.msra.mxu0 %v2057
    %2814 = vmatpush.bf16.msra.mxu0 %v2049
    %2815 = vmatpush.bf16.msra.mxu0 %v2041
    %2816 = vmatmul.bf16.gmra.mxu0 %v1246
    %v2817 = vpop.f32.mrf.mxu0
    %v2818 = vadd.f32 %v1257, %v2817
    %v2819 = vpop.f32.mrf.mxu0
    %2820 = vdwg.mxu0
    %2821 = vmatpush.bf16.msra.mxu0 %v2161
    %2822 = vmatpush.bf16.msra.mxu0 %v2153
    %2823 = vmatpush.bf16.msra.mxu0 %v2145
    %2824 = vmatpush.bf16.msra.mxu0 %v2137
    %2825 = vmatpush.bf16.msra.mxu0 %v2129
    %2826 = vmatpush.bf16.msra.mxu0 %v2121
    %2827 = vmatpush.bf16.msra.mxu0 %v2113
    %2828 = vmatpush.bf16.msra.mxu0 %v2105
    %2829 = vmatmul.bf16.gmra.mxu0 %v1247
    %v2830 = vpop.f32.mrf.mxu0
    %v2831 = vadd.f32 %v2818, %v2830
    %v2832 = vpop.f32.mrf.mxu0
    %2833 = vdwg.mxu0
    %2834 = vmatpush.bf16.msra.mxu0 %v2225
    %2835 = vmatpush.bf16.msra.mxu0 %v2217
    %2836 = vmatpush.bf16.msra.mxu0 %v2209
    %2837 = vmatpush.bf16.msra.mxu0 %v2201
    %2838 = vmatpush.bf16.msra.mxu0 %v2193
    %2839 = vmatpush.bf16.msra.mxu0 %v2185
    %2840 = vmatpush.bf16.msra.mxu0 %v2177
    %2841 = vmatpush.bf16.msra.mxu0 %v2169
    %2842 = vmatmul.bf16.gmra.mxu0 %v1248
    %v2843 = vpop.f32.mrf.mxu0
    %v2844 = vadd.f32 %v2831, %v2843
    %v2845 = vpop.f32.mrf.mxu0
    %2846 = vdwg.mxu0
    %2847 = vmatpush.bf16.msra.mxu0 %v2289
    %2848 = vmatpush.bf16.msra.mxu0 %v2281
    %2849 = vmatpush.bf16.msra.mxu0 %v2273
    %2850 = vmatpush.bf16.msra.mxu0 %v2265
    %2851 = vmatpush.bf16.msra.mxu0 %v2257
    %2852 = vmatpush.bf16.msra.mxu0 %v2249
    %2853 = vmatpush.bf16.msra.mxu0 %v2241
    %2854 = vmatpush.bf16.msra.mxu0 %v2233
    %2855 = vmatmul.bf16.gmra.mxu0 %v1249
    %v2856 = vpop.f32.mrf.mxu0
    %v2857 = vadd.f32 %v2844, %v2856
    %v2858 = vpop.f32.mrf.mxu0
    %2859 = vdwg.mxu0
    %2860 = vmatpush.bf16.msra.mxu0 %v2098
    %2861 = vmatpush.bf16.msra.mxu0 %v2090
    %2862 = vmatpush.bf16.msra.mxu0 %v2082
    %2863 = vmatpush.bf16.msra.mxu0 %v2074
    %2864 = vmatpush.bf16.msra.mxu0 %v2066
    %2865 = vmatpush.bf16.msra.mxu0 %v2058
    %2866 = vmatpush.bf16.msra.mxu0 %v2050
    %2867 = vmatpush.bf16.msra.mxu0 %v2042
    %2868 = vmatmul.bf16.gmra.mxu0 %v1246
    %v2869 = vpop.f32.mrf.mxu0
    %v2870 = vadd.f32 %v1258, %v2869
    %v2871 = vpop.f32.mrf.mxu0
    %2872 = vdwg.mxu0
    %2873 = vmatpush.bf16.msra.mxu0 %v2162
    %2874 = vmatpush.bf16.msra.mxu0 %v2154
    %2875 = vmatpush.bf16.msra.mxu0 %v2146
    %2876 = vmatpush.bf16.msra.mxu0 %v2138
    %2877 = vmatpush.bf16.msra.mxu0 %v2130
    %2878 = vmatpush.bf16.msra.mxu0 %v2122
    %2879 = vmatpush.bf16.msra.mxu0 %v2114
    %2880 = vmatpush.bf16.msra.mxu0 %v2106
    %2881 = vmatmul.bf16.gmra.mxu0 %v1247
    %v2882 = vpop.f32.mrf.mxu0
    %v2883 = vadd.f32 %v2870, %v2882
    %v2884 = vpop.f32.mrf.mxu0
    %2885 = vdwg.mxu0
    %2886 = vmatpush.bf16.msra.mxu0 %v2226
    %2887 = vmatpush.bf16.msra.mxu0 %v2218
    %2888 = vmatpush.bf16.msra.mxu0 %v2210
    %2889 = vmatpush.bf16.msra.mxu0 %v2202
    %2890 = vmatpush.bf16.msra.mxu0 %v2194
    %2891 = vmatpush.bf16.msra.mxu0 %v2186
    %2892 = vmatpush.bf16.msra.mxu0 %v2178
    %2893 = vmatpush.bf16.msra.mxu0 %v2170
    %2894 = vmatmul.bf16.gmra.mxu0 %v1248
    %v2895 = vpop.f32.mrf.mxu0
    %v2896 = vadd.f32 %v2883, %v2895
    %v2897 = vpop.f32.mrf.mxu0
    %2898 = vdwg.mxu0
    %2899 = vmatpush.bf16.msra.mxu0 %v2290
    %2900 = vmatpush.bf16.msra.mxu0 %v2282
    %2901 = vmatpush.bf16.msra.mxu0 %v2274
    %2902 = vmatpush.bf16.msra.mxu0 %v2266
    %2903 = vmatpush.bf16.msra.mxu0 %v2258
    %2904 = vmatpush.bf16.msra.mxu0 %v2250
    %2905 = vmatpush.bf16.msra.mxu0 %v2242
    %2906 = vmatpush.bf16.msra.mxu0 %v2234
    %2907 = vmatmul.bf16.gmra.mxu0 %v1249
    %v2908 = vpop.f32.mrf.mxu0
    %v2909 = vadd.f32 %v2896, %v2908
    %v2910 = vpop.f32.mrf.mxu0
    %2911 = vdwg.mxu0
    %2912 = vmatpush.bf16.msra.mxu0 %v2099
    %2913 = vmatpush.bf16.msra.mxu0 %v2091
    %2914 = vmatpush.bf16.msra.mxu0 %v2083
    %2915 = vmatpush.bf16.msra.mxu0 %v2075
    %2916 = vmatpush.bf16.msra.mxu0 %v2067
    %2917 = vmatpush.bf16.msra.mxu0 %v2059
    %2918 = vmatpush.bf16.msra.mxu0 %v2051
    %2919 = vmatpush.bf16.msra.mxu0 %v2043
    %2920 = vmatmul.bf16.gmra.mxu0 %v1246
    %v2921 = vpop.f32.mrf.mxu0
    %v2922 = vadd.f32 %v1259, %v2921
    %v2923 = vpop.f32.mrf.mxu0
    %2924 = vdwg.mxu0
    %2925 = vmatpush.bf16.msra.mxu0 %v2163
    %2926 = vmatpush.bf16.msra.mxu0 %v2155
    %2927 = vmatpush.bf16.msra.mxu0 %v2147
    %2928 = vmatpush.bf16.msra.mxu0 %v2139
    %2929 = vmatpush.bf16.msra.mxu0 %v2131
    %2930 = vmatpush.bf16.msra.mxu0 %v2123
    %2931 = vmatpush.bf16.msra.mxu0 %v2115
    %2932 = vmatpush.bf16.msra.mxu0 %v2107
    %2933 = vmatmul.bf16.gmra.mxu0 %v1247
    %v2934 = vpop.f32.mrf.mxu0
    %v2935 = vadd.f32 %v2922, %v2934
    %v2936 = vpop.f32.mrf.mxu0
    %2937 = vdwg.mxu0
    %2938 = vmatpush.bf16.msra.mxu0 %v2227
    %2939 = vmatpush.bf16.msra.mxu0 %v2219
    %2940 = vmatpush.bf16.msra.mxu0 %v2211
    %2941 = vmatpush.bf16.msra.mxu0 %v2203
    %2942 = vmatpush.bf16.msra.mxu0 %v2195
    %2943 = vmatpush.bf16.msra.mxu0 %v2187
    %2944 = vmatpush.bf16.msra.mxu0 %v2179
    %2945 = vmatpush.bf16.msra.mxu0 %v2171
    %2946 = vmatmul.bf16.gmra.mxu0 %v1248
    %v2947 = vpop.f32.mrf.mxu0
    %v2948 = vadd.f32 %v2935, %v2947
    %v2949 = vpop.f32.mrf.mxu0
    %2950 = vdwg.mxu0
    %2951 = vmatpush.bf16.msra.mxu0 %v2291
    %2952 = vmatpush.bf16.msra.mxu0 %v2283
    %2953 = vmatpush.bf16.msra.mxu0 %v2275
    %2954 = vmatpush.bf16.msra.mxu0 %v2267
    %2955 = vmatpush.bf16.msra.mxu0 %v2259
    %2956 = vmatpush.bf16.msra.mxu0 %v2251
    %2957 = vmatpush.bf16.msra.mxu0 %v2243
    %2958 = vmatpush.bf16.msra.mxu0 %v2235
    %2959 = vmatmul.bf16.gmra.mxu0 %v1249
    %v2960 = vpop.f32.mrf.mxu0
    %v2961 = vadd.f32 %v2948, %v2960
    %v2962 = vpop.f32.mrf.mxu0
    %2963 = vdwg.mxu0
    %v2964 = vmul.f32 %v2597, 0.2
    %v2965 = vmul.f32 %v2649, 0.2
    %v2966 = vmul.f32 %v2701, 0.2
    %v2967 = vmul.f32 %v2753, 0.2
    %v2968 = vmul.f32 %v2805, 0.2
    %v2969 = vmul.f32 %v2857, 0.2
    %v2970 = vmul.f32 %v2909, 0.2
    %v2971 = vmul.f32 %v2961, 0.2
    %v2972 = vmax.f32 %v2597, %v2964
    %v2973 = vmax.f32 %v2649, %v2965
    %v2974 = vmax.f32 %v2701, %v2966
    %v2975 = vmax.f32 %v2753, %v2967
    %v2976 = vmax.f32 %v2805, %v2968
    %v2977 = vmax.f32 %v2857, %v2969
    %v2978 = vmax.f32 %v2909, %v2970
    %v2979 = vmax.f32 %v2961, %v2971
    %v2980 = vld [vmem:[%s13] sm:$0xf]
    %v2981 = vld [vmem:[%s13 + $0x4] sm:$0xf]
    %v2982 = vld [vmem:[%s13 + $0x8] sm:$0xf]
    %v2983 = vld [vmem:[%s13 + $0xc] sm:$0xf]
    %v2984 = vld [vmem:[%s13 + $0x10] sm:$0xf]
    %v2985 = vld [vmem:[%s13 + $0x14] sm:$0xf]
    %v2986 = vld [vmem:[%s13 + $0x18] sm:$0xf]
    %v2987 = vld [vmem:[%s13 + $0x1c] sm:$0xf]
    %v2988 = vld [vmem:[%s13 + $0x20] sm:$0xf]
    %v2989 = vld [vmem:[%s13 + $0x24] sm:$0xf]
    %v2990 = vld [vmem:[%s13 + $0x28] sm:$0xf]
    %v2991 = vld [vmem:[%s13 + $0x2c] sm:$0xf]
    %v2992 = vld [vmem:[%s13 + $0x30] sm:$0xf]
    %v2993 = vld [vmem:[%s13 + $0x34] sm:$0xf]
    %v2994 = vld [vmem:[%s13 + $0x38] sm:$0xf]
    %v2995 = vld [vmem:[%s13 + $0x3c] sm:$0xf]
    %v2996 = vld [vmem:[%s13 + $0x40] sm:$0xf]
    %v2997 = vld [vmem:[%s13 + $0x44] sm:$0xf]
    %v2998 = vld [vmem:[%s13 + $0x48] sm:$0xf]
    %v2999 = vld [vmem:[%s13 + $0x4c] sm:$0xf]
    %v3000 = vld [vmem:[%s13 + $0x50] sm:$0xf]
    %v3001 = vld [vmem:[%s13 + $0x54] sm:$0xf]
    %v3002 = vld [vmem:[%s13 + $0x58] sm:$0xf]
    %v3003 = vld [vmem:[%s13 + $0x5c] sm:$0xf]
    %v3004 = vld [vmem:[%s13 + $0x60] sm:$0xf]
    %v3005 = vld [vmem:[%s13 + $0x64] sm:$0xf]
    %v3006 = vld [vmem:[%s13 + $0x68] sm:$0xf]
    %v3007 = vld [vmem:[%s13 + $0x6c] sm:$0xf]
    %v3008 = vld [vmem:[%s13 + $0x70] sm:$0xf]
    %v3009 = vld [vmem:[%s13 + $0x74] sm:$0xf]
    %v3010 = vld [vmem:[%s13 + $0x78] sm:$0xf]
    %v3011 = vld [vmem:[%s13 + $0x7c] sm:$0xf]
    %v3012 = vld [vmem:[%s13 + $0x80] sm:$0xf]
    %v3013 = vld [vmem:[%s13 + $0x84] sm:$0xf]
    %v3014 = vld [vmem:[%s13 + $0x88] sm:$0xf]
    %v3015 = vld [vmem:[%s13 + $0x8c] sm:$0xf]
    %v3016 = vld [vmem:[%s13 + $0x90] sm:$0xf]
    %v3017 = vld [vmem:[%s13 + $0x94] sm:$0xf]
    %v3018 = vld [vmem:[%s13 + $0x98] sm:$0xf]
    %v3019 = vld [vmem:[%s13 + $0x9c] sm:$0xf]
    %v3020 = vld [vmem:[%s13 + $0xa0] sm:$0xf]
    %v3021 = vld [vmem:[%s13 + $0xa4] sm:$0xf]
    %v3022 = vld [vmem:[%s13 + $0xa8] sm:$0xf]
    %v3023 = vld [vmem:[%s13 + $0xac] sm:$0xf]
    %v3024 = vld [vmem:[%s13 + $0xb0] sm:$0xf]
    %v3025 = vld [vmem:[%s13 + $0xb4] sm:$0xf]
    %v3026 = vld [vmem:[%s13 + $0xb8] sm:$0xf]
    %v3027 = vld [vmem:[%s13 + $0xbc] sm:$0xf]
    %v3028 = vld [vmem:[%s13 + $0xc0] sm:$0xf]
    %v3029 = vld [vmem:[%s13 + $0xc4] sm:$0xf]
    %v3030 = vld [vmem:[%s13 + $0xc8] sm:$0xf]
    %v3031 = vld [vmem:[%s13 + $0xcc] sm:$0xf]
    %v3032 = vld [vmem:[%s13 + $0xd0] sm:$0xf]
    %v3033 = vld [vmem:[%s13 + $0xd4] sm:$0xf]
    %v3034 = vld [vmem:[%s13 + $0xd8] sm:$0xf]
    %v3035 = vld [vmem:[%s13 + $0xdc] sm:$0xf]
    %v3036 = vld [vmem:[%s13 + $0xe0] sm:$0xf]
    %v3037 = vld [vmem:[%s13 + $0xe4] sm:$0xf]
    %v3038 = vld [vmem:[%s13 + $0xe8] sm:$0xf]
    %v3039 = vld [vmem:[%s13 + $0xec] sm:$0xf]
    %v3040 = vld [vmem:[%s13 + $0xf0] sm:$0xf]
    %v3041 = vld [vmem:[%s13 + $0xf4] sm:$0xf]
    %v3042 = vld [vmem:[%s13 + $0xf8] sm:$0xf]
    %v3043 = vld [vmem:[%s13 + $0xfc] sm:$0xf]
    %v3044 = vld [vmem:[%s13 + $0x100] sm:$0xf]
    %v3045 = vld [vmem:[%s13 + $0x104] sm:$0xf]
    %v3046 = vld [vmem:[%s13 + $0x108] sm:$0xf]
    %v3047 = vld [vmem:[%s13 + $0x10c] sm:$0xf]
    %v3048 = vld [vmem:[%s13 + $0x110] sm:$0xf]
    %v3049 = vld [vmem:[%s13 + $0x114] sm:$0xf]
    %v3050 = vld [vmem:[%s13 + $0x118] sm:$0xf]
    %v3051 = vld [vmem:[%s13 + $0x11c] sm:$0xf]
    %v3052 = vld [vmem:[%s13 + $0x120] sm:$0xf]
    %v3053 = vld [vmem:[%s13 + $0x124] sm:$0xf]
    %v3054 = vld [vmem:[%s13 + $0x128] sm:$0xf]
    %v3055 = vld [vmem:[%s13 + $0x12c] sm:$0xf]
    %v3056 = vld [vmem:[%s13 + $0x130] sm:$0xf]
    %v3057 = vld [vmem:[%s13 + $0x134] sm:$0xf]
    %v3058 = vld [vmem:[%s13 + $0x138] sm:$0xf]
    %v3059 = vld [vmem:[%s13 + $0x13c] sm:$0xf]
    %v3060 = vld [vmem:[%s13 + $0x140] sm:$0xf]
    %v3061 = vld [vmem:[%s13 + $0x144] sm:$0xf]
    %v3062 = vld [vmem:[%s13 + $0x148] sm:$0xf]
    %v3063 = vld [vmem:[%s13 + $0x14c] sm:$0xf]
    %v3064 = vld [vmem:[%s13 + $0x150] sm:$0xf]
    %v3065 = vld [vmem:[%s13 + $0x154] sm:$0xf]
    %v3066 = vld [vmem:[%s13 + $0x158] sm:$0xf]
    %v3067 = vld [vmem:[%s13 + $0x15c] sm:$0xf]
    %v3068 = vld [vmem:[%s13 + $0x160] sm:$0xf]
    %v3069 = vld [vmem:[%s13 + $0x164] sm:$0xf]
    %v3070 = vld [vmem:[%s13 + $0x168] sm:$0xf]
    %v3071 = vld [vmem:[%s13 + $0x16c] sm:$0xf]
    %v3072 = vld [vmem:[%s13 + $0x170] sm:$0xf]
    %v3073 = vld [vmem:[%s13 + $0x174] sm:$0xf]
    %v3074 = vld [vmem:[%s13 + $0x178] sm:$0xf]
    %v3075 = vld [vmem:[%s13 + $0x17c] sm:$0xf]
    %v3076 = vld [vmem:[%s13 + $0x180] sm:$0xf]
    %v3077 = vld [vmem:[%s13 + $0x184] sm:$0xf]
    %v3078 = vld [vmem:[%s13 + $0x188] sm:$0xf]
    %v3079 = vld [vmem:[%s13 + $0x18c] sm:$0xf]
    %v3080 = vld [vmem:[%s13 + $0x190] sm:$0xf]
    %v3081 = vld [vmem:[%s13 + $0x194] sm:$0xf]
    %v3082 = vld [vmem:[%s13 + $0x198] sm:$0xf]
    %v3083 = vld [vmem:[%s13 + $0x19c] sm:$0xf]
    %v3084 = vld [vmem:[%s13 + $0x1a0] sm:$0xf]
    %v3085 = vld [vmem:[%s13 + $0x1a4] sm:$0xf]
    %v3086 = vld [vmem:[%s13 + $0x1a8] sm:$0xf]
    %v3087 = vld [vmem:[%s13 + $0x1ac] sm:$0xf]
    %v3088 = vld [vmem:[%s13 + $0x1b0] sm:$0xf]
    %v3089 = vld [vmem:[%s13 + $0x1b4] sm:$0xf]
    %v3090 = vld [vmem:[%s13 + $0x1b8] sm:$0xf]
    %v3091 = vld [vmem:[%s13 + $0x1bc] sm:$0xf]
    %v3092 = vld [vmem:[%s13 + $0x1c0] sm:$0xf]
    %v3093 = vld [vmem:[%s13 + $0x1c4] sm:$0xf]
    %v3094 = vld [vmem:[%s13 + $0x1c8] sm:$0xf]
    %v3095 = vld [vmem:[%s13 + $0x1cc] sm:$0xf]
    %v3096 = vld [vmem:[%s13 + $0x1d0] sm:$0xf]
    %v3097 = vld [vmem:[%s13 + $0x1d4] sm:$0xf]
    %v3098 = vld [vmem:[%s13 + $0x1d8] sm:$0xf]
    %v3099 = vld [vmem:[%s13 + $0x1dc] sm:$0xf]
    %v3100 = vld [vmem:[%s13 + $0x1e0] sm:$0xf]
    %v3101 = vld [vmem:[%s13 + $0x1e4] sm:$0xf]
    %v3102 = vld [vmem:[%s13 + $0x1e8] sm:$0xf]
    %v3103 = vld [vmem:[%s13 + $0x1ec] sm:$0xf]
    %v3104 = vld [vmem:[%s13 + $0x1f0] sm:$0xf]
    %v3105 = vld [vmem:[%s13 + $0x1f4] sm:$0xf]
    %v3106 = vld [vmem:[%s13 + $0x1f8] sm:$0xf]
    %v3107 = vld [vmem:[%s13 + $0x1fc] sm:$0xf]
    %v3108 = vpack.c.bf16 %v2972, %v2972
    %v3109 = vpack.c.bf16 %v2973, %v2973
    %v3110 = vpack.c.bf16 %v2974, %v2974
    %v3111 = vpack.c.bf16 %v2975, %v2975
    %v3112 = vpack.c.bf16 %v2976, %v2976
    %v3113 = vpack.c.bf16 %v2977, %v2977
    %v3114 = vpack.c.bf16 %v2978, %v2978
    %v3115 = vpack.c.bf16 %v2979, %v2979
    %v3116 = vld [vmem:[%s14] sm:$0x1]
    %v3118 = vperm.slane %v3116, 0
    %v3248 = vunpack.c.l.b16 %v2980
    %v3249 = vunpack.c.l.b16 %v2981
    %v3250 = vunpack.c.l.b16 %v2982
    %v3251 = vunpack.c.l.b16 %v2983
    %v3252 = vunpack.c.l.b16 %v2984
    %v3253 = vunpack.c.l.b16 %v2985
    %v3254 = vunpack.c.l.b16 %v2986
    %v3255 = vunpack.c.l.b16 %v2987
    %v3256 = vunpack.c.l.b16 %v2988
    %v3257 = vunpack.c.l.b16 %v2989
    %v3258 = vunpack.c.l.b16 %v2990
    %v3259 = vunpack.c.l.b16 %v2991
    %v3260 = vunpack.c.l.b16 %v2992
    %v3261 = vunpack.c.l.b16 %v2993
    %v3262 = vunpack.c.l.b16 %v2994
    %v3263 = vunpack.c.l.b16 %v2995
    %v3264 = vunpack.c.l.b16 %v2996
    %v3265 = vunpack.c.l.b16 %v2997
    %v3266 = vunpack.c.l.b16 %v2998
    %v3267 = vunpack.c.l.b16 %v2999
    %v3268 = vunpack.c.l.b16 %v3000
    %v3269 = vunpack.c.l.b16 %v3001
    %v3270 = vunpack.c.l.b16 %v3002
    %v3271 = vunpack.c.l.b16 %v3003
    %v3272 = vunpack.c.l.b16 %v3004
    %v3273 = vunpack.c.l.b16 %v3005
    %v3274 = vunpack.c.l.b16 %v3006
    %v3275 = vunpack.c.l.b16 %v3007
    %v3276 = vunpack.c.l.b16 %v3008
    %v3277 = vunpack.c.l.b16 %v3009
    %v3278 = vunpack.c.l.b16 %v3010
    %v3279 = vunpack.c.l.b16 %v3011
    %v3280 = vunpack.c.l.b16 %v3012
    %v3281 = vunpack.c.l.b16 %v3013
    %v3282 = vunpack.c.l.b16 %v3014
    %v3283 = vunpack.c.l.b16 %v3015
    %v3284 = vunpack.c.l.b16 %v3016
    %v3285 = vunpack.c.l.b16 %v3017
    %v3286 = vunpack.c.l.b16 %v3018
    %v3287 = vunpack.c.l.b16 %v3019
    %v3288 = vunpack.c.l.b16 %v3020
    %v3289 = vunpack.c.l.b16 %v3021
    %v3290 = vunpack.c.l.b16 %v3022
    %v3291 = vunpack.c.l.b16 %v3023
    %v3292 = vunpack.c.l.b16 %v3024
    %v3293 = vunpack.c.l.b16 %v3025
    %v3294 = vunpack.c.l.b16 %v3026
    %v3295 = vunpack.c.l.b16 %v3027
    %v3296 = vunpack.c.l.b16 %v3028
    %v3297 = vunpack.c.l.b16 %v3029
    %v3298 = vunpack.c.l.b16 %v3030
    %v3299 = vunpack.c.l.b16 %v3031
    %v3300 = vunpack.c.l.b16 %v3032
    %v3301 = vunpack.c.l.b16 %v3033
    %v3302 = vunpack.c.l.b16 %v3034
    %v3303 = vunpack.c.l.b16 %v3035
    %v3304 = vunpack.c.l.b16 %v3036
    %v3305 = vunpack.c.l.b16 %v3037
    %v3306 = vunpack.c.l.b16 %v3038
    %v3307 = vunpack.c.l.b16 %v3039
    %v3308 = vunpack.c.l.b16 %v3040
    %v3309 = vunpack.c.l.b16 %v3041
    %v3310 = vunpack.c.l.b16 %v3042
    %v3311 = vunpack.c.l.b16 %v3043
    %v3312 = vunpack.c.l.b16 %v3044
    %v3313 = vunpack.c.l.b16 %v3045
    %v3314 = vunpack.c.l.b16 %v3046
    %v3315 = vunpack.c.l.b16 %v3047
    %v3316 = vunpack.c.l.b16 %v3048
    %v3317 = vunpack.c.l.b16 %v3049
    %v3318 = vunpack.c.l.b16 %v3050
    %v3319 = vunpack.c.l.b16 %v3051
    %v3320 = vunpack.c.l.b16 %v3052
    %v3321 = vunpack.c.l.b16 %v3053
    %v3322 = vunpack.c.l.b16 %v3054
    %v3323 = vunpack.c.l.b16 %v3055
    %v3324 = vunpack.c.l.b16 %v3056
    %v3325 = vunpack.c.l.b16 %v3057
    %v3326 = vunpack.c.l.b16 %v3058
    %v3327 = vunpack.c.l.b16 %v3059
    %v3328 = vunpack.c.l.b16 %v3060
    %v3329 = vunpack.c.l.b16 %v3061
    %v3330 = vunpack.c.l.b16 %v3062
    %v3331 = vunpack.c.l.b16 %v3063
    %v3332 = vunpack.c.l.b16 %v3064
    %v3333 = vunpack.c.l.b16 %v3065
    %v3334 = vunpack.c.l.b16 %v3066
    %v3335 = vunpack.c.l.b16 %v3067
    %v3336 = vunpack.c.l.b16 %v3068
    %v3337 = vunpack.c.l.b16 %v3069
    %v3338 = vunpack.c.l.b16 %v3070
    %v3339 = vunpack.c.l.b16 %v3071
    %v3340 = vunpack.c.l.b16 %v3072
    %v3341 = vunpack.c.l.b16 %v3073
    %v3342 = vunpack.c.l.b16 %v3074
    %v3343 = vunpack.c.l.b16 %v3075
    %v3344 = vunpack.c.l.b16 %v3076
    %v3345 = vunpack.c.l.b16 %v3077
    %v3346 = vunpack.c.l.b16 %v3078
    %v3347 = vunpack.c.l.b16 %v3079
    %v3348 = vunpack.c.l.b16 %v3080
    %v3349 = vunpack.c.l.b16 %v3081
    %v3350 = vunpack.c.l.b16 %v3082
    %v3351 = vunpack.c.l.b16 %v3083
    %v3352 = vunpack.c.l.b16 %v3084
    %v3353 = vunpack.c.l.b16 %v3085
    %v3354 = vunpack.c.l.b16 %v3086
    %v3355 = vunpack.c.l.b16 %v3087
    %v3356 = vunpack.c.l.b16 %v3088
    %v3357 = vunpack.c.l.b16 %v3089
    %v3358 = vunpack.c.l.b16 %v3090
    %v3359 = vunpack.c.l.b16 %v3091
    %v3360 = vunpack.c.l.b16 %v3092
    %v3361 = vunpack.c.l.b16 %v3093
    %v3362 = vunpack.c.l.b16 %v3094
    %v3363 = vunpack.c.l.b16 %v3095
    %v3364 = vunpack.c.l.b16 %v3096
    %v3365 = vunpack.c.l.b16 %v3097
    %v3366 = vunpack.c.l.b16 %v3098
    %v3367 = vunpack.c.l.b16 %v3099
    %v3368 = vunpack.c.l.b16 %v3100
    %v3369 = vunpack.c.l.b16 %v3101
    %v3370 = vunpack.c.l.b16 %v3102
    %v3371 = vunpack.c.l.b16 %v3103
    %v3372 = vunpack.c.l.b16 %v3104
    %v3373 = vunpack.c.l.b16 %v3105
    %v3374 = vunpack.c.l.b16 %v3106
    %v3375 = vunpack.c.l.b16 %v3107
    %v3376 = vpack.c.b16 %v3249, %v3248
    %v3377 = vpack.c.b16 %v3251, %v3250
    %v3378 = vpack.c.b16 %v3253, %v3252
    %v3379 = vpack.c.b16 %v3255, %v3254
    %v3380 = vpack.c.b16 %v3257, %v3256
    %v3381 = vpack.c.b16 %v3259, %v3258
    %v3382 = vpack.c.b16 %v3261, %v3260
    %v3383 = vpack.c.b16 %v3263, %v3262
    %v3384 = vpack.c.b16 %v3265, %v3264
    %v3385 = vpack.c.b16 %v3267, %v3266
    %v3386 = vpack.c.b16 %v3269, %v3268
    %v3387 = vpack.c.b16 %v3271, %v3270
    %v3388 = vpack.c.b16 %v3273, %v3272
    %v3389 = vpack.c.b16 %v3275, %v3274
    %v3390 = vpack.c.b16 %v3277, %v3276
    %v3391 = vpack.c.b16 %v3279, %v3278
    %v3392 = vpack.c.b16 %v3281, %v3280
    %v3393 = vpack.c.b16 %v3283, %v3282
    %v3394 = vpack.c.b16 %v3285, %v3284
    %v3395 = vpack.c.b16 %v3287, %v3286
    %v3396 = vpack.c.b16 %v3289, %v3288
    %v3397 = vpack.c.b16 %v3291, %v3290
    %v3398 = vpack.c.b16 %v3293, %v3292
    %v3399 = vpack.c.b16 %v3295, %v3294
    %v3400 = vpack.c.b16 %v3297, %v3296
    %v3401 = vpack.c.b16 %v3299, %v3298
    %v3402 = vpack.c.b16 %v3301, %v3300
    %v3403 = vpack.c.b16 %v3303, %v3302
    %v3404 = vpack.c.b16 %v3305, %v3304
    %v3405 = vpack.c.b16 %v3307, %v3306
    %v3406 = vpack.c.b16 %v3309, %v3308
    %v3407 = vpack.c.b16 %v3311, %v3310
    %v3408 = vpack.c.b16 %v3313, %v3312
    %v3409 = vpack.c.b16 %v3315, %v3314
    %v3410 = vpack.c.b16 %v3317, %v3316
    %v3411 = vpack.c.b16 %v3319, %v3318
    %v3412 = vpack.c.b16 %v3321, %v3320
    %v3413 = vpack.c.b16 %v3323, %v3322
    %v3414 = vpack.c.b16 %v3325, %v3324
    %v3415 = vpack.c.b16 %v3327, %v3326
    %v3416 = vpack.c.b16 %v3329, %v3328
    %v3417 = vpack.c.b16 %v3331, %v3330
    %v3418 = vpack.c.b16 %v3333, %v3332
    %v3419 = vpack.c.b16 %v3335, %v3334
    %v3420 = vpack.c.b16 %v3337, %v3336
    %v3421 = vpack.c.b16 %v3339, %v3338
    %v3422 = vpack.c.b16 %v3341, %v3340
    %v3423 = vpack.c.b16 %v3343, %v3342
    %v3424 = vpack.c.b16 %v3345, %v3344
    %v3425 = vpack.c.b16 %v3347, %v3346
    %v3426 = vpack.c.b16 %v3349, %v3348
    %v3427 = vpack.c.b16 %v3351, %v3350
    %v3428 = vpack.c.b16 %v3353, %v3352
    %v3429 = vpack.c.b16 %v3355, %v3354
    %v3430 = vpack.c.b16 %v3357, %v3356
    %v3431 = vpack.c.b16 %v3359, %v3358
    %v3432 = vpack.c.b16 %v3361, %v3360
    %v3433 = vpack.c.b16 %v3363, %v3362
    %v3434 = vpack.c.b16 %v3365, %v3364
    %v3435 = vpack.c.b16 %v3367, %v3366
    %v3436 = vpack.c.b16 %v3369, %v3368
    %v3437 = vpack.c.b16 %v3371, %v3370
    %v3438 = vpack.c.b16 %v3373, %v3372
    %v3439 = vpack.c.b16 %v3375, %v3374
    %3504 = vmatpush.bf16.msra.mxu0 %v3383
    %3505 = vmatpush.bf16.msra.mxu0 %v3382
    %3506 = vmatpush.bf16.msra.mxu0 %v3381
    %3507 = vmatpush.bf16.msra.mxu0 %v3380
    %3508 = vmatpush.bf16.msra.mxu0 %v3379
    %3509 = vmatpush.bf16.msra.mxu0 %v3378
    %3510 = vmatpush.bf16.msra.mxu0 %v3377
    %3511 = vmatpush.bf16.msra.mxu0 %v3376
    %3512 = vmatmul.bf16.gmra.mxu0 %v3108
    %v3513 = vpop.f32.mrf.mxu0
    %v3514 = vadd.f32 %v3118, %v3513
    %v3515 = vpop.f32.mrf.mxu0
    %3516 = vdwg.mxu0
    %3517 = vmatpush.bf16.msra.mxu0 %v3391
    %3518 = vmatpush.bf16.msra.mxu0 %v3390
    %3519 = vmatpush.bf16.msra.mxu0 %v3389
    %3520 = vmatpush.bf16.msra.mxu0 %v3388
    %3521 = vmatpush.bf16.msra.mxu0 %v3387
    %3522 = vmatpush.bf16.msra.mxu0 %v3386
    %3523 = vmatpush.bf16.msra.mxu0 %v3385
    %3524 = vmatpush.bf16.msra.mxu0 %v3384
    %3525 = vmatmul.bf16.gmra.mxu0 %v3109
    %v3526 = vpop.f32.mrf.mxu0
    %v3527 = vadd.f32 %v3514, %v3526
    %v3528 = vpop.f32.mrf.mxu0
    %3529 = vdwg.mxu0
    %3530 = vmatpush.bf16.msra.mxu0 %v3399
    %3531 = vmatpush.bf16.msra.mxu0 %v3398
    %3532 = vmatpush.bf16.msra.mxu0 %v3397
    %3533 = vmatpush.bf16.msra.mxu0 %v3396
    %3534 = vmatpush.bf16.msra.mxu0 %v3395
    %3535 = vmatpush.bf16.msra.mxu0 %v3394
    %3536 = vmatpush.bf16.msra.mxu0 %v3393
    %3537 = vmatpush.bf16.msra.mxu0 %v3392
    %3538 = vmatmul.bf16.gmra.mxu0 %v3110
    %v3539 = vpop.f32.mrf.mxu0
    %v3540 = vadd.f32 %v3527, %v3539
    %v3541 = vpop.f32.mrf.mxu0
    %3542 = vdwg.mxu0
    %3543 = vmatpush.bf16.msra.mxu0 %v3407
    %3544 = vmatpush.bf16.msra.mxu0 %v3406
    %3545 = vmatpush.bf16.msra.mxu0 %v3405
    %3546 = vmatpush.bf16.msra.mxu0 %v3404
    %3547 = vmatpush.bf16.msra.mxu0 %v3403
    %3548 = vmatpush.bf16.msra.mxu0 %v3402
    %3549 = vmatpush.bf16.msra.mxu0 %v3401
    %3550 = vmatpush.bf16.msra.mxu0 %v3400
    %3551 = vmatmul.bf16.gmra.mxu0 %v3111
    %v3552 = vpop.f32.mrf.mxu0
    %v3553 = vadd.f32 %v3540, %v3552
    %v3554 = vpop.f32.mrf.mxu0
    %3555 = vdwg.mxu0
    %3556 = vmatpush.bf16.msra.mxu0 %v3415
    %3557 = vmatpush.bf16.msra.mxu0 %v3414
    %3558 = vmatpush.bf16.msra.mxu0 %v3413
    %3559 = vmatpush.bf16.msra.mxu0 %v3412
    %3560 = vmatpush.bf16.msra.mxu0 %v3411
    %3561 = vmatpush.bf16.msra.mxu0 %v3410
    %3562 = vmatpush.bf16.msra.mxu0 %v3409
    %3563 = vmatpush.bf16.msra.mxu0 %v3408
    %3564 = vmatmul.bf16.gmra.mxu0 %v3112
    %v3565 = vpop.f32.mrf.mxu0
    %v3566 = vadd.f32 %v3553, %v3565
    %v3567 = vpop.f32.mrf.mxu0
    %3568 = vdwg.mxu0
    %3569 = vmatpush.bf16.msra.mxu0 %v3423
    %3570 = vmatpush.bf16.msra.mxu0 %v3422
    %3571 = vmatpush.bf16.msra.mxu0 %v3421
    %3572 = vmatpush.bf16.msra.mxu0 %v3420
    %3573 = vmatpush.bf16.msra.mxu0 %v3419
    %3574 = vmatpush.bf16.msra.mxu0 %v3418
    %3575 = vmatpush.bf16.msra.mxu0 %v3417
    %3576 = vmatpush.bf16.msra.mxu0 %v3416
    %3577 = vmatmul.bf16.gmra.mxu0 %v3113
    %v3578 = vpop.f32.mrf.mxu0
    %v3579 = vadd.f32 %v3566, %v3578
    %v3580 = vpop.f32.mrf.mxu0
    %3581 = vdwg.mxu0
    %3582 = vmatpush.bf16.msra.mxu0 %v3431
    %3583 = vmatpush.bf16.msra.mxu0 %v3430
    %3584 = vmatpush.bf16.msra.mxu0 %v3429
    %3585 = vmatpush.bf16.msra.mxu0 %v3428
    %3586 = vmatpush.bf16.msra.mxu0 %v3427
    %3587 = vmatpush.bf16.msra.mxu0 %v3426
    %3588 = vmatpush.bf16.msra.mxu0 %v3425
    %3589 = vmatpush.bf16.msra.mxu0 %v3424
    %3590 = vmatmul.bf16.gmra.mxu0 %v3114
    %v3591 = vpop.f32.mrf.mxu0
    %v3592 = vadd.f32 %v3579, %v3591
    %v3593 = vpop.f32.mrf.mxu0
    %3594 = vdwg.mxu0
    %3595 = vmatpush.bf16.msra.mxu0 %v3439
    %3596 = vmatpush.bf16.msra.mxu0 %v3438
    %3597 = vmatpush.bf16.msra.mxu0 %v3437
    %3598 = vmatpush.bf16.msra.mxu0 %v3436
    %3599 = vmatpush.bf16.msra.mxu0 %v3435
    %3600 = vmatpush.bf16.msra.mxu0 %v3434
    %3601 = vmatpush.bf16.msra.mxu0 %v3433
    %3602 = vmatpush.bf16.msra.mxu0 %v3432
    %3603 = vmatmul.bf16.gmra.mxu0 %v3115
    %v3604 = vpop.f32.mrf.mxu0
    %v3605 = vadd.f32 %v3592, %v3604
    %v3606 = vpop.f32.mrf.mxu0
    %3607 = vdwg.mxu0
    %v3608 = vld [vmem:[%s15] sm:$0x7]
    %v3609 = vld [vmem:[%s16] sm:$0x1]
    %v3611 = vperm.slane %v3609, 0
    %v3614 = vsel %vm291, %v3608, 0
    %3616 = vmatpush.bf16.msra.mxu0 0
    %3617 = vmatpush.bf16.msra.mxu0 0
    %3618 = vmatpush.bf16.msra.mxu0 0
    %3619 = vmatpush.bf16.msra.mxu0 0
    %3620 = vmatpush.bf16.msra.mxu0 0
    %3621 = vmatpush.bf16.msra.mxu0 0
    %3622 = vmatpush.bf16.msra.mxu0 0
    %3623 = vmatpush.bf16.msra.mxu0 %v3614
    %3624 = vmatmul.bf16.gmra.mxu0 %v289
    %v3625 = vpop.f32.mrf.mxu0
    %v3626 = vadd.f32 %v3611, %v3625
    %v3627 = vpop.f32.mrf.mxu0
    %3628 = vdwg.mxu0
    %3630 = vrot.lane.b32.xlu0 %v3626, 6
    %v3631 = vpop.permute.xlu0 %3630
    %v3633 = vsel %vm287, %v3605, %v3631
    %v3634 = vld [vmem:[%s17] sm:$0xff]
    %v3635 = vld [vmem:[%s17 + $0x8] sm:$0xff]
    %v3636 = vld [vmem:[%s17 + $0x10] sm:$0x33]
    %v3637 = vld [vmem:[%s17 + $0x18] sm:$0x33]
    %v3638 = vpack.c.bf16 %v3633, %v3633
    %v3639 = vld [vmem:[%s18] sm:$0xf]
    %v3641 = vperm.slane %v3639, 0
    %v3642 = vperm.slane %v3639, 1
    %v3643 = vperm.slane %v3639, 2
    %v3644 = vperm.slane %v3639, 3
    %v3653 = vunpack.c.l.b16 %v3634
    %v3654 = vunpack.c.h.b16 %v3634
    %v3655 = vunpack.c.l.b16 %v3635
    %v3656 = vunpack.c.h.b16 %v3635
    %v3657 = vunpack.c.l.b16 %v3636
    %v3658 = vunpack.c.h.b16 %v3636
    %v3659 = vunpack.c.l.b16 %v3637
    %v3660 = vunpack.c.h.b16 %v3637
    %v3661 = vpack.c.b16 %v3657, %v3653
    %v3662 = vpack.c.b16 %v3658, %v3654
    %v3663 = vpack.c.b16 %v3659, %v3655
    %v3664 = vpack.c.b16 %v3660, %v3656
    %v3666 = vsel %vm326, %v3638, 0
    %v3669 = vsel %vm330, %v3661, 0
    %v3672 = vsel %vm330, %v3662, 0
    %v3675 = vsel %vm330, %v3663, 0
    %v3678 = vsel %vm330, %v3664, 0
    %3680 = vmatpush.bf16.msra.mxu0 0
    %3681 = vmatpush.bf16.msra.mxu0 0
    %3682 = vmatpush.bf16.msra.mxu0 0
    %3683 = vmatpush.bf16.msra.mxu0 0
    %3684 = vmatpush.bf16.msra.mxu0 0
    %3685 = vmatpush.bf16.msra.mxu0 0
    %3686 = vmatpush.bf16.msra.mxu0 0
    %3687 = vmatpush.bf16.msra.mxu0 %v3669
    %3688 = vmatmul.bf16.gmra.mxu0 %v3666
    %v3689 = vpop.f32.mrf.mxu0
    %v3690 = vadd.f32 %v3641, %v3689
    %v3691 = vpop.f32.mrf.mxu0
    %3692 = vdwg.mxu0
    %3693 = vmatpush.bf16.msra.mxu0 0
    %3694 = vmatpush.bf16.msra.mxu0 0
    %3695 = vmatpush.bf16.msra.mxu0 0
    %3696 = vmatpush.bf16.msra.mxu0 0
    %3697 = vmatpush.bf16.msra.mxu0 0
    %3698 = vmatpush.bf16.msra.mxu0 0
    %3699 = vmatpush.bf16.msra.mxu0 0
    %3700 = vmatpush.bf16.msra.mxu0 %v3672
    %3701 = vmatmul.bf16.gmra.mxu0 %v3666
    %v3702 = vpop.f32.mrf.mxu0
    %v3703 = vadd.f32 %v3642, %v3702
    %v3704 = vpop.f32.mrf.mxu0
    %3705 = vdwg.mxu0
    %3706 = vmatpush.bf16.msra.mxu0 0
    %3707 = vmatpush.bf16.msra.mxu0 0
    %3708 = vmatpush.bf16.msra.mxu0 0
    %3709 = vmatpush.bf16.msra.mxu0 0
    %3710 = vmatpush.bf16.msra.mxu0 0
    %3711 = vmatpush.bf16.msra.mxu0 0
    %3712 = vmatpush.bf16.msra.mxu0 0
    %3713 = vmatpush.bf16.msra.mxu0 %v3675
    %3714 = vmatmul.bf16.gmra.mxu0 %v3666
    %v3715 = vpop.f32.mrf.mxu0
    %v3716 = vadd.f32 %v3643, %v3715
    %v3717 = vpop.f32.mrf.mxu0
    %3718 = vdwg.mxu0
    %3719 = vmatpush.bf16.msra.mxu0 0
    %3720 = vmatpush.bf16.msra.mxu0 0
    %3721 = vmatpush.bf16.msra.mxu0 0
    %3722 = vmatpush.bf16.msra.mxu0 0
    %3723 = vmatpush.bf16.msra.mxu0 0
    %3724 = vmatpush.bf16.msra.mxu0 0
    %3725 = vmatpush.bf16.msra.mxu0 0
    %3726 = vmatpush.bf16.msra.mxu0 %v3678
    %3727 = vmatmul.bf16.gmra.mxu0 %v3666
    %v3728 = vpop.f32.mrf.mxu0
    %v3729 = vadd.f32 %v3644, %v3728
    %v3730 = vpop.f32.mrf.mxu0
    %3731 = vdwg.mxu0
    %v3732 = vmul.f32 %v3690, 0.2
    %v3733 = vmul.f32 %v3703, 0.2
    %v3734 = vmul.f32 %v3716, 0.2
    %v3735 = vmul.f32 %v3729, 0.2
    %v3736 = vmax.f32 %v3690, %v3732
    %v3737 = vmax.f32 %v3703, %v3733
    %v3738 = vmax.f32 %v3716, %v3734
    %v3739 = vmax.f32 %v3729, %v3735
    %v3740 = vld [vmem:[#allocation5] sm:$0xff]
    %v3741 = vld [vmem:[#allocation5 + $0x8] sm:$0xff]
    %v3742 = vld [vmem:[#allocation5 + $0x10] sm:$0xff]
    %v3743 = vld [vmem:[#allocation5 + $0x18] sm:$0xff]
    %v3744 = vld [vmem:[#allocation5 + $0x20] sm:$0xff]
    %v3745 = vld [vmem:[#allocation5 + $0x28] sm:$0xff]
    %v3746 = vld [vmem:[#allocation5 + $0x30] sm:$0xff]
    %v3747 = vld [vmem:[#allocation5 + $0x38] sm:$0xff]
    %v3748 = vld [vmem:[#allocation5 + $0x40] sm:$0xff]
    %v3749 = vld [vmem:[#allocation5 + $0x48] sm:$0xff]
    %v3750 = vld [vmem:[#allocation5 + $0x50] sm:$0xff]
    %v3751 = vld [vmem:[#allocation5 + $0x58] sm:$0xff]
    %v3752 = vld [vmem:[#allocation5 + $0x60] sm:$0xff]
    %v3753 = vld [vmem:[#allocation5 + $0x68] sm:$0xff]
    %v3754 = vld [vmem:[#allocation5 + $0x70] sm:$0xff]
    %v3755 = vld [vmem:[#allocation5 + $0x78] sm:$0xff]
    %v3756 = vld [vmem:[#allocation5 + $0x80] sm:$0xff]
    %v3757 = vld [vmem:[#allocation5 + $0x88] sm:$0xff]
    %v3758 = vld [vmem:[#allocation5 + $0x90] sm:$0xff]
    %v3759 = vld [vmem:[#allocation5 + $0x98] sm:$0xff]
    %v3760 = vld [vmem:[#allocation5 + $0xa0] sm:$0xff]
    %v3761 = vld [vmem:[#allocation5 + $0xa8] sm:$0xff]
    %v3762 = vld [vmem:[#allocation5 + $0xb0] sm:$0xff]
    %v3763 = vld [vmem:[#allocation5 + $0xb8] sm:$0xff]
    %v3764 = vld [vmem:[#allocation5 + $0xc0] sm:$0xff]
    %v3765 = vld [vmem:[#allocation5 + $0xc8] sm:$0xff]
    %v3766 = vld [vmem:[#allocation5 + $0xd0] sm:$0xff]
    %v3767 = vld [vmem:[#allocation5 + $0xd8] sm:$0xff]
    %v3768 = vld [vmem:[#allocation5 + $0xe0] sm:$0xff]
    %v3769 = vld [vmem:[#allocation5 + $0xe8] sm:$0xff]
    %v3770 = vld [vmem:[#allocation5 + $0xf0] sm:$0xff]
    %v3771 = vld [vmem:[#allocation5 + $0xf8] sm:$0xff]
    %v3772 = vld [vmem:[#allocation5 + $0x100] sm:$0xff]
    %v3773 = vld [vmem:[#allocation5 + $0x108] sm:$0xff]
    %v3774 = vld [vmem:[#allocation5 + $0x110] sm:$0xff]
    %v3775 = vld [vmem:[#allocation5 + $0x118] sm:$0xff]
    %v3776 = vld [vmem:[#allocation5 + $0x120] sm:$0xff]
    %v3777 = vld [vmem:[#allocation5 + $0x128] sm:$0xff]
    %v3778 = vld [vmem:[#allocation5 + $0x130] sm:$0xff]
    %v3779 = vld [vmem:[#allocation5 + $0x138] sm:$0xff]
    %v3780 = vld [vmem:[#allocation5 + $0x140] sm:$0xff]
    %v3781 = vld [vmem:[#allocation5 + $0x148] sm:$0xff]
    %v3782 = vld [vmem:[#allocation5 + $0x150] sm:$0xff]
    %v3783 = vld [vmem:[#allocation5 + $0x158] sm:$0xff]
    %v3784 = vld [vmem:[#allocation5 + $0x160] sm:$0xff]
    %v3785 = vld [vmem:[#allocation5 + $0x168] sm:$0xff]
    %v3786 = vld [vmem:[#allocation5 + $0x170] sm:$0xff]
    %v3787 = vld [vmem:[#allocation5 + $0x178] sm:$0xff]
    %v3788 = vld [vmem:[#allocation5 + $0x180] sm:$0xff]
    %v3789 = vld [vmem:[#allocation5 + $0x188] sm:$0xff]
    %v3790 = vld [vmem:[#allocation5 + $0x190] sm:$0xff]
    %v3791 = vld [vmem:[#allocation5 + $0x198] sm:$0xff]
    %v3792 = vld [vmem:[#allocation5 + $0x1a0] sm:$0xff]
    %v3793 = vld [vmem:[#allocation5 + $0x1a8] sm:$0xff]
    %v3794 = vld [vmem:[#allocation5 + $0x1b0] sm:$0xff]
    %v3795 = vld [vmem:[#allocation5 + $0x1b8] sm:$0xff]
    %v3796 = vld [vmem:[#allocation5 + $0x1c0] sm:$0xff]
    %v3797 = vld [vmem:[#allocation5 + $0x1c8] sm:$0xff]
    %v3798 = vld [vmem:[#allocation5 + $0x1d0] sm:$0xff]
    %v3799 = vld [vmem:[#allocation5 + $0x1d8] sm:$0xff]
    %v3800 = vld [vmem:[#allocation5 + $0x1e0] sm:$0xff]
    %v3801 = vld [vmem:[#allocation5 + $0x1e8] sm:$0xff]
    %v3802 = vld [vmem:[#allocation5 + $0x1f0] sm:$0xff]
    %v3803 = vld [vmem:[#allocation5 + $0x1f8] sm:$0xff]
    %v3804 = vld [vmem:[#allocation5 + $0x200] sm:$0xff]
    %v3805 = vld [vmem:[#allocation5 + $0x208] sm:$0xff]
    %v3806 = vld [vmem:[#allocation5 + $0x210] sm:$0xff]
    %v3807 = vld [vmem:[#allocation5 + $0x218] sm:$0xff]
    %v3808 = vld [vmem:[#allocation5 + $0x220] sm:$0xff]
    %v3809 = vld [vmem:[#allocation5 + $0x228] sm:$0xff]
    %v3810 = vld [vmem:[#allocation5 + $0x230] sm:$0xff]
    %v3811 = vld [vmem:[#allocation5 + $0x238] sm:$0xff]
    %v3812 = vld [vmem:[#allocation5 + $0x240] sm:$0xff]
    %v3813 = vld [vmem:[#allocation5 + $0x248] sm:$0xff]
    %v3814 = vld [vmem:[#allocation5 + $0x250] sm:$0xff]
    %v3815 = vld [vmem:[#allocation5 + $0x258] sm:$0xff]
    %v3816 = vld [vmem:[#allocation5 + $0x260] sm:$0xff]
    %v3817 = vld [vmem:[#allocation5 + $0x268] sm:$0xff]
    %v3818 = vld [vmem:[#allocation5 + $0x270] sm:$0xff]
    %v3819 = vld [vmem:[#allocation5 + $0x278] sm:$0xff]
    %v3820 = vld [vmem:[#allocation5 + $0x280] sm:$0xff]
    %v3821 = vld [vmem:[#allocation5 + $0x288] sm:$0xff]
    %v3822 = vld [vmem:[#allocation5 + $0x290] sm:$0xff]
    %v3823 = vld [vmem:[#allocation5 + $0x298] sm:$0xff]
    %v3824 = vld [vmem:[#allocation5 + $0x2a0] sm:$0xff]
    %v3825 = vld [vmem:[#allocation5 + $0x2a8] sm:$0xff]
    %v3826 = vld [vmem:[#allocation5 + $0x2b0] sm:$0xff]
    %v3827 = vld [vmem:[#allocation5 + $0x2b8] sm:$0xff]
    %v3828 = vld [vmem:[#allocation5 + $0x2c0] sm:$0xff]
    %v3829 = vld [vmem:[#allocation5 + $0x2c8] sm:$0xff]
    %v3830 = vld [vmem:[#allocation5 + $0x2d0] sm:$0xff]
    %v3831 = vld [vmem:[#allocation5 + $0x2d8] sm:$0xff]
    %v3832 = vld [vmem:[#allocation5 + $0x2e0] sm:$0xff]
    %v3833 = vld [vmem:[#allocation5 + $0x2e8] sm:$0xff]
    %v3834 = vld [vmem:[#allocation5 + $0x2f0] sm:$0xff]
    %v3835 = vld [vmem:[#allocation5 + $0x2f8] sm:$0xff]
    %v3836 = vld [vmem:[#allocation5 + $0x300] sm:$0xff]
    %v3837 = vld [vmem:[#allocation5 + $0x308] sm:$0xff]
    %v3838 = vld [vmem:[#allocation5 + $0x310] sm:$0xff]
    %v3839 = vld [vmem:[#allocation5 + $0x318] sm:$0xff]
    %v3840 = vld [vmem:[#allocation5 + $0x320] sm:$0xff]
    %v3841 = vld [vmem:[#allocation5 + $0x328] sm:$0xff]
    %v3842 = vld [vmem:[#allocation5 + $0x330] sm:$0xff]
    %v3843 = vld [vmem:[#allocation5 + $0x338] sm:$0xff]
    %v3844 = vld [vmem:[#allocation5 + $0x340] sm:$0xff]
    %v3845 = vld [vmem:[#allocation5 + $0x348] sm:$0xff]
    %v3846 = vld [vmem:[#allocation5 + $0x350] sm:$0xff]
    %v3847 = vld [vmem:[#allocation5 + $0x358] sm:$0xff]
    %v3848 = vld [vmem:[#allocation5 + $0x360] sm:$0xff]
    %v3849 = vld [vmem:[#allocation5 + $0x368] sm:$0xff]
    %v3850 = vld [vmem:[#allocation5 + $0x370] sm:$0xff]
    %v3851 = vld [vmem:[#allocation5 + $0x378] sm:$0xff]
    %v3852 = vld [vmem:[#allocation5 + $0x380] sm:$0xff]
    %v3853 = vld [vmem:[#allocation5 + $0x388] sm:$0xff]
    %v3854 = vld [vmem:[#allocation5 + $0x390] sm:$0xff]
    %v3855 = vld [vmem:[#allocation5 + $0x398] sm:$0xff]
    %v3856 = vld [vmem:[#allocation5 + $0x3a0] sm:$0xff]
    %v3857 = vld [vmem:[#allocation5 + $0x3a8] sm:$0xff]
    %v3858 = vld [vmem:[#allocation5 + $0x3b0] sm:$0xff]
    %v3859 = vld [vmem:[#allocation5 + $0x3b8] sm:$0xff]
    %v3860 = vld [vmem:[#allocation5 + $0x3c0] sm:$0xff]
    %v3861 = vld [vmem:[#allocation5 + $0x3c8] sm:$0xff]
    %v3862 = vld [vmem:[#allocation5 + $0x3d0] sm:$0xff]
    %v3863 = vld [vmem:[#allocation5 + $0x3d8] sm:$0xff]
    %v3864 = vld [vmem:[#allocation5 + $0x3e0] sm:$0xff]
    %v3865 = vld [vmem:[#allocation5 + $0x3e8] sm:$0xff]
    %v3866 = vld [vmem:[#allocation5 + $0x3f0] sm:$0xff]
    %v3867 = vld [vmem:[#allocation5 + $0x3f8] sm:$0xff]
    %v3868 = vpack.c.bf16 %v3736, %v3736
    %v3869 = vpack.c.bf16 %v3737, %v3737
    %v3870 = vpack.c.bf16 %v3738, %v3738
    %v3871 = vpack.c.bf16 %v3739, %v3739
    %v3872 = vld [vmem:[%s20] sm:$0xf]
    %v3874 = vperm.slane %v3872, 0
    %v3875 = vperm.slane %v3872, 1
    %v3876 = vperm.slane %v3872, 2
    %v3877 = vperm.slane %v3872, 3
    %v4010 = vunpack.c.l.b16 %v3740
    %v4011 = vunpack.c.h.b16 %v3740
    %v4012 = vunpack.c.l.b16 %v3741
    %v4013 = vunpack.c.h.b16 %v3741
    %v4014 = vunpack.c.l.b16 %v3742
    %v4015 = vunpack.c.h.b16 %v3742
    %v4016 = vunpack.c.l.b16 %v3743
    %v4017 = vunpack.c.h.b16 %v3743
    %v4018 = vunpack.c.l.b16 %v3744
    %v4019 = vunpack.c.h.b16 %v3744
    %v4020 = vunpack.c.l.b16 %v3745
    %v4021 = vunpack.c.h.b16 %v3745
    %v4022 = vunpack.c.l.b16 %v3746
    %v4023 = vunpack.c.h.b16 %v3746
    %v4024 = vunpack.c.l.b16 %v3747
    %v4025 = vunpack.c.h.b16 %v3747
    %v4026 = vunpack.c.l.b16 %v3748
    %v4027 = vunpack.c.h.b16 %v3748
    %v4028 = vunpack.c.l.b16 %v3749
    %v4029 = vunpack.c.h.b16 %v3749
    %v4030 = vunpack.c.l.b16 %v3750
    %v4031 = vunpack.c.h.b16 %v3750
    %v4032 = vunpack.c.l.b16 %v3751
    %v4033 = vunpack.c.h.b16 %v3751
    %v4034 = vunpack.c.l.b16 %v3752
    %v4035 = vunpack.c.h.b16 %v3752
    %v4036 = vunpack.c.l.b16 %v3753
    %v4037 = vunpack.c.h.b16 %v3753
    %v4038 = vunpack.c.l.b16 %v3754
    %v4039 = vunpack.c.h.b16 %v3754
    %v4040 = vunpack.c.l.b16 %v3755
    %v4041 = vunpack.c.h.b16 %v3755
    %v4042 = vunpack.c.l.b16 %v3756
    %v4043 = vunpack.c.h.b16 %v3756
    %v4044 = vunpack.c.l.b16 %v3757
    %v4045 = vunpack.c.h.b16 %v3757
    %v4046 = vunpack.c.l.b16 %v3758
    %v4047 = vunpack.c.h.b16 %v3758
    %v4048 = vunpack.c.l.b16 %v3759
    %v4049 = vunpack.c.h.b16 %v3759
    %v4050 = vunpack.c.l.b16 %v3760
    %v4051 = vunpack.c.h.b16 %v3760
    %v4052 = vunpack.c.l.b16 %v3761
    %v4053 = vunpack.c.h.b16 %v3761
    %v4054 = vunpack.c.l.b16 %v3762
    %v4055 = vunpack.c.h.b16 %v3762
    %v4056 = vunpack.c.l.b16 %v3763
    %v4057 = vunpack.c.h.b16 %v3763
    %v4058 = vunpack.c.l.b16 %v3764
    %v4059 = vunpack.c.h.b16 %v3764
    %v4060 = vunpack.c.l.b16 %v3765
    %v4061 = vunpack.c.h.b16 %v3765
    %v4062 = vunpack.c.l.b16 %v3766
    %v4063 = vunpack.c.h.b16 %v3766
    %v4064 = vunpack.c.l.b16 %v3767
    %v4065 = vunpack.c.h.b16 %v3767
    %v4066 = vunpack.c.l.b16 %v3768
    %v4067 = vunpack.c.h.b16 %v3768
    %v4068 = vunpack.c.l.b16 %v3769
    %v4069 = vunpack.c.h.b16 %v3769
    %v4070 = vunpack.c.l.b16 %v3770
    %v4071 = vunpack.c.h.b16 %v3770
    %v4072 = vunpack.c.l.b16 %v3771
    %v4073 = vunpack.c.h.b16 %v3771
    %v4074 = vunpack.c.l.b16 %v3772
    %v4075 = vunpack.c.h.b16 %v3772
    %v4076 = vunpack.c.l.b16 %v3773
    %v4077 = vunpack.c.h.b16 %v3773
    %v4078 = vunpack.c.l.b16 %v3774
    %v4079 = vunpack.c.h.b16 %v3774
    %v4080 = vunpack.c.l.b16 %v3775
    %v4081 = vunpack.c.h.b16 %v3775
    %v4082 = vunpack.c.l.b16 %v3776
    %v4083 = vunpack.c.h.b16 %v3776
    %v4084 = vunpack.c.l.b16 %v3777
    %v4085 = vunpack.c.h.b16 %v3777
    %v4086 = vunpack.c.l.b16 %v3778
    %v4087 = vunpack.c.h.b16 %v3778
    %v4088 = vunpack.c.l.b16 %v3779
    %v4089 = vunpack.c.h.b16 %v3779
    %v4090 = vunpack.c.l.b16 %v3780
    %v4091 = vunpack.c.h.b16 %v3780
    %v4092 = vunpack.c.l.b16 %v3781
    %v4093 = vunpack.c.h.b16 %v3781
    %v4094 = vunpack.c.l.b16 %v3782
    %v4095 = vunpack.c.h.b16 %v3782
    %v4096 = vunpack.c.l.b16 %v3783
    %v4097 = vunpack.c.h.b16 %v3783
    %v4098 = vunpack.c.l.b16 %v3784
    %v4099 = vunpack.c.h.b16 %v3784
    %v4100 = vunpack.c.l.b16 %v3785
    %v4101 = vunpack.c.h.b16 %v3785
    %v4102 = vunpack.c.l.b16 %v3786
    %v4103 = vunpack.c.h.b16 %v3786
    %v4104 = vunpack.c.l.b16 %v3787
    %v4105 = vunpack.c.h.b16 %v3787
    %v4106 = vunpack.c.l.b16 %v3788
    %v4107 = vunpack.c.h.b16 %v3788
    %v4108 = vunpack.c.l.b16 %v3789
    %v4109 = vunpack.c.h.b16 %v3789
    %v4110 = vunpack.c.l.b16 %v3790
    %v4111 = vunpack.c.h.b16 %v3790
    %v4112 = vunpack.c.l.b16 %v3791
    %v4113 = vunpack.c.h.b16 %v3791
    %v4114 = vunpack.c.l.b16 %v3792
    %v4115 = vunpack.c.h.b16 %v3792
    %v4116 = vunpack.c.l.b16 %v3793
    %v4117 = vunpack.c.h.b16 %v3793
    %v4118 = vunpack.c.l.b16 %v3794
    %v4119 = vunpack.c.h.b16 %v3794
    %v4120 = vunpack.c.l.b16 %v3795
    %v4121 = vunpack.c.h.b16 %v3795
    %v4122 = vunpack.c.l.b16 %v3796
    %v4123 = vunpack.c.h.b16 %v3796
    %v4124 = vunpack.c.l.b16 %v3797
    %v4125 = vunpack.c.h.b16 %v3797
    %v4126 = vunpack.c.l.b16 %v3798
    %v4127 = vunpack.c.h.b16 %v3798
    %v4128 = vunpack.c.l.b16 %v3799
    %v4129 = vunpack.c.h.b16 %v3799
    %v4130 = vunpack.c.l.b16 %v3800
    %v4131 = vunpack.c.h.b16 %v3800
    %v4132 = vunpack.c.l.b16 %v3801
    %v4133 = vunpack.c.h.b16 %v3801
    %v4134 = vunpack.c.l.b16 %v3802
    %v4135 = vunpack.c.h.b16 %v3802
    %v4136 = vunpack.c.l.b16 %v3803
    %v4137 = vunpack.c.h.b16 %v3803
    %v4138 = vunpack.c.l.b16 %v3804
    %v4139 = vunpack.c.h.b16 %v3804
    %v4140 = vunpack.c.l.b16 %v3805
    %v4141 = vunpack.c.h.b16 %v3805
    %v4142 = vunpack.c.l.b16 %v3806
    %v4143 = vunpack.c.h.b16 %v3806
    %v4144 = vunpack.c.l.b16 %v3807
    %v4145 = vunpack.c.h.b16 %v3807
    %v4146 = vunpack.c.l.b16 %v3808
    %v4147 = vunpack.c.h.b16 %v3808
    %v4148 = vunpack.c.l.b16 %v3809
    %v4149 = vunpack.c.h.b16 %v3809
    %v4150 = vunpack.c.l.b16 %v3810
    %v4151 = vunpack.c.h.b16 %v3810
    %v4152 = vunpack.c.l.b16 %v3811
    %v4153 = vunpack.c.h.b16 %v3811
    %v4154 = vunpack.c.l.b16 %v3812
    %v4155 = vunpack.c.h.b16 %v3812
    %v4156 = vunpack.c.l.b16 %v3813
    %v4157 = vunpack.c.h.b16 %v3813
    %v4158 = vunpack.c.l.b16 %v3814
    %v4159 = vunpack.c.h.b16 %v3814
    %v4160 = vunpack.c.l.b16 %v3815
    %v4161 = vunpack.c.h.b16 %v3815
    %v4162 = vunpack.c.l.b16 %v3816
    %v4163 = vunpack.c.h.b16 %v3816
    %v4164 = vunpack.c.l.b16 %v3817
    %v4165 = vunpack.c.h.b16 %v3817
    %v4166 = vunpack.c.l.b16 %v3818
    %v4167 = vunpack.c.h.b16 %v3818
    %v4168 = vunpack.c.l.b16 %v3819
    %v4169 = vunpack.c.h.b16 %v3819
    %v4170 = vunpack.c.l.b16 %v3820
    %v4171 = vunpack.c.h.b16 %v3820
    %v4172 = vunpack.c.l.b16 %v3821
    %v4173 = vunpack.c.h.b16 %v3821
    %v4174 = vunpack.c.l.b16 %v3822
    %v4175 = vunpack.c.h.b16 %v3822
    %v4176 = vunpack.c.l.b16 %v3823
    %v4177 = vunpack.c.h.b16 %v3823
    %v4178 = vunpack.c.l.b16 %v3824
    %v4179 = vunpack.c.h.b16 %v3824
    %v4180 = vunpack.c.l.b16 %v3825
    %v4181 = vunpack.c.h.b16 %v3825
    %v4182 = vunpack.c.l.b16 %v3826
    %v4183 = vunpack.c.h.b16 %v3826
    %v4184 = vunpack.c.l.b16 %v3827
    %v4185 = vunpack.c.h.b16 %v3827
    %v4186 = vunpack.c.l.b16 %v3828
    %v4187 = vunpack.c.h.b16 %v3828
    %v4188 = vunpack.c.l.b16 %v3829
    %v4189 = vunpack.c.h.b16 %v3829
    %v4190 = vunpack.c.l.b16 %v3830
    %v4191 = vunpack.c.h.b16 %v3830
    %v4192 = vunpack.c.l.b16 %v3831
    %v4193 = vunpack.c.h.b16 %v3831
    %v4194 = vunpack.c.l.b16 %v3832
    %v4195 = vunpack.c.h.b16 %v3832
    %v4196 = vunpack.c.l.b16 %v3833
    %v4197 = vunpack.c.h.b16 %v3833
    %v4198 = vunpack.c.l.b16 %v3834
    %v4199 = vunpack.c.h.b16 %v3834
    %v4200 = vunpack.c.l.b16 %v3835
    %v4201 = vunpack.c.h.b16 %v3835
    %v4202 = vunpack.c.l.b16 %v3836
    %v4203 = vunpack.c.h.b16 %v3836
    %v4204 = vunpack.c.l.b16 %v3837
    %v4205 = vunpack.c.h.b16 %v3837
    %v4206 = vunpack.c.l.b16 %v3838
    %v4207 = vunpack.c.h.b16 %v3838
    %v4208 = vunpack.c.l.b16 %v3839
    %v4209 = vunpack.c.h.b16 %v3839
    %v4210 = vunpack.c.l.b16 %v3840
    %v4211 = vunpack.c.h.b16 %v3840
    %v4212 = vunpack.c.l.b16 %v3841
    %v4213 = vunpack.c.h.b16 %v3841
    %v4214 = vunpack.c.l.b16 %v3842
    %v4215 = vunpack.c.h.b16 %v3842
    %v4216 = vunpack.c.l.b16 %v3843
    %v4217 = vunpack.c.h.b16 %v3843
    %v4218 = vunpack.c.l.b16 %v3844
    %v4219 = vunpack.c.h.b16 %v3844
    %v4220 = vunpack.c.l.b16 %v3845
    %v4221 = vunpack.c.h.b16 %v3845
    %v4222 = vunpack.c.l.b16 %v3846
    %v4223 = vunpack.c.h.b16 %v3846
    %v4224 = vunpack.c.l.b16 %v3847
    %v4225 = vunpack.c.h.b16 %v3847
    %v4226 = vunpack.c.l.b16 %v3848
    %v4227 = vunpack.c.h.b16 %v3848
    %v4228 = vunpack.c.l.b16 %v3849
    %v4229 = vunpack.c.h.b16 %v3849
    %v4230 = vunpack.c.l.b16 %v3850
    %v4231 = vunpack.c.h.b16 %v3850
    %v4232 = vunpack.c.l.b16 %v3851
    %v4233 = vunpack.c.h.b16 %v3851
    %v4234 = vunpack.c.l.b16 %v3852
    %v4235 = vunpack.c.h.b16 %v3852
    %v4236 = vunpack.c.l.b16 %v3853
    %v4237 = vunpack.c.h.b16 %v3853
    %v4238 = vunpack.c.l.b16 %v3854
    %v4239 = vunpack.c.h.b16 %v3854
    %v4240 = vunpack.c.l.b16 %v3855
    %v4241 = vunpack.c.h.b16 %v3855
    %v4242 = vunpack.c.l.b16 %v3856
    %v4243 = vunpack.c.h.b16 %v3856
    %v4244 = vunpack.c.l.b16 %v3857
    %v4245 = vunpack.c.h.b16 %v3857
    %v4246 = vunpack.c.l.b16 %v3858
    %v4247 = vunpack.c.h.b16 %v3858
    %v4248 = vunpack.c.l.b16 %v3859
    %v4249 = vunpack.c.h.b16 %v3859
    %v4250 = vunpack.c.l.b16 %v3860
    %v4251 = vunpack.c.h.b16 %v3860
    %v4252 = vunpack.c.l.b16 %v3861
    %v4253 = vunpack.c.h.b16 %v3861
    %v4254 = vunpack.c.l.b16 %v3862
    %v4255 = vunpack.c.h.b16 %v3862
    %v4256 = vunpack.c.l.b16 %v3863
    %v4257 = vunpack.c.h.b16 %v3863
    %v4258 = vunpack.c.l.b16 %v3864
    %v4259 = vunpack.c.h.b16 %v3864
    %v4260 = vunpack.c.l.b16 %v3865
    %v4261 = vunpack.c.h.b16 %v3865
    %v4262 = vunpack.c.l.b16 %v3866
    %v4263 = vunpack.c.h.b16 %v3866
    %v4264 = vunpack.c.l.b16 %v3867
    %v4265 = vunpack.c.h.b16 %v3867
    %v4266 = vpack.c.b16 %v4014, %v4010
    %v4267 = vpack.c.b16 %v4015, %v4011
    %v4268 = vpack.c.b16 %v4016, %v4012
    %v4269 = vpack.c.b16 %v4017, %v4013
    %v4270 = vpack.c.b16 %v4022, %v4018
    %v4271 = vpack.c.b16 %v4023, %v4019
    %v4272 = vpack.c.b16 %v4024, %v4020
    %v4273 = vpack.c.b16 %v4025, %v4021
    %v4274 = vpack.c.b16 %v4030, %v4026
    %v4275 = vpack.c.b16 %v4031, %v4027
    %v4276 = vpack.c.b16 %v4032, %v4028
    %v4277 = vpack.c.b16 %v4033, %v4029
    %v4278 = vpack.c.b16 %v4038, %v4034
    %v4279 = vpack.c.b16 %v4039, %v4035
    %v4280 = vpack.c.b16 %v4040, %v4036
    %v4281 = vpack.c.b16 %v4041, %v4037
    %v4282 = vpack.c.b16 %v4046, %v4042
    %v4283 = vpack.c.b16 %v4047, %v4043
    %v4284 = vpack.c.b16 %v4048, %v4044
    %v4285 = vpack.c.b16 %v4049, %v4045
    %v4286 = vpack.c.b16 %v4054, %v4050
    %v4287 = vpack.c.b16 %v4055, %v4051
    %v4288 = vpack.c.b16 %v4056, %v4052
    %v4289 = vpack.c.b16 %v4057, %v4053
    %v4290 = vpack.c.b16 %v4062, %v4058
    %v4291 = vpack.c.b16 %v4063, %v4059
    %v4292 = vpack.c.b16 %v4064, %v4060
    %v4293 = vpack.c.b16 %v4065, %v4061
    %v4294 = vpack.c.b16 %v4070, %v4066
    %v4295 = vpack.c.b16 %v4071, %v4067
    %v4296 = vpack.c.b16 %v4072, %v4068
    %v4297 = vpack.c.b16 %v4073, %v4069
    %v4298 = vpack.c.b16 %v4078, %v4074
    %v4299 = vpack.c.b16 %v4079, %v4075
    %v4300 = vpack.c.b16 %v4080, %v4076
    %v4301 = vpack.c.b16 %v4081, %v4077
    %v4302 = vpack.c.b16 %v4086, %v4082
    %v4303 = vpack.c.b16 %v4087, %v4083
    %v4304 = vpack.c.b16 %v4088, %v4084
    %v4305 = vpack.c.b16 %v4089, %v4085
    %v4306 = vpack.c.b16 %v4094, %v4090
    %v4307 = vpack.c.b16 %v4095, %v4091
    %v4308 = vpack.c.b16 %v4096, %v4092
    %v4309 = vpack.c.b16 %v4097, %v4093
    %v4310 = vpack.c.b16 %v4102, %v4098
    %v4311 = vpack.c.b16 %v4103, %v4099
    %v4312 = vpack.c.b16 %v4104, %v4100
    %v4313 = vpack.c.b16 %v4105, %v4101
    %v4314 = vpack.c.b16 %v4110, %v4106
    %v4315 = vpack.c.b16 %v4111, %v4107
    %v4316 = vpack.c.b16 %v4112, %v4108
    %v4317 = vpack.c.b16 %v4113, %v4109
    %v4318 = vpack.c.b16 %v4118, %v4114
    %v4319 = vpack.c.b16 %v4119, %v4115
    %v4320 = vpack.c.b16 %v4120, %v4116
    %v4321 = vpack.c.b16 %v4121, %v4117
    %v4322 = vpack.c.b16 %v4126, %v4122
    %v4323 = vpack.c.b16 %v4127, %v4123
    %v4324 = vpack.c.b16 %v4128, %v4124
    %v4325 = vpack.c.b16 %v4129, %v4125
    %v4326 = vpack.c.b16 %v4134, %v4130
    %v4327 = vpack.c.b16 %v4135, %v4131
    %v4328 = vpack.c.b16 %v4136, %v4132
    %v4329 = vpack.c.b16 %v4137, %v4133
    %v4330 = vpack.c.b16 %v4142, %v4138
    %v4331 = vpack.c.b16 %v4143, %v4139
    %v4332 = vpack.c.b16 %v4144, %v4140
    %v4333 = vpack.c.b16 %v4145, %v4141
    %v4334 = vpack.c.b16 %v4150, %v4146
    %v4335 = vpack.c.b16 %v4151, %v4147
    %v4336 = vpack.c.b16 %v4152, %v4148
    %v4337 = vpack.c.b16 %v4153, %v4149
    %v4338 = vpack.c.b16 %v4158, %v4154
    %v4339 = vpack.c.b16 %v4159, %v4155
    %v4340 = vpack.c.b16 %v4160, %v4156
    %v4341 = vpack.c.b16 %v4161, %v4157
    %v4342 = vpack.c.b16 %v4166, %v4162
    %v4343 = vpack.c.b16 %v4167, %v4163
    %v4344 = vpack.c.b16 %v4168, %v4164
    %v4345 = vpack.c.b16 %v4169, %v4165
    %v4346 = vpack.c.b16 %v4174, %v4170
    %v4347 = vpack.c.b16 %v4175, %v4171
    %v4348 = vpack.c.b16 %v4176, %v4172
    %v4349 = vpack.c.b16 %v4177, %v4173
    %v4350 = vpack.c.b16 %v4182, %v4178
    %v4351 = vpack.c.b16 %v4183, %v4179
    %v4352 = vpack.c.b16 %v4184, %v4180
    %v4353 = vpack.c.b16 %v4185, %v4181
    %v4354 = vpack.c.b16 %v4190, %v4186
    %v4355 = vpack.c.b16 %v4191, %v4187
    %v4356 = vpack.c.b16 %v4192, %v4188
    %v4357 = vpack.c.b16 %v4193, %v4189
    %v4358 = vpack.c.b16 %v4198, %v4194
    %v4359 = vpack.c.b16 %v4199, %v4195
    %v4360 = vpack.c.b16 %v4200, %v4196
    %v4361 = vpack.c.b16 %v4201, %v4197
    %v4362 = vpack.c.b16 %v4206, %v4202
    %v4363 = vpack.c.b16 %v4207, %v4203
    %v4364 = vpack.c.b16 %v4208, %v4204
    %v4365 = vpack.c.b16 %v4209, %v4205
    %v4366 = vpack.c.b16 %v4214, %v4210
    %v4367 = vpack.c.b16 %v4215, %v4211
    %v4368 = vpack.c.b16 %v4216, %v4212
    %v4369 = vpack.c.b16 %v4217, %v4213
    %v4370 = vpack.c.b16 %v4222, %v4218
    %v4371 = vpack.c.b16 %v4223, %v4219
    %v4372 = vpack.c.b16 %v4224, %v4220
    %v4373 = vpack.c.b16 %v4225, %v4221
    %v4374 = vpack.c.b16 %v4230, %v4226
    %v4375 = vpack.c.b16 %v4231, %v4227
    %v4376 = vpack.c.b16 %v4232, %v4228
    %v4377 = vpack.c.b16 %v4233, %v4229
    %v4378 = vpack.c.b16 %v4238, %v4234
    %v4379 = vpack.c.b16 %v4239, %v4235
    %v4380 = vpack.c.b16 %v4240, %v4236
    %v4381 = vpack.c.b16 %v4241, %v4237
    %v4382 = vpack.c.b16 %v4246, %v4242
    %v4383 = vpack.c.b16 %v4247, %v4243
    %v4384 = vpack.c.b16 %v4248, %v4244
    %v4385 = vpack.c.b16 %v4249, %v4245
    %v4386 = vpack.c.b16 %v4254, %v4250
    %v4387 = vpack.c.b16 %v4255, %v4251
    %v4388 = vpack.c.b16 %v4256, %v4252
    %v4389 = vpack.c.b16 %v4257, %v4253
    %v4390 = vpack.c.b16 %v4262, %v4258
    %v4391 = vpack.c.b16 %v4263, %v4259
    %v4392 = vpack.c.b16 %v4264, %v4260
    %v4393 = vpack.c.b16 %v4265, %v4261
    %4522 = vmatpush.bf16.msra.mxu0 %v4294
    %4523 = vmatpush.bf16.msra.mxu0 %v4290
    %4524 = vmatpush.bf16.msra.mxu0 %v4286
    %4525 = vmatpush.bf16.msra.mxu0 %v4282
    %4526 = vmatpush.bf16.msra.mxu0 %v4278
    %4527 = vmatpush.bf16.msra.mxu0 %v4274
    %4528 = vmatpush.bf16.msra.mxu0 %v4270
    %4529 = vmatpush.bf16.msra.mxu0 %v4266
    %4530 = vmatmul.bf16.gmra.mxu0 %v3868
    %v4531 = vpop.f32.mrf.mxu0
    %v4532 = vadd.f32 %v3874, %v4531
    %v4533 = vpop.f32.mrf.mxu0
    %4534 = vdwg.mxu0
    %4535 = vmatpush.bf16.msra.mxu0 %v4326
    %4536 = vmatpush.bf16.msra.mxu0 %v4322
    %4537 = vmatpush.bf16.msra.mxu0 %v4318
    %4538 = vmatpush.bf16.msra.mxu0 %v4314
    %4539 = vmatpush.bf16.msra.mxu0 %v4310
    %4540 = vmatpush.bf16.msra.mxu0 %v4306
    %4541 = vmatpush.bf16.msra.mxu0 %v4302
    %4542 = vmatpush.bf16.msra.mxu0 %v4298
    %4543 = vmatmul.bf16.gmra.mxu0 %v3869
    %v4544 = vpop.f32.mrf.mxu0
    %v4545 = vadd.f32 %v4532, %v4544
    %v4546 = vpop.f32.mrf.mxu0
    %4547 = vdwg.mxu0
    %4548 = vmatpush.bf16.msra.mxu0 %v4358
    %4549 = vmatpush.bf16.msra.mxu0 %v4354
    %4550 = vmatpush.bf16.msra.mxu0 %v4350
    %4551 = vmatpush.bf16.msra.mxu0 %v4346
    %4552 = vmatpush.bf16.msra.mxu0 %v4342
    %4553 = vmatpush.bf16.msra.mxu0 %v4338
    %4554 = vmatpush.bf16.msra.mxu0 %v4334
    %4555 = vmatpush.bf16.msra.mxu0 %v4330
    %4556 = vmatmul.bf16.gmra.mxu0 %v3870
    %v4557 = vpop.f32.mrf.mxu0
    %v4558 = vadd.f32 %v4545, %v4557
    %v4559 = vpop.f32.mrf.mxu0
    %4560 = vdwg.mxu0
    %4561 = vmatpush.bf16.msra.mxu0 %v4390
    %4562 = vmatpush.bf16.msra.mxu0 %v4386
    %4563 = vmatpush.bf16.msra.mxu0 %v4382
    %4564 = vmatpush.bf16.msra.mxu0 %v4378
    %4565 = vmatpush.bf16.msra.mxu0 %v4374
    %4566 = vmatpush.bf16.msra.mxu0 %v4370
    %4567 = vmatpush.bf16.msra.mxu0 %v4366
    %4568 = vmatpush.bf16.msra.mxu0 %v4362
    %4569 = vmatmul.bf16.gmra.mxu0 %v3871
    %v4570 = vpop.f32.mrf.mxu0
    %v4571 = vadd.f32 %v4558, %v4570
    %v4572 = vpop.f32.mrf.mxu0
    %4573 = vdwg.mxu0
    %4574 = vmatpush.bf16.msra.mxu0 %v4295
    %4575 = vmatpush.bf16.msra.mxu0 %v4291
    %4576 = vmatpush.bf16.msra.mxu0 %v4287
    %4577 = vmatpush.bf16.msra.mxu0 %v4283
    %4578 = vmatpush.bf16.msra.mxu0 %v4279
    %4579 = vmatpush.bf16.msra.mxu0 %v4275
    %4580 = vmatpush.bf16.msra.mxu0 %v4271
    %4581 = vmatpush.bf16.msra.mxu0 %v4267
    %4582 = vmatmul.bf16.gmra.mxu0 %v3868
    %v4583 = vpop.f32.mrf.mxu0
    %v4584 = vadd.f32 %v3875, %v4583
    %v4585 = vpop.f32.mrf.mxu0
    %4586 = vdwg.mxu0
    %4587 = vmatpush.bf16.msra.mxu0 %v4327
    %4588 = vmatpush.bf16.msra.mxu0 %v4323
    %4589 = vmatpush.bf16.msra.mxu0 %v4319
    %4590 = vmatpush.bf16.msra.mxu0 %v4315
    %4591 = vmatpush.bf16.msra.mxu0 %v4311
    %4592 = vmatpush.bf16.msra.mxu0 %v4307
    %4593 = vmatpush.bf16.msra.mxu0 %v4303
    %4594 = vmatpush.bf16.msra.mxu0 %v4299
    %4595 = vmatmul.bf16.gmra.mxu0 %v3869
    %v4596 = vpop.f32.mrf.mxu0
    %v4597 = vadd.f32 %v4584, %v4596
    %v4598 = vpop.f32.mrf.mxu0
    %4599 = vdwg.mxu0
    %4600 = vmatpush.bf16.msra.mxu0 %v4359
    %4601 = vmatpush.bf16.msra.mxu0 %v4355
    %4602 = vmatpush.bf16.msra.mxu0 %v4351
    %4603 = vmatpush.bf16.msra.mxu0 %v4347
    %4604 = vmatpush.bf16.msra.mxu0 %v4343
    %4605 = vmatpush.bf16.msra.mxu0 %v4339
    %4606 = vmatpush.bf16.msra.mxu0 %v4335
    %4607 = vmatpush.bf16.msra.mxu0 %v4331
    %4608 = vmatmul.bf16.gmra.mxu0 %v3870
    %v4609 = vpop.f32.mrf.mxu0
    %v4610 = vadd.f32 %v4597, %v4609
    %v4611 = vpop.f32.mrf.mxu0
    %4612 = vdwg.mxu0
    %4613 = vmatpush.bf16.msra.mxu0 %v4391
    %4614 = vmatpush.bf16.msra.mxu0 %v4387
    %4615 = vmatpush.bf16.msra.mxu0 %v4383
    %4616 = vmatpush.bf16.msra.mxu0 %v4379
    %4617 = vmatpush.bf16.msra.mxu0 %v4375
    %4618 = vmatpush.bf16.msra.mxu0 %v4371
    %4619 = vmatpush.bf16.msra.mxu0 %v4367
    %4620 = vmatpush.bf16.msra.mxu0 %v4363
    %4621 = vmatmul.bf16.gmra.mxu0 %v3871
    %v4622 = vpop.f32.mrf.mxu0
    %v4623 = vadd.f32 %v4610, %v4622
    %v4624 = vpop.f32.mrf.mxu0
    %4625 = vdwg.mxu0
    %4626 = vmatpush.bf16.msra.mxu0 %v4296
    %4627 = vmatpush.bf16.msra.mxu0 %v4292
    %4628 = vmatpush.bf16.msra.mxu0 %v4288
    %4629 = vmatpush.bf16.msra.mxu0 %v4284
    %4630 = vmatpush.bf16.msra.mxu0 %v4280
    %4631 = vmatpush.bf16.msra.mxu0 %v4276
    %4632 = vmatpush.bf16.msra.mxu0 %v4272
    %4633 = vmatpush.bf16.msra.mxu0 %v4268
    %4634 = vmatmul.bf16.gmra.mxu0 %v3868
    %v4635 = vpop.f32.mrf.mxu0
    %v4636 = vadd.f32 %v3876, %v4635
    %v4637 = vpop.f32.mrf.mxu0
    %4638 = vdwg.mxu0
    %4639 = vmatpush.bf16.msra.mxu0 %v4328
    %4640 = vmatpush.bf16.msra.mxu0 %v4324
    %4641 = vmatpush.bf16.msra.mxu0 %v4320
    %4642 = vmatpush.bf16.msra.mxu0 %v4316
    %4643 = vmatpush.bf16.msra.mxu0 %v4312
    %4644 = vmatpush.bf16.msra.mxu0 %v4308
    %4645 = vmatpush.bf16.msra.mxu0 %v4304
    %4646 = vmatpush.bf16.msra.mxu0 %v4300
    %4647 = vmatmul.bf16.gmra.mxu0 %v3869
    %v4648 = vpop.f32.mrf.mxu0
    %v4649 = vadd.f32 %v4636, %v4648
    %v4650 = vpop.f32.mrf.mxu0
    %4651 = vdwg.mxu0
    %4652 = vmatpush.bf16.msra.mxu0 %v4360
    %4653 = vmatpush.bf16.msra.mxu0 %v4356
    %4654 = vmatpush.bf16.msra.mxu0 %v4352
    %4655 = vmatpush.bf16.msra.mxu0 %v4348
    %4656 = vmatpush.bf16.msra.mxu0 %v4344
    %4657 = vmatpush.bf16.msra.mxu0 %v4340
    %4658 = vmatpush.bf16.msra.mxu0 %v4336
    %4659 = vmatpush.bf16.msra.mxu0 %v4332
    %4660 = vmatmul.bf16.gmra.mxu0 %v3870
    %v4661 = vpop.f32.mrf.mxu0
    %v4662 = vadd.f32 %v4649, %v4661
    %v4663 = vpop.f32.mrf.mxu0
    %4664 = vdwg.mxu0
    %4665 = vmatpush.bf16.msra.mxu0 %v4392
    %4666 = vmatpush.bf16.msra.mxu0 %v4388
    %4667 = vmatpush.bf16.msra.mxu0 %v4384
    %4668 = vmatpush.bf16.msra.mxu0 %v4380
    %4669 = vmatpush.bf16.msra.mxu0 %v4376
    %4670 = vmatpush.bf16.msra.mxu0 %v4372
    %4671 = vmatpush.bf16.msra.mxu0 %v4368
    %4672 = vmatpush.bf16.msra.mxu0 %v4364
    %4673 = vmatmul.bf16.gmra.mxu0 %v3871
    %v4674 = vpop.f32.mrf.mxu0
    %v4675 = vadd.f32 %v4662, %v4674
    %v4676 = vpop.f32.mrf.mxu0
    %4677 = vdwg.mxu0
    %4678 = vmatpush.bf16.msra.mxu0 %v4297
    %4679 = vmatpush.bf16.msra.mxu0 %v4293
    %4680 = vmatpush.bf16.msra.mxu0 %v4289
    %4681 = vmatpush.bf16.msra.mxu0 %v4285
    %4682 = vmatpush.bf16.msra.mxu0 %v4281
    %4683 = vmatpush.bf16.msra.mxu0 %v4277
    %4684 = vmatpush.bf16.msra.mxu0 %v4273
    %4685 = vmatpush.bf16.msra.mxu0 %v4269
    %4686 = vmatmul.bf16.gmra.mxu0 %v3868
    %v4687 = vpop.f32.mrf.mxu0
    %v4688 = vadd.f32 %v3877, %v4687
    %v4689 = vpop.f32.mrf.mxu0
    %4690 = vdwg.mxu0
    %4691 = vmatpush.bf16.msra.mxu0 %v4329
    %4692 = vmatpush.bf16.msra.mxu0 %v4325
    %4693 = vmatpush.bf16.msra.mxu0 %v4321
    %4694 = vmatpush.bf16.msra.mxu0 %v4317
    %4695 = vmatpush.bf16.msra.mxu0 %v4313
    %4696 = vmatpush.bf16.msra.mxu0 %v4309
    %4697 = vmatpush.bf16.msra.mxu0 %v4305
    %4698 = vmatpush.bf16.msra.mxu0 %v4301
    %4699 = vmatmul.bf16.gmra.mxu0 %v3869
    %v4700 = vpop.f32.mrf.mxu0
    %v4701 = vadd.f32 %v4688, %v4700
    %v4702 = vpop.f32.mrf.mxu0
    %4703 = vdwg.mxu0
    %4704 = vmatpush.bf16.msra.mxu0 %v4361
    %4705 = vmatpush.bf16.msra.mxu0 %v4357
    %4706 = vmatpush.bf16.msra.mxu0 %v4353
    %4707 = vmatpush.bf16.msra.mxu0 %v4349
    %4708 = vmatpush.bf16.msra.mxu0 %v4345
    %4709 = vmatpush.bf16.msra.mxu0 %v4341
    %4710 = vmatpush.bf16.msra.mxu0 %v4337
    %4711 = vmatpush.bf16.msra.mxu0 %v4333
    %4712 = vmatmul.bf16.gmra.mxu0 %v3870
    %v4713 = vpop.f32.mrf.mxu0
    %v4714 = vadd.f32 %v4701, %v4713
    %v4715 = vpop.f32.mrf.mxu0
    %4716 = vdwg.mxu0
    %4717 = vmatpush.bf16.msra.mxu0 %v4393
    %4718 = vmatpush.bf16.msra.mxu0 %v4389
    %4719 = vmatpush.bf16.msra.mxu0 %v4385
    %4720 = vmatpush.bf16.msra.mxu0 %v4381
    %4721 = vmatpush.bf16.msra.mxu0 %v4377
    %4722 = vmatpush.bf16.msra.mxu0 %v4373
    %4723 = vmatpush.bf16.msra.mxu0 %v4369
    %4724 = vmatpush.bf16.msra.mxu0 %v4365
    %4725 = vmatmul.bf16.gmra.mxu0 %v3871
    %v4726 = vpop.f32.mrf.mxu0
    %v4727 = vadd.f32 %v4714, %v4726
    %v4728 = vpop.f32.mrf.mxu0
    %4729 = vdwg.mxu0
    %v4730 = vmul.f32 %v4571, 0.2
    %v4731 = vmul.f32 %v4623, 0.2
    %v4732 = vmul.f32 %v4675, 0.2
    %v4733 = vmul.f32 %v4727, 0.2
    %v4734 = vmax.f32 %v4571, %v4730
    %v4735 = vmax.f32 %v4623, %v4731
    %v4736 = vmax.f32 %v4675, %v4732
    %v4737 = vmax.f32 %v4727, %v4733
    %v4738 = vld [vmem:[#allocation7] sm:$0xff]
    %v4739 = vld [vmem:[#allocation7 + $0x8] sm:$0xff]
    %v4740 = vld [vmem:[#allocation7 + $0x10] sm:$0xff]
    %v4741 = vld [vmem:[#allocation7 + $0x18] sm:$0xff]
    %v4742 = vld [vmem:[#allocation7 + $0x20] sm:$0xff]
    %v4743 = vld [vmem:[#allocation7 + $0x28] sm:$0xff]
    %v4744 = vld [vmem:[#allocation7 + $0x30] sm:$0xff]
    %v4745 = vld [vmem:[#allocation7 + $0x38] sm:$0xff]
    %v4746 = vld [vmem:[#allocation7 + $0x40] sm:$0xff]
    %v4747 = vld [vmem:[#allocation7 + $0x48] sm:$0xff]
    %v4748 = vld [vmem:[#allocation7 + $0x50] sm:$0xff]
    %v4749 = vld [vmem:[#allocation7 + $0x58] sm:$0xff]
    %v4750 = vld [vmem:[#allocation7 + $0x60] sm:$0xff]
    %v4751 = vld [vmem:[#allocation7 + $0x68] sm:$0xff]
    %v4752 = vld [vmem:[#allocation7 + $0x70] sm:$0xff]
    %v4753 = vld [vmem:[#allocation7 + $0x78] sm:$0xff]
    %v4754 = vld [vmem:[#allocation7 + $0x80] sm:$0xff]
    %v4755 = vld [vmem:[#allocation7 + $0x88] sm:$0xff]
    %v4756 = vld [vmem:[#allocation7 + $0x90] sm:$0xff]
    %v4757 = vld [vmem:[#allocation7 + $0x98] sm:$0xff]
    %v4758 = vld [vmem:[#allocation7 + $0xa0] sm:$0xff]
    %v4759 = vld [vmem:[#allocation7 + $0xa8] sm:$0xff]
    %v4760 = vld [vmem:[#allocation7 + $0xb0] sm:$0xff]
    %v4761 = vld [vmem:[#allocation7 + $0xb8] sm:$0xff]
    %v4762 = vld [vmem:[#allocation7 + $0xc0] sm:$0xff]
    %v4763 = vld [vmem:[#allocation7 + $0xc8] sm:$0xff]
    %v4764 = vld [vmem:[#allocation7 + $0xd0] sm:$0xff]
    %v4765 = vld [vmem:[#allocation7 + $0xd8] sm:$0xff]
    %v4766 = vld [vmem:[#allocation7 + $0xe0] sm:$0xff]
    %v4767 = vld [vmem:[#allocation7 + $0xe8] sm:$0xff]
    %v4768 = vld [vmem:[#allocation7 + $0xf0] sm:$0xff]
    %v4769 = vld [vmem:[#allocation7 + $0xf8] sm:$0xff]
    %v4770 = vld [vmem:[#allocation7 + $0x100] sm:$0xff]
    %v4771 = vld [vmem:[#allocation7 + $0x108] sm:$0xff]
    %v4772 = vld [vmem:[#allocation7 + $0x110] sm:$0xff]
    %v4773 = vld [vmem:[#allocation7 + $0x118] sm:$0xff]
    %v4774 = vld [vmem:[#allocation7 + $0x120] sm:$0xff]
    %v4775 = vld [vmem:[#allocation7 + $0x128] sm:$0xff]
    %v4776 = vld [vmem:[#allocation7 + $0x130] sm:$0xff]
    %v4777 = vld [vmem:[#allocation7 + $0x138] sm:$0xff]
    %v4778 = vld [vmem:[#allocation7 + $0x140] sm:$0xff]
    %v4779 = vld [vmem:[#allocation7 + $0x148] sm:$0xff]
    %v4780 = vld [vmem:[#allocation7 + $0x150] sm:$0xff]
    %v4781 = vld [vmem:[#allocation7 + $0x158] sm:$0xff]
    %v4782 = vld [vmem:[#allocation7 + $0x160] sm:$0xff]
    %v4783 = vld [vmem:[#allocation7 + $0x168] sm:$0xff]
    %v4784 = vld [vmem:[#allocation7 + $0x170] sm:$0xff]
    %v4785 = vld [vmem:[#allocation7 + $0x178] sm:$0xff]
    %v4786 = vld [vmem:[#allocation7 + $0x180] sm:$0xff]
    %v4787 = vld [vmem:[#allocation7 + $0x188] sm:$0xff]
    %v4788 = vld [vmem:[#allocation7 + $0x190] sm:$0xff]
    %v4789 = vld [vmem:[#allocation7 + $0x198] sm:$0xff]
    %v4790 = vld [vmem:[#allocation7 + $0x1a0] sm:$0xff]
    %v4791 = vld [vmem:[#allocation7 + $0x1a8] sm:$0xff]
    %v4792 = vld [vmem:[#allocation7 + $0x1b0] sm:$0xff]
    %v4793 = vld [vmem:[#allocation7 + $0x1b8] sm:$0xff]
    %v4794 = vld [vmem:[#allocation7 + $0x1c0] sm:$0xff]
    %v4795 = vld [vmem:[#allocation7 + $0x1c8] sm:$0xff]
    %v4796 = vld [vmem:[#allocation7 + $0x1d0] sm:$0xff]
    %v4797 = vld [vmem:[#allocation7 + $0x1d8] sm:$0xff]
    %v4798 = vld [vmem:[#allocation7 + $0x1e0] sm:$0xff]
    %v4799 = vld [vmem:[#allocation7 + $0x1e8] sm:$0xff]
    %v4800 = vld [vmem:[#allocation7 + $0x1f0] sm:$0xff]
    %v4801 = vld [vmem:[#allocation7 + $0x1f8] sm:$0xff]
    %v4802 = vld [vmem:[#allocation7 + $0x200] sm:$0xff]
    %v4803 = vld [vmem:[#allocation7 + $0x208] sm:$0xff]
    %v4804 = vld [vmem:[#allocation7 + $0x210] sm:$0xff]
    %v4805 = vld [vmem:[#allocation7 + $0x218] sm:$0xff]
    %v4806 = vld [vmem:[#allocation7 + $0x220] sm:$0xff]
    %v4807 = vld [vmem:[#allocation7 + $0x228] sm:$0xff]
    %v4808 = vld [vmem:[#allocation7 + $0x230] sm:$0xff]
    %v4809 = vld [vmem:[#allocation7 + $0x238] sm:$0xff]
    %v4810 = vld [vmem:[#allocation7 + $0x240] sm:$0xff]
    %v4811 = vld [vmem:[#allocation7 + $0x248] sm:$0xff]
    %v4812 = vld [vmem:[#allocation7 + $0x250] sm:$0xff]
    %v4813 = vld [vmem:[#allocation7 + $0x258] sm:$0xff]
    %v4814 = vld [vmem:[#allocation7 + $0x260] sm:$0xff]
    %v4815 = vld [vmem:[#allocation7 + $0x268] sm:$0xff]
    %v4816 = vld [vmem:[#allocation7 + $0x270] sm:$0xff]
    %v4817 = vld [vmem:[#allocation7 + $0x278] sm:$0xff]
    %v4818 = vld [vmem:[#allocation7 + $0x280] sm:$0xff]
    %v4819 = vld [vmem:[#allocation7 + $0x288] sm:$0xff]
    %v4820 = vld [vmem:[#allocation7 + $0x290] sm:$0xff]
    %v4821 = vld [vmem:[#allocation7 + $0x298] sm:$0xff]
    %v4822 = vld [vmem:[#allocation7 + $0x2a0] sm:$0xff]
    %v4823 = vld [vmem:[#allocation7 + $0x2a8] sm:$0xff]
    %v4824 = vld [vmem:[#allocation7 + $0x2b0] sm:$0xff]
    %v4825 = vld [vmem:[#allocation7 + $0x2b8] sm:$0xff]
    %v4826 = vld [vmem:[#allocation7 + $0x2c0] sm:$0xff]
    %v4827 = vld [vmem:[#allocation7 + $0x2c8] sm:$0xff]
    %v4828 = vld [vmem:[#allocation7 + $0x2d0] sm:$0xff]
    %v4829 = vld [vmem:[#allocation7 + $0x2d8] sm:$0xff]
    %v4830 = vld [vmem:[#allocation7 + $0x2e0] sm:$0xff]
    %v4831 = vld [vmem:[#allocation7 + $0x2e8] sm:$0xff]
    %v4832 = vld [vmem:[#allocation7 + $0x2f0] sm:$0xff]
    %v4833 = vld [vmem:[#allocation7 + $0x2f8] sm:$0xff]
    %v4834 = vld [vmem:[#allocation7 + $0x300] sm:$0xff]
    %v4835 = vld [vmem:[#allocation7 + $0x308] sm:$0xff]
    %v4836 = vld [vmem:[#allocation7 + $0x310] sm:$0xff]
    %v4837 = vld [vmem:[#allocation7 + $0x318] sm:$0xff]
    %v4838 = vld [vmem:[#allocation7 + $0x320] sm:$0xff]
    %v4839 = vld [vmem:[#allocation7 + $0x328] sm:$0xff]
    %v4840 = vld [vmem:[#allocation7 + $0x330] sm:$0xff]
    %v4841 = vld [vmem:[#allocation7 + $0x338] sm:$0xff]
    %v4842 = vld [vmem:[#allocation7 + $0x340] sm:$0xff]
    %v4843 = vld [vmem:[#allocation7 + $0x348] sm:$0xff]
    %v4844 = vld [vmem:[#allocation7 + $0x350] sm:$0xff]
    %v4845 = vld [vmem:[#allocation7 + $0x358] sm:$0xff]
    %v4846 = vld [vmem:[#allocation7 + $0x360] sm:$0xff]
    %v4847 = vld [vmem:[#allocation7 + $0x368] sm:$0xff]
    %v4848 = vld [vmem:[#allocation7 + $0x370] sm:$0xff]
    %v4849 = vld [vmem:[#allocation7 + $0x378] sm:$0xff]
    %v4850 = vld [vmem:[#allocation7 + $0x380] sm:$0xff]
    %v4851 = vld [vmem:[#allocation7 + $0x388] sm:$0xff]
    %v4852 = vld [vmem:[#allocation7 + $0x390] sm:$0xff]
    %v4853 = vld [vmem:[#allocation7 + $0x398] sm:$0xff]
    %v4854 = vld [vmem:[#allocation7 + $0x3a0] sm:$0xff]
    %v4855 = vld [vmem:[#allocation7 + $0x3a8] sm:$0xff]
    %v4856 = vld [vmem:[#allocation7 + $0x3b0] sm:$0xff]
    %v4857 = vld [vmem:[#allocation7 + $0x3b8] sm:$0xff]
    %v4858 = vld [vmem:[#allocation7 + $0x3c0] sm:$0xff]
    %v4859 = vld [vmem:[#allocation7 + $0x3c8] sm:$0xff]
    %v4860 = vld [vmem:[#allocation7 + $0x3d0] sm:$0xff]
    %v4861 = vld [vmem:[#allocation7 + $0x3d8] sm:$0xff]
    %v4862 = vld [vmem:[#allocation7 + $0x3e0] sm:$0xff]
    %v4863 = vld [vmem:[#allocation7 + $0x3e8] sm:$0xff]
    %v4864 = vld [vmem:[#allocation7 + $0x3f0] sm:$0xff]
    %v4865 = vld [vmem:[#allocation7 + $0x3f8] sm:$0xff]
    %v4866 = vpack.c.bf16 %v4734, %v4734
    %v4867 = vpack.c.bf16 %v4735, %v4735
    %v4868 = vpack.c.bf16 %v4736, %v4736
    %v4869 = vpack.c.bf16 %v4737, %v4737
    %v4870 = vld [vmem:[%s22] sm:$0xf]
    %v4872 = vperm.slane %v4870, 0
    %v4873 = vperm.slane %v4870, 1
    %v4874 = vperm.slane %v4870, 2
    %v4875 = vperm.slane %v4870, 3
    %v5008 = vunpack.c.l.b16 %v4738
    %v5009 = vunpack.c.h.b16 %v4738
    %v5010 = vunpack.c.l.b16 %v4739
    %v5011 = vunpack.c.h.b16 %v4739
    %v5012 = vunpack.c.l.b16 %v4740
    %v5013 = vunpack.c.h.b16 %v4740
    %v5014 = vunpack.c.l.b16 %v4741
    %v5015 = vunpack.c.h.b16 %v4741
    %v5016 = vunpack.c.l.b16 %v4742
    %v5017 = vunpack.c.h.b16 %v4742
    %v5018 = vunpack.c.l.b16 %v4743
    %v5019 = vunpack.c.h.b16 %v4743
    %v5020 = vunpack.c.l.b16 %v4744
    %v5021 = vunpack.c.h.b16 %v4744
    %v5022 = vunpack.c.l.b16 %v4745
    %v5023 = vunpack.c.h.b16 %v4745
    %v5024 = vunpack.c.l.b16 %v4746
    %v5025 = vunpack.c.h.b16 %v4746
    %v5026 = vunpack.c.l.b16 %v4747
    %v5027 = vunpack.c.h.b16 %v4747
    %v5028 = vunpack.c.l.b16 %v4748
    %v5029 = vunpack.c.h.b16 %v4748
    %v5030 = vunpack.c.l.b16 %v4749
    %v5031 = vunpack.c.h.b16 %v4749
    %v5032 = vunpack.c.l.b16 %v4750
    %v5033 = vunpack.c.h.b16 %v4750
    %v5034 = vunpack.c.l.b16 %v4751
    %v5035 = vunpack.c.h.b16 %v4751
    %v5036 = vunpack.c.l.b16 %v4752
    %v5037 = vunpack.c.h.b16 %v4752
    %v5038 = vunpack.c.l.b16 %v4753
    %v5039 = vunpack.c.h.b16 %v4753
    %v5040 = vunpack.c.l.b16 %v4754
    %v5041 = vunpack.c.h.b16 %v4754
    %v5042 = vunpack.c.l.b16 %v4755
    %v5043 = vunpack.c.h.b16 %v4755
    %v5044 = vunpack.c.l.b16 %v4756
    %v5045 = vunpack.c.h.b16 %v4756
    %v5046 = vunpack.c.l.b16 %v4757
    %v5047 = vunpack.c.h.b16 %v4757
    %v5048 = vunpack.c.l.b16 %v4758
    %v5049 = vunpack.c.h.b16 %v4758
    %v5050 = vunpack.c.l.b16 %v4759
    %v5051 = vunpack.c.h.b16 %v4759
    %v5052 = vunpack.c.l.b16 %v4760
    %v5053 = vunpack.c.h.b16 %v4760
    %v5054 = vunpack.c.l.b16 %v4761
    %v5055 = vunpack.c.h.b16 %v4761
    %v5056 = vunpack.c.l.b16 %v4762
    %v5057 = vunpack.c.h.b16 %v4762
    %v5058 = vunpack.c.l.b16 %v4763
    %v5059 = vunpack.c.h.b16 %v4763
    %v5060 = vunpack.c.l.b16 %v4764
    %v5061 = vunpack.c.h.b16 %v4764
    %v5062 = vunpack.c.l.b16 %v4765
    %v5063 = vunpack.c.h.b16 %v4765
    %v5064 = vunpack.c.l.b16 %v4766
    %v5065 = vunpack.c.h.b16 %v4766
    %v5066 = vunpack.c.l.b16 %v4767
    %v5067 = vunpack.c.h.b16 %v4767
    %v5068 = vunpack.c.l.b16 %v4768
    %v5069 = vunpack.c.h.b16 %v4768
    %v5070 = vunpack.c.l.b16 %v4769
    %v5071 = vunpack.c.h.b16 %v4769
    %v5072 = vunpack.c.l.b16 %v4770
    %v5073 = vunpack.c.h.b16 %v4770
    %v5074 = vunpack.c.l.b16 %v4771
    %v5075 = vunpack.c.h.b16 %v4771
    %v5076 = vunpack.c.l.b16 %v4772
    %v5077 = vunpack.c.h.b16 %v4772
    %v5078 = vunpack.c.l.b16 %v4773
    %v5079 = vunpack.c.h.b16 %v4773
    %v5080 = vunpack.c.l.b16 %v4774
    %v5081 = vunpack.c.h.b16 %v4774
    %v5082 = vunpack.c.l.b16 %v4775
    %v5083 = vunpack.c.h.b16 %v4775
    %v5084 = vunpack.c.l.b16 %v4776
    %v5085 = vunpack.c.h.b16 %v4776
    %v5086 = vunpack.c.l.b16 %v4777
    %v5087 = vunpack.c.h.b16 %v4777
    %v5088 = vunpack.c.l.b16 %v4778
    %v5089 = vunpack.c.h.b16 %v4778
    %v5090 = vunpack.c.l.b16 %v4779
    %v5091 = vunpack.c.h.b16 %v4779
    %v5092 = vunpack.c.l.b16 %v4780
    %v5093 = vunpack.c.h.b16 %v4780
    %v5094 = vunpack.c.l.b16 %v4781
    %v5095 = vunpack.c.h.b16 %v4781
    %v5096 = vunpack.c.l.b16 %v4782
    %v5097 = vunpack.c.h.b16 %v4782
    %v5098 = vunpack.c.l.b16 %v4783
    %v5099 = vunpack.c.h.b16 %v4783
    %v5100 = vunpack.c.l.b16 %v4784
    %v5101 = vunpack.c.h.b16 %v4784
    %v5102 = vunpack.c.l.b16 %v4785
    %v5103 = vunpack.c.h.b16 %v4785
    %v5104 = vunpack.c.l.b16 %v4786
    %v5105 = vunpack.c.h.b16 %v4786
    %v5106 = vunpack.c.l.b16 %v4787
    %v5107 = vunpack.c.h.b16 %v4787
    %v5108 = vunpack.c.l.b16 %v4788
    %v5109 = vunpack.c.h.b16 %v4788
    %v5110 = vunpack.c.l.b16 %v4789
    %v5111 = vunpack.c.h.b16 %v4789
    %v5112 = vunpack.c.l.b16 %v4790
    %v5113 = vunpack.c.h.b16 %v4790
    %v5114 = vunpack.c.l.b16 %v4791
    %v5115 = vunpack.c.h.b16 %v4791
    %v5116 = vunpack.c.l.b16 %v4792
    %v5117 = vunpack.c.h.b16 %v4792
    %v5118 = vunpack.c.l.b16 %v4793
    %v5119 = vunpack.c.h.b16 %v4793
    %v5120 = vunpack.c.l.b16 %v4794
    %v5121 = vunpack.c.h.b16 %v4794
    %v5122 = vunpack.c.l.b16 %v4795
    %v5123 = vunpack.c.h.b16 %v4795
    %v5124 = vunpack.c.l.b16 %v4796
    %v5125 = vunpack.c.h.b16 %v4796
    %v5126 = vunpack.c.l.b16 %v4797
    %v5127 = vunpack.c.h.b16 %v4797
    %v5128 = vunpack.c.l.b16 %v4798
    %v5129 = vunpack.c.h.b16 %v4798
    %v5130 = vunpack.c.l.b16 %v4799
    %v5131 = vunpack.c.h.b16 %v4799
    %v5132 = vunpack.c.l.b16 %v4800
    %v5133 = vunpack.c.h.b16 %v4800
    %v5134 = vunpack.c.l.b16 %v4801
    %v5135 = vunpack.c.h.b16 %v4801
    %v5136 = vunpack.c.l.b16 %v4802
    %v5137 = vunpack.c.h.b16 %v4802
    %v5138 = vunpack.c.l.b16 %v4803
    %v5139 = vunpack.c.h.b16 %v4803
    %v5140 = vunpack.c.l.b16 %v4804
    %v5141 = vunpack.c.h.b16 %v4804
    %v5142 = vunpack.c.l.b16 %v4805
    %v5143 = vunpack.c.h.b16 %v4805
    %v5144 = vunpack.c.l.b16 %v4806
    %v5145 = vunpack.c.h.b16 %v4806
    %v5146 = vunpack.c.l.b16 %v4807
    %v5147 = vunpack.c.h.b16 %v4807
    %v5148 = vunpack.c.l.b16 %v4808
    %v5149 = vunpack.c.h.b16 %v4808
    %v5150 = vunpack.c.l.b16 %v4809
    %v5151 = vunpack.c.h.b16 %v4809
    %v5152 = vunpack.c.l.b16 %v4810
    %v5153 = vunpack.c.h.b16 %v4810
    %v5154 = vunpack.c.l.b16 %v4811
    %v5155 = vunpack.c.h.b16 %v4811
    %v5156 = vunpack.c.l.b16 %v4812
    %v5157 = vunpack.c.h.b16 %v4812
    %v5158 = vunpack.c.l.b16 %v4813
    %v5159 = vunpack.c.h.b16 %v4813
    %v5160 = vunpack.c.l.b16 %v4814
    %v5161 = vunpack.c.h.b16 %v4814
    %v5162 = vunpack.c.l.b16 %v4815
    %v5163 = vunpack.c.h.b16 %v4815
    %v5164 = vunpack.c.l.b16 %v4816
    %v5165 = vunpack.c.h.b16 %v4816
    %v5166 = vunpack.c.l.b16 %v4817
    %v5167 = vunpack.c.h.b16 %v4817
    %v5168 = vunpack.c.l.b16 %v4818
    %v5169 = vunpack.c.h.b16 %v4818
    %v5170 = vunpack.c.l.b16 %v4819
    %v5171 = vunpack.c.h.b16 %v4819
    %v5172 = vunpack.c.l.b16 %v4820
    %v5173 = vunpack.c.h.b16 %v4820
    %v5174 = vunpack.c.l.b16 %v4821
    %v5175 = vunpack.c.h.b16 %v4821
    %v5176 = vunpack.c.l.b16 %v4822
    %v5177 = vunpack.c.h.b16 %v4822
    %v5178 = vunpack.c.l.b16 %v4823
    %v5179 = vunpack.c.h.b16 %v4823
    %v5180 = vunpack.c.l.b16 %v4824
    %v5181 = vunpack.c.h.b16 %v4824
    %v5182 = vunpack.c.l.b16 %v4825
    %v5183 = vunpack.c.h.b16 %v4825
    %v5184 = vunpack.c.l.b16 %v4826
    %v5185 = vunpack.c.h.b16 %v4826
    %v5186 = vunpack.c.l.b16 %v4827
    %v5187 = vunpack.c.h.b16 %v4827
    %v5188 = vunpack.c.l.b16 %v4828
    %v5189 = vunpack.c.h.b16 %v4828
    %v5190 = vunpack.c.l.b16 %v4829
    %v5191 = vunpack.c.h.b16 %v4829
    %v5192 = vunpack.c.l.b16 %v4830
    %v5193 = vunpack.c.h.b16 %v4830
    %v5194 = vunpack.c.l.b16 %v4831
    %v5195 = vunpack.c.h.b16 %v4831
    %v5196 = vunpack.c.l.b16 %v4832
    %v5197 = vunpack.c.h.b16 %v4832
    %v5198 = vunpack.c.l.b16 %v4833
    %v5199 = vunpack.c.h.b16 %v4833
    %v5200 = vunpack.c.l.b16 %v4834
    %v5201 = vunpack.c.h.b16 %v4834
    %v5202 = vunpack.c.l.b16 %v4835
    %v5203 = vunpack.c.h.b16 %v4835
    %v5204 = vunpack.c.l.b16 %v4836
    %v5205 = vunpack.c.h.b16 %v4836
    %v5206 = vunpack.c.l.b16 %v4837
    %v5207 = vunpack.c.h.b16 %v4837
    %v5208 = vunpack.c.l.b16 %v4838
    %v5209 = vunpack.c.h.b16 %v4838
    %v5210 = vunpack.c.l.b16 %v4839
    %v5211 = vunpack.c.h.b16 %v4839
    %v5212 = vunpack.c.l.b16 %v4840
    %v5213 = vunpack.c.h.b16 %v4840
    %v5214 = vunpack.c.l.b16 %v4841
    %v5215 = vunpack.c.h.b16 %v4841
    %v5216 = vunpack.c.l.b16 %v4842
    %v5217 = vunpack.c.h.b16 %v4842
    %v5218 = vunpack.c.l.b16 %v4843
    %v5219 = vunpack.c.h.b16 %v4843
    %v5220 = vunpack.c.l.b16 %v4844
    %v5221 = vunpack.c.h.b16 %v4844
    %v5222 = vunpack.c.l.b16 %v4845
    %v5223 = vunpack.c.h.b16 %v4845
    %v5224 = vunpack.c.l.b16 %v4846
    %v5225 = vunpack.c.h.b16 %v4846
    %v5226 = vunpack.c.l.b16 %v4847
    %v5227 = vunpack.c.h.b16 %v4847
    %v5228 = vunpack.c.l.b16 %v4848
    %v5229 = vunpack.c.h.b16 %v4848
    %v5230 = vunpack.c.l.b16 %v4849
    %v5231 = vunpack.c.h.b16 %v4849
    %v5232 = vunpack.c.l.b16 %v4850
    %v5233 = vunpack.c.h.b16 %v4850
    %v5234 = vunpack.c.l.b16 %v4851
    %v5235 = vunpack.c.h.b16 %v4851
    %v5236 = vunpack.c.l.b16 %v4852
    %v5237 = vunpack.c.h.b16 %v4852
    %v5238 = vunpack.c.l.b16 %v4853
    %v5239 = vunpack.c.h.b16 %v4853
    %v5240 = vunpack.c.l.b16 %v4854
    %v5241 = vunpack.c.h.b16 %v4854
    %v5242 = vunpack.c.l.b16 %v4855
    %v5243 = vunpack.c.h.b16 %v4855
    %v5244 = vunpack.c.l.b16 %v4856
    %v5245 = vunpack.c.h.b16 %v4856
    %v5246 = vunpack.c.l.b16 %v4857
    %v5247 = vunpack.c.h.b16 %v4857
    %v5248 = vunpack.c.l.b16 %v4858
    %v5249 = vunpack.c.h.b16 %v4858
    %v5250 = vunpack.c.l.b16 %v4859
    %v5251 = vunpack.c.h.b16 %v4859
    %v5252 = vunpack.c.l.b16 %v4860
    %v5253 = vunpack.c.h.b16 %v4860
    %v5254 = vunpack.c.l.b16 %v4861
    %v5255 = vunpack.c.h.b16 %v4861
    %v5256 = vunpack.c.l.b16 %v4862
    %v5257 = vunpack.c.h.b16 %v4862
    %v5258 = vunpack.c.l.b16 %v4863
    %v5259 = vunpack.c.h.b16 %v4863
    %v5260 = vunpack.c.l.b16 %v4864
    %v5261 = vunpack.c.h.b16 %v4864
    %v5262 = vunpack.c.l.b16 %v4865
    %v5263 = vunpack.c.h.b16 %v4865
    %v5264 = vpack.c.b16 %v5012, %v5008
    %v5265 = vpack.c.b16 %v5013, %v5009
    %v5266 = vpack.c.b16 %v5014, %v5010
    %v5267 = vpack.c.b16 %v5015, %v5011
    %v5268 = vpack.c.b16 %v5020, %v5016
    %v5269 = vpack.c.b16 %v5021, %v5017
    %v5270 = vpack.c.b16 %v5022, %v5018
    %v5271 = vpack.c.b16 %v5023, %v5019
    %v5272 = vpack.c.b16 %v5028, %v5024
    %v5273 = vpack.c.b16 %v5029, %v5025
    %v5274 = vpack.c.b16 %v5030, %v5026
    %v5275 = vpack.c.b16 %v5031, %v5027
    %v5276 = vpack.c.b16 %v5036, %v5032
    %v5277 = vpack.c.b16 %v5037, %v5033
    %v5278 = vpack.c.b16 %v5038, %v5034
    %v5279 = vpack.c.b16 %v5039, %v5035
    %v5280 = vpack.c.b16 %v5044, %v5040
    %v5281 = vpack.c.b16 %v5045, %v5041
    %v5282 = vpack.c.b16 %v5046, %v5042
    %v5283 = vpack.c.b16 %v5047, %v5043
    %v5284 = vpack.c.b16 %v5052, %v5048
    %v5285 = vpack.c.b16 %v5053, %v5049
    %v5286 = vpack.c.b16 %v5054, %v5050
    %v5287 = vpack.c.b16 %v5055, %v5051
    %v5288 = vpack.c.b16 %v5060, %v5056
    %v5289 = vpack.c.b16 %v5061, %v5057
    %v5290 = vpack.c.b16 %v5062, %v5058
    %v5291 = vpack.c.b16 %v5063, %v5059
    %v5292 = vpack.c.b16 %v5068, %v5064
    %v5293 = vpack.c.b16 %v5069, %v5065
    %v5294 = vpack.c.b16 %v5070, %v5066
    %v5295 = vpack.c.b16 %v5071, %v5067
    %v5296 = vpack.c.b16 %v5076, %v5072
    %v5297 = vpack.c.b16 %v5077, %v5073
    %v5298 = vpack.c.b16 %v5078, %v5074
    %v5299 = vpack.c.b16 %v5079, %v5075
    %v5300 = vpack.c.b16 %v5084, %v5080
    %v5301 = vpack.c.b16 %v5085, %v5081
    %v5302 = vpack.c.b16 %v5086, %v5082
    %v5303 = vpack.c.b16 %v5087, %v5083
    %v5304 = vpack.c.b16 %v5092, %v5088
    %v5305 = vpack.c.b16 %v5093, %v5089
    %v5306 = vpack.c.b16 %v5094, %v5090
    %v5307 = vpack.c.b16 %v5095, %v5091
    %v5308 = vpack.c.b16 %v5100, %v5096
    %v5309 = vpack.c.b16 %v5101, %v5097
    %v5310 = vpack.c.b16 %v5102, %v5098
    %v5311 = vpack.c.b16 %v5103, %v5099
    %v5312 = vpack.c.b16 %v5108, %v5104
    %v5313 = vpack.c.b16 %v5109, %v5105
    %v5314 = vpack.c.b16 %v5110, %v5106
    %v5315 = vpack.c.b16 %v5111, %v5107
    %v5316 = vpack.c.b16 %v5116, %v5112
    %v5317 = vpack.c.b16 %v5117, %v5113
    %v5318 = vpack.c.b16 %v5118, %v5114
    %v5319 = vpack.c.b16 %v5119, %v5115
    %v5320 = vpack.c.b16 %v5124, %v5120
    %v5321 = vpack.c.b16 %v5125, %v5121
    %v5322 = vpack.c.b16 %v5126, %v5122
    %v5323 = vpack.c.b16 %v5127, %v5123
    %v5324 = vpack.c.b16 %v5132, %v5128
    %v5325 = vpack.c.b16 %v5133, %v5129
    %v5326 = vpack.c.b16 %v5134, %v5130
    %v5327 = vpack.c.b16 %v5135, %v5131
    %v5328 = vpack.c.b16 %v5140, %v5136
    %v5329 = vpack.c.b16 %v5141, %v5137
    %v5330 = vpack.c.b16 %v5142, %v5138
    %v5331 = vpack.c.b16 %v5143, %v5139
    %v5332 = vpack.c.b16 %v5148, %v5144
    %v5333 = vpack.c.b16 %v5149, %v5145
    %v5334 = vpack.c.b16 %v5150, %v5146
    %v5335 = vpack.c.b16 %v5151, %v5147
    %v5336 = vpack.c.b16 %v5156, %v5152
    %v5337 = vpack.c.b16 %v5157, %v5153
    %v5338 = vpack.c.b16 %v5158, %v5154
    %v5339 = vpack.c.b16 %v5159, %v5155
    %v5340 = vpack.c.b16 %v5164, %v5160
    %v5341 = vpack.c.b16 %v5165, %v5161
    %v5342 = vpack.c.b16 %v5166, %v5162
    %v5343 = vpack.c.b16 %v5167, %v5163
    %v5344 = vpack.c.b16 %v5172, %v5168
    %v5345 = vpack.c.b16 %v5173, %v5169
    %v5346 = vpack.c.b16 %v5174, %v5170
    %v5347 = vpack.c.b16 %v5175, %v5171
    %v5348 = vpack.c.b16 %v5180, %v5176
    %v5349 = vpack.c.b16 %v5181, %v5177
    %v5350 = vpack.c.b16 %v5182, %v5178
    %v5351 = vpack.c.b16 %v5183, %v5179
    %v5352 = vpack.c.b16 %v5188, %v5184
    %v5353 = vpack.c.b16 %v5189, %v5185
    %v5354 = vpack.c.b16 %v5190, %v5186
    %v5355 = vpack.c.b16 %v5191, %v5187
    %v5356 = vpack.c.b16 %v5196, %v5192
    %v5357 = vpack.c.b16 %v5197, %v5193
    %v5358 = vpack.c.b16 %v5198, %v5194
    %v5359 = vpack.c.b16 %v5199, %v5195
    %v5360 = vpack.c.b16 %v5204, %v5200
    %v5361 = vpack.c.b16 %v5205, %v5201
    %v5362 = vpack.c.b16 %v5206, %v5202
    %v5363 = vpack.c.b16 %v5207, %v5203
    %v5364 = vpack.c.b16 %v5212, %v5208
    %v5365 = vpack.c.b16 %v5213, %v5209
    %v5366 = vpack.c.b16 %v5214, %v5210
    %v5367 = vpack.c.b16 %v5215, %v5211
    %v5368 = vpack.c.b16 %v5220, %v5216
    %v5369 = vpack.c.b16 %v5221, %v5217
    %v5370 = vpack.c.b16 %v5222, %v5218
    %v5371 = vpack.c.b16 %v5223, %v5219
    %v5372 = vpack.c.b16 %v5228, %v5224
    %v5373 = vpack.c.b16 %v5229, %v5225
    %v5374 = vpack.c.b16 %v5230, %v5226
    %v5375 = vpack.c.b16 %v5231, %v5227
    %v5376 = vpack.c.b16 %v5236, %v5232
    %v5377 = vpack.c.b16 %v5237, %v5233
    %v5378 = vpack.c.b16 %v5238, %v5234
    %v5379 = vpack.c.b16 %v5239, %v5235
    %v5380 = vpack.c.b16 %v5244, %v5240
    %v5381 = vpack.c.b16 %v5245, %v5241
    %v5382 = vpack.c.b16 %v5246, %v5242
    %v5383 = vpack.c.b16 %v5247, %v5243
    %v5384 = vpack.c.b16 %v5252, %v5248
    %v5385 = vpack.c.b16 %v5253, %v5249
    %v5386 = vpack.c.b16 %v5254, %v5250
    %v5387 = vpack.c.b16 %v5255, %v5251
    %v5388 = vpack.c.b16 %v5260, %v5256
    %v5389 = vpack.c.b16 %v5261, %v5257
    %v5390 = vpack.c.b16 %v5262, %v5258
    %v5391 = vpack.c.b16 %v5263, %v5259
    %5520 = vmatpush.bf16.msra.mxu0 %v5292
    %5521 = vmatpush.bf16.msra.mxu0 %v5288
    %5522 = vmatpush.bf16.msra.mxu0 %v5284
    %5523 = vmatpush.bf16.msra.mxu0 %v5280
    %5524 = vmatpush.bf16.msra.mxu0 %v5276
    %5525 = vmatpush.bf16.msra.mxu0 %v5272
    %5526 = vmatpush.bf16.msra.mxu0 %v5268
    %5527 = vmatpush.bf16.msra.mxu0 %v5264
    %5528 = vmatmul.bf16.gmra.mxu0 %v4866
    %v5529 = vpop.f32.mrf.mxu0
    %v5530 = vadd.f32 %v4872, %v5529
    %v5531 = vpop.f32.mrf.mxu0
    %5532 = vdwg.mxu0
    %5533 = vmatpush.bf16.msra.mxu0 %v5324
    %5534 = vmatpush.bf16.msra.mxu0 %v5320
    %5535 = vmatpush.bf16.msra.mxu0 %v5316
    %5536 = vmatpush.bf16.msra.mxu0 %v5312
    %5537 = vmatpush.bf16.msra.mxu0 %v5308
    %5538 = vmatpush.bf16.msra.mxu0 %v5304
    %5539 = vmatpush.bf16.msra.mxu0 %v5300
    %5540 = vmatpush.bf16.msra.mxu0 %v5296
    %5541 = vmatmul.bf16.gmra.mxu0 %v4867
    %v5542 = vpop.f32.mrf.mxu0
    %v5543 = vadd.f32 %v5530, %v5542
    %v5544 = vpop.f32.mrf.mxu0
    %5545 = vdwg.mxu0
    %5546 = vmatpush.bf16.msra.mxu0 %v5356
    %5547 = vmatpush.bf16.msra.mxu0 %v5352
    %5548 = vmatpush.bf16.msra.mxu0 %v5348
    %5549 = vmatpush.bf16.msra.mxu0 %v5344
    %5550 = vmatpush.bf16.msra.mxu0 %v5340
    %5551 = vmatpush.bf16.msra.mxu0 %v5336
    %5552 = vmatpush.bf16.msra.mxu0 %v5332
    %5553 = vmatpush.bf16.msra.mxu0 %v5328
    %5554 = vmatmul.bf16.gmra.mxu0 %v4868
    %v5555 = vpop.f32.mrf.mxu0
    %v5556 = vadd.f32 %v5543, %v5555
    %v5557 = vpop.f32.mrf.mxu0
    %5558 = vdwg.mxu0
    %5559 = vmatpush.bf16.msra.mxu0 %v5388
    %5560 = vmatpush.bf16.msra.mxu0 %v5384
    %5561 = vmatpush.bf16.msra.mxu0 %v5380
    %5562 = vmatpush.bf16.msra.mxu0 %v5376
    %5563 = vmatpush.bf16.msra.mxu0 %v5372
    %5564 = vmatpush.bf16.msra.mxu0 %v5368
    %5565 = vmatpush.bf16.msra.mxu0 %v5364
    %5566 = vmatpush.bf16.msra.mxu0 %v5360
    %5567 = vmatmul.bf16.gmra.mxu0 %v4869
    %v5568 = vpop.f32.mrf.mxu0
    %v5569 = vadd.f32 %v5556, %v5568
    %v5570 = vpop.f32.mrf.mxu0
    %5571 = vdwg.mxu0
    %5572 = vmatpush.bf16.msra.mxu0 %v5293
    %5573 = vmatpush.bf16.msra.mxu0 %v5289
    %5574 = vmatpush.bf16.msra.mxu0 %v5285
    %5575 = vmatpush.bf16.msra.mxu0 %v5281
    %5576 = vmatpush.bf16.msra.mxu0 %v5277
    %5577 = vmatpush.bf16.msra.mxu0 %v5273
    %5578 = vmatpush.bf16.msra.mxu0 %v5269
    %5579 = vmatpush.bf16.msra.mxu0 %v5265
    %5580 = vmatmul.bf16.gmra.mxu0 %v4866
    %v5581 = vpop.f32.mrf.mxu0
    %v5582 = vadd.f32 %v4873, %v5581
    %v5583 = vpop.f32.mrf.mxu0
    %5584 = vdwg.mxu0
    %5585 = vmatpush.bf16.msra.mxu0 %v5325
    %5586 = vmatpush.bf16.msra.mxu0 %v5321
    %5587 = vmatpush.bf16.msra.mxu0 %v5317
    %5588 = vmatpush.bf16.msra.mxu0 %v5313
    %5589 = vmatpush.bf16.msra.mxu0 %v5309
    %5590 = vmatpush.bf16.msra.mxu0 %v5305
    %5591 = vmatpush.bf16.msra.mxu0 %v5301
    %5592 = vmatpush.bf16.msra.mxu0 %v5297
    %5593 = vmatmul.bf16.gmra.mxu0 %v4867
    %v5594 = vpop.f32.mrf.mxu0
    %v5595 = vadd.f32 %v5582, %v5594
    %v5596 = vpop.f32.mrf.mxu0
    %5597 = vdwg.mxu0
    %5598 = vmatpush.bf16.msra.mxu0 %v5357
    %5599 = vmatpush.bf16.msra.mxu0 %v5353
    %5600 = vmatpush.bf16.msra.mxu0 %v5349
    %5601 = vmatpush.bf16.msra.mxu0 %v5345
    %5602 = vmatpush.bf16.msra.mxu0 %v5341
    %5603 = vmatpush.bf16.msra.mxu0 %v5337
    %5604 = vmatpush.bf16.msra.mxu0 %v5333
    %5605 = vmatpush.bf16.msra.mxu0 %v5329
    %5606 = vmatmul.bf16.gmra.mxu0 %v4868
    %v5607 = vpop.f32.mrf.mxu0
    %v5608 = vadd.f32 %v5595, %v5607
    %v5609 = vpop.f32.mrf.mxu0
    %5610 = vdwg.mxu0
    %5611 = vmatpush.bf16.msra.mxu0 %v5389
    %5612 = vmatpush.bf16.msra.mxu0 %v5385
    %5613 = vmatpush.bf16.msra.mxu0 %v5381
    %5614 = vmatpush.bf16.msra.mxu0 %v5377
    %5615 = vmatpush.bf16.msra.mxu0 %v5373
    %5616 = vmatpush.bf16.msra.mxu0 %v5369
    %5617 = vmatpush.bf16.msra.mxu0 %v5365
    %5618 = vmatpush.bf16.msra.mxu0 %v5361
    %5619 = vmatmul.bf16.gmra.mxu0 %v4869
    %v5620 = vpop.f32.mrf.mxu0
    %v5621 = vadd.f32 %v5608, %v5620
    %v5622 = vpop.f32.mrf.mxu0
    %5623 = vdwg.mxu0
    %5624 = vmatpush.bf16.msra.mxu0 %v5294
    %5625 = vmatpush.bf16.msra.mxu0 %v5290
    %5626 = vmatpush.bf16.msra.mxu0 %v5286
    %5627 = vmatpush.bf16.msra.mxu0 %v5282
    %5628 = vmatpush.bf16.msra.mxu0 %v5278
    %5629 = vmatpush.bf16.msra.mxu0 %v5274
    %5630 = vmatpush.bf16.msra.mxu0 %v5270
    %5631 = vmatpush.bf16.msra.mxu0 %v5266
    %5632 = vmatmul.bf16.gmra.mxu0 %v4866
    %v5633 = vpop.f32.mrf.mxu0
    %v5634 = vadd.f32 %v4874, %v5633
    %v5635 = vpop.f32.mrf.mxu0
    %5636 = vdwg.mxu0
    %5637 = vmatpush.bf16.msra.mxu0 %v5326
    %5638 = vmatpush.bf16.msra.mxu0 %v5322
    %5639 = vmatpush.bf16.msra.mxu0 %v5318
    %5640 = vmatpush.bf16.msra.mxu0 %v5314
    %5641 = vmatpush.bf16.msra.mxu0 %v5310
    %5642 = vmatpush.bf16.msra.mxu0 %v5306
    %5643 = vmatpush.bf16.msra.mxu0 %v5302
    %5644 = vmatpush.bf16.msra.mxu0 %v5298
    %5645 = vmatmul.bf16.gmra.mxu0 %v4867
    %v5646 = vpop.f32.mrf.mxu0
    %v5647 = vadd.f32 %v5634, %v5646
    %v5648 = vpop.f32.mrf.mxu0
    %5649 = vdwg.mxu0
    %5650 = vmatpush.bf16.msra.mxu0 %v5358
    %5651 = vmatpush.bf16.msra.mxu0 %v5354
    %5652 = vmatpush.bf16.msra.mxu0 %v5350
    %5653 = vmatpush.bf16.msra.mxu0 %v5346
    %5654 = vmatpush.bf16.msra.mxu0 %v5342
    %5655 = vmatpush.bf16.msra.mxu0 %v5338
    %5656 = vmatpush.bf16.msra.mxu0 %v5334
    %5657 = vmatpush.bf16.msra.mxu0 %v5330
    %5658 = vmatmul.bf16.gmra.mxu0 %v4868
    %v5659 = vpop.f32.mrf.mxu0
    %v5660 = vadd.f32 %v5647, %v5659
    %v5661 = vpop.f32.mrf.mxu0
    %5662 = vdwg.mxu0
    %5663 = vmatpush.bf16.msra.mxu0 %v5390
    %5664 = vmatpush.bf16.msra.mxu0 %v5386
    %5665 = vmatpush.bf16.msra.mxu0 %v5382
    %5666 = vmatpush.bf16.msra.mxu0 %v5378
    %5667 = vmatpush.bf16.msra.mxu0 %v5374
    %5668 = vmatpush.bf16.msra.mxu0 %v5370
    %5669 = vmatpush.bf16.msra.mxu0 %v5366
    %5670 = vmatpush.bf16.msra.mxu0 %v5362
    %5671 = vmatmul.bf16.gmra.mxu0 %v4869
    %v5672 = vpop.f32.mrf.mxu0
    %v5673 = vadd.f32 %v5660, %v5672
    %v5674 = vpop.f32.mrf.mxu0
    %5675 = vdwg.mxu0
    %5676 = vmatpush.bf16.msra.mxu0 %v5295
    %5677 = vmatpush.bf16.msra.mxu0 %v5291
    %5678 = vmatpush.bf16.msra.mxu0 %v5287
    %5679 = vmatpush.bf16.msra.mxu0 %v5283
    %5680 = vmatpush.bf16.msra.mxu0 %v5279
    %5681 = vmatpush.bf16.msra.mxu0 %v5275
    %5682 = vmatpush.bf16.msra.mxu0 %v5271
    %5683 = vmatpush.bf16.msra.mxu0 %v5267
    %5684 = vmatmul.bf16.gmra.mxu0 %v4866
    %v5685 = vpop.f32.mrf.mxu0
    %v5686 = vadd.f32 %v4875, %v5685
    %v5687 = vpop.f32.mrf.mxu0
    %5688 = vdwg.mxu0
    %5689 = vmatpush.bf16.msra.mxu0 %v5327
    %5690 = vmatpush.bf16.msra.mxu0 %v5323
    %5691 = vmatpush.bf16.msra.mxu0 %v5319
    %5692 = vmatpush.bf16.msra.mxu0 %v5315
    %5693 = vmatpush.bf16.msra.mxu0 %v5311
    %5694 = vmatpush.bf16.msra.mxu0 %v5307
    %5695 = vmatpush.bf16.msra.mxu0 %v5303
    %5696 = vmatpush.bf16.msra.mxu0 %v5299
    %5697 = vmatmul.bf16.gmra.mxu0 %v4867
    %v5698 = vpop.f32.mrf.mxu0
    %v5699 = vadd.f32 %v5686, %v5698
    %v5700 = vpop.f32.mrf.mxu0
    %5701 = vdwg.mxu0
    %5702 = vmatpush.bf16.msra.mxu0 %v5359
    %5703 = vmatpush.bf16.msra.mxu0 %v5355
    %5704 = vmatpush.bf16.msra.mxu0 %v5351
    %5705 = vmatpush.bf16.msra.mxu0 %v5347
    %5706 = vmatpush.bf16.msra.mxu0 %v5343
    %5707 = vmatpush.bf16.msra.mxu0 %v5339
    %5708 = vmatpush.bf16.msra.mxu0 %v5335
    %5709 = vmatpush.bf16.msra.mxu0 %v5331
    %5710 = vmatmul.bf16.gmra.mxu0 %v4868
    %v5711 = vpop.f32.mrf.mxu0
    %v5712 = vadd.f32 %v5699, %v5711
    %v5713 = vpop.f32.mrf.mxu0
    %5714 = vdwg.mxu0
    %5715 = vmatpush.bf16.msra.mxu0 %v5391
    %5716 = vmatpush.bf16.msra.mxu0 %v5387
    %5717 = vmatpush.bf16.msra.mxu0 %v5383
    %5718 = vmatpush.bf16.msra.mxu0 %v5379
    %5719 = vmatpush.bf16.msra.mxu0 %v5375
    %5720 = vmatpush.bf16.msra.mxu0 %v5371
    %5721 = vmatpush.bf16.msra.mxu0 %v5367
    %5722 = vmatpush.bf16.msra.mxu0 %v5363
    %5723 = vmatmul.bf16.gmra.mxu0 %v4869
    %v5724 = vpop.f32.mrf.mxu0
    %v5725 = vadd.f32 %v5712, %v5724
    %v5726 = vpop.f32.mrf.mxu0
    %5727 = vdwg.mxu0
    %v5728 = vmul.f32 %v5569, 0.2
    %v5729 = vmul.f32 %v5621, 0.2
    %v5730 = vmul.f32 %v5673, 0.2
    %v5731 = vmul.f32 %v5725, 0.2
    %v5732 = vmax.f32 %v5569, %v5728
    %v5733 = vmax.f32 %v5621, %v5729
    %v5734 = vmax.f32 %v5673, %v5730
    %v5735 = vmax.f32 %v5725, %v5731
    %v5736 = vld [vmem:[%s23] sm:$0xf]
    %v5737 = vld [vmem:[%s23 + $0x4] sm:$0xf]
    %v5738 = vld [vmem:[%s23 + $0x8] sm:$0xf]
    %v5739 = vld [vmem:[%s23 + $0xc] sm:$0xf]
    %v5740 = vld [vmem:[%s23 + $0x10] sm:$0xf]
    %v5741 = vld [vmem:[%s23 + $0x14] sm:$0xf]
    %v5742 = vld [vmem:[%s23 + $0x18] sm:$0xf]
    %v5743 = vld [vmem:[%s23 + $0x1c] sm:$0xf]
    %v5744 = vld [vmem:[%s23 + $0x20] sm:$0xf]
    %v5745 = vld [vmem:[%s23 + $0x24] sm:$0xf]
    %v5746 = vld [vmem:[%s23 + $0x28] sm:$0xf]
    %v5747 = vld [vmem:[%s23 + $0x2c] sm:$0xf]
    %v5748 = vld [vmem:[%s23 + $0x30] sm:$0xf]
    %v5749 = vld [vmem:[%s23 + $0x34] sm:$0xf]
    %v5750 = vld [vmem:[%s23 + $0x38] sm:$0xf]
    %v5751 = vld [vmem:[%s23 + $0x3c] sm:$0xf]
    %v5752 = vld [vmem:[%s23 + $0x40] sm:$0xf]
    %v5753 = vld [vmem:[%s23 + $0x44] sm:$0xf]
    %v5754 = vld [vmem:[%s23 + $0x48] sm:$0xf]
    %v5755 = vld [vmem:[%s23 + $0x4c] sm:$0xf]
    %v5756 = vld [vmem:[%s23 + $0x50] sm:$0xf]
    %v5757 = vld [vmem:[%s23 + $0x54] sm:$0xf]
    %v5758 = vld [vmem:[%s23 + $0x58] sm:$0xf]
    %v5759 = vld [vmem:[%s23 + $0x5c] sm:$0xf]
    %v5760 = vld [vmem:[%s23 + $0x60] sm:$0xf]
    %v5761 = vld [vmem:[%s23 + $0x64] sm:$0xf]
    %v5762 = vld [vmem:[%s23 + $0x68] sm:$0xf]
    %v5763 = vld [vmem:[%s23 + $0x6c] sm:$0xf]
    %v5764 = vld [vmem:[%s23 + $0x70] sm:$0xf]
    %v5765 = vld [vmem:[%s23 + $0x74] sm:$0xf]
    %v5766 = vld [vmem:[%s23 + $0x78] sm:$0xf]
    %v5767 = vld [vmem:[%s23 + $0x7c] sm:$0xf]
    %v5768 = vld [vmem:[%s23 + $0x80] sm:$0xf]
    %v5769 = vld [vmem:[%s23 + $0x84] sm:$0xf]
    %v5770 = vld [vmem:[%s23 + $0x88] sm:$0xf]
    %v5771 = vld [vmem:[%s23 + $0x8c] sm:$0xf]
    %v5772 = vld [vmem:[%s23 + $0x90] sm:$0xf]
    %v5773 = vld [vmem:[%s23 + $0x94] sm:$0xf]
    %v5774 = vld [vmem:[%s23 + $0x98] sm:$0xf]
    %v5775 = vld [vmem:[%s23 + $0x9c] sm:$0xf]
    %v5776 = vld [vmem:[%s23 + $0xa0] sm:$0xf]
    %v5777 = vld [vmem:[%s23 + $0xa4] sm:$0xf]
    %v5778 = vld [vmem:[%s23 + $0xa8] sm:$0xf]
    %v5779 = vld [vmem:[%s23 + $0xac] sm:$0xf]
    %v5780 = vld [vmem:[%s23 + $0xb0] sm:$0xf]
    %v5781 = vld [vmem:[%s23 + $0xb4] sm:$0xf]
    %v5782 = vld [vmem:[%s23 + $0xb8] sm:$0xf]
    %v5783 = vld [vmem:[%s23 + $0xbc] sm:$0xf]
    %v5784 = vld [vmem:[%s23 + $0xc0] sm:$0xf]
    %v5785 = vld [vmem:[%s23 + $0xc4] sm:$0xf]
    %v5786 = vld [vmem:[%s23 + $0xc8] sm:$0xf]
    %v5787 = vld [vmem:[%s23 + $0xcc] sm:$0xf]
    %v5788 = vld [vmem:[%s23 + $0xd0] sm:$0xf]
    %v5789 = vld [vmem:[%s23 + $0xd4] sm:$0xf]
    %v5790 = vld [vmem:[%s23 + $0xd8] sm:$0xf]
    %v5791 = vld [vmem:[%s23 + $0xdc] sm:$0xf]
    %v5792 = vld [vmem:[%s23 + $0xe0] sm:$0xf]
    %v5793 = vld [vmem:[%s23 + $0xe4] sm:$0xf]
    %v5794 = vld [vmem:[%s23 + $0xe8] sm:$0xf]
    %v5795 = vld [vmem:[%s23 + $0xec] sm:$0xf]
    %v5796 = vld [vmem:[%s23 + $0xf0] sm:$0xf]
    %v5797 = vld [vmem:[%s23 + $0xf4] sm:$0xf]
    %v5798 = vld [vmem:[%s23 + $0xf8] sm:$0xf]
    %v5799 = vld [vmem:[%s23 + $0xfc] sm:$0xf]
    %v5800 = vpack.c.bf16 %v5732, %v5732
    %v5801 = vpack.c.bf16 %v5733, %v5733
    %v5802 = vpack.c.bf16 %v5734, %v5734
    %v5803 = vpack.c.bf16 %v5735, %v5735
    %v5804 = vld [vmem:[#allocation2] sm:$0x1]
    %v5806 = vperm.slane %v5804, 0
    %v5872 = vunpack.c.l.b16 %v5736
    %v5873 = vunpack.c.l.b16 %v5737
    %v5874 = vunpack.c.l.b16 %v5738
    %v5875 = vunpack.c.l.b16 %v5739
    %v5876 = vunpack.c.l.b16 %v5740
    %v5877 = vunpack.c.l.b16 %v5741
    %v5878 = vunpack.c.l.b16 %v5742
    %v5879 = vunpack.c.l.b16 %v5743
    %v5880 = vunpack.c.l.b16 %v5744
    %v5881 = vunpack.c.l.b16 %v5745
    %v5882 = vunpack.c.l.b16 %v5746
    %v5883 = vunpack.c.l.b16 %v5747
    %v5884 = vunpack.c.l.b16 %v5748
    %v5885 = vunpack.c.l.b16 %v5749
    %v5886 = vunpack.c.l.b16 %v5750
    %v5887 = vunpack.c.l.b16 %v5751
    %v5888 = vunpack.c.l.b16 %v5752
    %v5889 = vunpack.c.l.b16 %v5753
    %v5890 = vunpack.c.l.b16 %v5754
    %v5891 = vunpack.c.l.b16 %v5755
    %v5892 = vunpack.c.l.b16 %v5756
    %v5893 = vunpack.c.l.b16 %v5757
    %v5894 = vunpack.c.l.b16 %v5758
    %v5895 = vunpack.c.l.b16 %v5759
    %v5896 = vunpack.c.l.b16 %v5760
    %v5897 = vunpack.c.l.b16 %v5761
    %v5898 = vunpack.c.l.b16 %v5762
    %v5899 = vunpack.c.l.b16 %v5763
    %v5900 = vunpack.c.l.b16 %v5764
    %v5901 = vunpack.c.l.b16 %v5765
    %v5902 = vunpack.c.l.b16 %v5766
    %v5903 = vunpack.c.l.b16 %v5767
    %v5904 = vunpack.c.l.b16 %v5768
    %v5905 = vunpack.c.l.b16 %v5769
    %v5906 = vunpack.c.l.b16 %v5770
    %v5907 = vunpack.c.l.b16 %v5771
    %v5908 = vunpack.c.l.b16 %v5772
    %v5909 = vunpack.c.l.b16 %v5773
    %v5910 = vunpack.c.l.b16 %v5774
    %v5911 = vunpack.c.l.b16 %v5775
    %v5912 = vunpack.c.l.b16 %v5776
    %v5913 = vunpack.c.l.b16 %v5777
    %v5914 = vunpack.c.l.b16 %v5778
    %v5915 = vunpack.c.l.b16 %v5779
    %v5916 = vunpack.c.l.b16 %v5780
    %v5917 = vunpack.c.l.b16 %v5781
    %v5918 = vunpack.c.l.b16 %v5782
    %v5919 = vunpack.c.l.b16 %v5783
    %v5920 = vunpack.c.l.b16 %v5784
    %v5921 = vunpack.c.l.b16 %v5785
    %v5922 = vunpack.c.l.b16 %v5786
    %v5923 = vunpack.c.l.b16 %v5787
    %v5924 = vunpack.c.l.b16 %v5788
    %v5925 = vunpack.c.l.b16 %v5789
    %v5926 = vunpack.c.l.b16 %v5790
    %v5927 = vunpack.c.l.b16 %v5791
    %v5928 = vunpack.c.l.b16 %v5792
    %v5929 = vunpack.c.l.b16 %v5793
    %v5930 = vunpack.c.l.b16 %v5794
    %v5931 = vunpack.c.l.b16 %v5795
    %v5932 = vunpack.c.l.b16 %v5796
    %v5933 = vunpack.c.l.b16 %v5797
    %v5934 = vunpack.c.l.b16 %v5798
    %v5935 = vunpack.c.l.b16 %v5799
    %v5936 = vpack.c.b16 %v5873, %v5872
    %v5937 = vpack.c.b16 %v5875, %v5874
    %v5938 = vpack.c.b16 %v5877, %v5876
    %v5939 = vpack.c.b16 %v5879, %v5878
    %v5940 = vpack.c.b16 %v5881, %v5880
    %v5941 = vpack.c.b16 %v5883, %v5882
    %v5942 = vpack.c.b16 %v5885, %v5884
    %v5943 = vpack.c.b16 %v5887, %v5886
    %v5944 = vpack.c.b16 %v5889, %v5888
    %v5945 = vpack.c.b16 %v5891, %v5890
    %v5946 = vpack.c.b16 %v5893, %v5892
    %v5947 = vpack.c.b16 %v5895, %v5894
    %v5948 = vpack.c.b16 %v5897, %v5896
    %v5949 = vpack.c.b16 %v5899, %v5898
    %v5950 = vpack.c.b16 %v5901, %v5900
    %v5951 = vpack.c.b16 %v5903, %v5902
    %v5952 = vpack.c.b16 %v5905, %v5904
    %v5953 = vpack.c.b16 %v5907, %v5906
    %v5954 = vpack.c.b16 %v5909, %v5908
    %v5955 = vpack.c.b16 %v5911, %v5910
    %v5956 = vpack.c.b16 %v5913, %v5912
    %v5957 = vpack.c.b16 %v5915, %v5914
    %v5958 = vpack.c.b16 %v5917, %v5916
    %v5959 = vpack.c.b16 %v5919, %v5918
    %v5960 = vpack.c.b16 %v5921, %v5920
    %v5961 = vpack.c.b16 %v5923, %v5922
    %v5962 = vpack.c.b16 %v5925, %v5924
    %v5963 = vpack.c.b16 %v5927, %v5926
    %v5964 = vpack.c.b16 %v5929, %v5928
    %v5965 = vpack.c.b16 %v5931, %v5930
    %v5966 = vpack.c.b16 %v5933, %v5932
    %v5967 = vpack.c.b16 %v5935, %v5934
    %6000 = vmatpush.bf16.msra.mxu0 %v5943
    %6001 = vmatpush.bf16.msra.mxu0 %v5942
    %6002 = vmatpush.bf16.msra.mxu0 %v5941
    %6003 = vmatpush.bf16.msra.mxu0 %v5940
    %6004 = vmatpush.bf16.msra.mxu0 %v5939
    %6005 = vmatpush.bf16.msra.mxu0 %v5938
    %6006 = vmatpush.bf16.msra.mxu0 %v5937
    %6007 = vmatpush.bf16.msra.mxu0 %v5936
    %6008 = vmatmul.bf16.gmra.mxu0 %v5800
    %v6009 = vpop.f32.mrf.mxu0
    %v6010 = vadd.f32 %v5806, %v6009
    %v6011 = vpop.f32.mrf.mxu0
    %6012 = vdwg.mxu0
    %6013 = vmatpush.bf16.msra.mxu0 %v5951
    %6014 = vmatpush.bf16.msra.mxu0 %v5950
    %6015 = vmatpush.bf16.msra.mxu0 %v5949
    %6016 = vmatpush.bf16.msra.mxu0 %v5948
    %6017 = vmatpush.bf16.msra.mxu0 %v5947
    %6018 = vmatpush.bf16.msra.mxu0 %v5946
    %6019 = vmatpush.bf16.msra.mxu0 %v5945
    %6020 = vmatpush.bf16.msra.mxu0 %v5944
    %6021 = vmatmul.bf16.gmra.mxu0 %v5801
    %v6022 = vpop.f32.mrf.mxu0
    %v6023 = vadd.f32 %v6010, %v6022
    %v6024 = vpop.f32.mrf.mxu0
    %6025 = vdwg.mxu0
    %6026 = vmatpush.bf16.msra.mxu0 %v5959
    %6027 = vmatpush.bf16.msra.mxu0 %v5958
    %6028 = vmatpush.bf16.msra.mxu0 %v5957
    %6029 = vmatpush.bf16.msra.mxu0 %v5956
    %6030 = vmatpush.bf16.msra.mxu0 %v5955
    %6031 = vmatpush.bf16.msra.mxu0 %v5954
    %6032 = vmatpush.bf16.msra.mxu0 %v5953
    %6033 = vmatpush.bf16.msra.mxu0 %v5952
    %6034 = vmatmul.bf16.gmra.mxu0 %v5802
    %v6035 = vpop.f32.mrf.mxu0
    %v6036 = vadd.f32 %v6023, %v6035
    %v6037 = vpop.f32.mrf.mxu0
    %6038 = vdwg.mxu0
    %6039 = vmatpush.bf16.msra.mxu0 %v5967
    %6040 = vmatpush.bf16.msra.mxu0 %v5966
    %6041 = vmatpush.bf16.msra.mxu0 %v5965
    %6042 = vmatpush.bf16.msra.mxu0 %v5964
    %6043 = vmatpush.bf16.msra.mxu0 %v5963
    %6044 = vmatpush.bf16.msra.mxu0 %v5962
    %6045 = vmatpush.bf16.msra.mxu0 %v5961
    %6046 = vmatpush.bf16.msra.mxu0 %v5960
    %6047 = vmatmul.bf16.gmra.mxu0 %v5803
    %v6048 = vpop.f32.mrf.mxu0
    %v6049 = vadd.f32 %v6036, %v6048
    %v6050 = vpop.f32.mrf.mxu0
    %6051 = vdwg.mxu0
    %6053 = vrot.lane.b32.xlu0 %v6049, 6
    %v6054 = vpop.permute.xlu0 %6053
    %v6056 = vsel %vm287, %v3605, %v6054
    %vm6057 = vcmask 56320
    %v6058 = vsel %vm6057, %v6056, 0.0
    %6059 = vst [vmem:[%s25] sm:$0xff] %v6058
    // Predicated region
    $region114: #{cgan_nbhd_forward.1} parent=1 // pred_check
      _
    $region115: #{cgan_nbhd_forward.1} parent=1 // pred_check_branch
      %6061 = sbr.rel (0) target = $region117
    $region116: #{cgan_nbhd_forward.1} parent=1 // pred_region
      _
    $region117: #{cgan_nbhd_forward.1} parent=1 // pred_fallthru
      _
    // Predicated region
    $region118: #{cgan_nbhd_forward.1} parent=1 // pred_check
      _
    $region119: #{cgan_nbhd_forward.1} parent=1 // pred_check_branch
      %6063 = sbr.rel (0) target = $region121
    $region120: #{cgan_nbhd_forward.1} parent=1 // pred_region
      _
    $region121: #{cgan_nbhd_forward.1} parent=1 // pred_fallthru
      _
    %6064 = vsyncpa [#allocation4], 1
    %6065 = vsyncpa [#allocation6], 1

</llo_original>
